<compile_context>
chip_gen: v5e
topology: v5e:2x2
jax: 0.10.0
libtpu: 0.0.40
codegen_flags: <defaults>
</compile_context>

<pallas_src>
import functools
import math

import jax
import jax.numpy as jnp
import numpy as np
from jax.experimental import pallas as pl
from jax.experimental.pallas import tpu as pltpu


# ----------------------------- shared math helpers -----------------------------

def _silu(x):
    # exact SiLU (host-side adaLN precompute + plain-JAX reference)
    return x * (1.0 / (1.0 + jnp.exp(-x)))


def _silu_fast(x):
    # in-kernel SiLU: EUP exp + EUP approx reciprocal (no VPU divide)
    return x * pl.reciprocal(1.0 + jnp.exp(-x), approx=True)


def _gelu_tanh(x):
    # torch.nn.GELU(approximate='tanh')
    c = 0.7978845608028654  # sqrt(2/pi)
    return 0.5 * x * (1.0 + jnp.tanh(c * (x + 0.044715 * x * x * x)))


def _layer_norm(x, eps=1e-6):
    # nn.LayerNorm(hidden, elementwise_affine=False, eps=1e-6) over last dim
    mu = jnp.mean(x, axis=-1, keepdims=True)
    xc = x - mu
    var = jnp.mean(xc * xc, axis=-1, keepdims=True)
    return xc * jax.lax.rsqrt(var + eps)


# ------------------------------- Pallas kernels --------------------------------

def dit_blocks_kernel(x_ref, ada_ref,
                      qkv_w_ref, qkv_b_ref,
                      proj_w_ref, proj_b_ref,
                      fc1_w_ref, fc1_b_ref,
                      fc2_w_ref, fc2_b_ref,
                      o_ref, *, num_heads):
    """One grid step = one DiT block (depth axis) applied to one batch tile.

    The activation is carried in o_ref (its block index is depth-invariant, so
    the block stays VMEM resident for the whole depth sweep and is written back
    to HBM only once, when the batch tile changes).
    """
    d = pl.program_id(1)

    @pl.when(d == 0)
    def _seed_carry():
        o_ref[...] = x_ref[...].astype(o_ref.dtype)

    Bb, X, E = o_ref.shape
    hd = E // num_heads
    bf16 = jnp.bfloat16

    x = o_ref[...]                         # (Bb, X, E) f32, VMEM-resident carry
    ada = ada_ref[0]                       # (Bb, 6, E) f32, precomputed adaLN

    shift_msa = ada[:, 0:1, :]
    scale_msa = ada[:, 1:2, :]
    gate_msa = ada[:, 2:3, :]
    shift_mlp = ada[:, 3:4, :]
    scale_mlp = ada[:, 4:5, :]
    gate_mlp = ada[:, 5:6, :]

    # ----- attention branch: x + gate * proj(attn(modulate(norm1(x), shift, scale)))
    h = _layer_norm(x) * (1.0 + scale_msa) + shift_msa                 # (Bb, X, E)
    qkv = (jnp.dot(h.reshape(Bb * X, E).astype(bf16), qkv_w_ref[0],
                   preferred_element_type=jnp.float32)
           + qkv_b_ref[0]).reshape(Bb, X, 3 * E)                       # (Bb, X, 3E)
    # NOTE: the 1/sqrt(hd) attention scale is pre-folded into the q columns of
    # qkv_w / qkv_b on the host, so no extra VPU multiply or q temp here.

    heads = []
    for hi in range(num_heads):
        lo = hi * hd
        qh = qkv[:, :, lo:lo + hd].astype(bf16)                        # (Bb, X, hd)
        kh = qkv[:, :, E + lo:E + lo + hd].astype(bf16)                # (Bb, X, hd)
        vh = qkv[:, :, 2 * E + lo:2 * E + lo + hd].astype(bf16)        # (Bb, X, hd)
        s = jnp.einsum('bqd,bkd->bqk', qh, kh,
                       preferred_element_type=jnp.float32)             # (Bb, X, X)
        s = s - jnp.max(s, axis=-1, keepdims=True)
        p = jnp.exp(s)
        p = p * pl.reciprocal(jnp.sum(p, axis=-1, keepdims=True), approx=True)
        heads.append(jnp.einsum('bqk,bkd->bqd', p.astype(bf16), vh,
                                preferred_element_type=jnp.float32))   # (Bb, X, hd)
    # register-level lane concat -> lane-dense (Bb, X, E); single K=E projection.
    attn = jnp.concatenate(heads, axis=-1)
    proj = (jnp.dot(attn.reshape(Bb * X, E).astype(bf16), proj_w_ref[0],
                    preferred_element_type=jnp.float32)
            + proj_b_ref[0]).reshape(Bb, X, E)
    x = x + gate_msa * proj

    # ----- MLP branch: x + gate * fc2(gelu(fc1(modulate(norm2(x), shift, scale))))
    h = _layer_norm(x) * (1.0 + scale_mlp) + shift_mlp
    m = (jnp.dot(h.reshape(Bb * X, E).astype(bf16), fc1_w_ref[0],
                 preferred_element_type=jnp.float32)
         + fc1_b_ref[0])                                               # (Bb*X, Hm)
    m = _gelu_tanh(m)
    m = (jnp.dot(m.astype(bf16), fc2_w_ref[0],
                 preferred_element_type=jnp.float32)
         + fc2_b_ref[0]).reshape(Bb, X, E)
    x = x + gate_mlp * m

    o_ref[...] = x.astype(o_ref.dtype)


def temb_mlp_kernel(tf_ref, w1_ref, b1_ref, w2_ref, b2_ref, o_ref):
    # Linear(freq, H) -> SiLU -> Linear(H, H); bf16 MXU inputs, f32 accumulate.
    h = (jnp.dot(tf_ref[...].astype(jnp.bfloat16), w1_ref[...],
                 preferred_element_type=jnp.float32) + b1_ref[...])
    h = _silu_fast(h)
    o_ref[...] = (jnp.dot(h.astype(jnp.bfloat16), w2_ref[...],
                          preferred_element_type=jnp.float32) + b2_ref[...])


# ------------------------------- host wrappers ----------------------------------

def _pick_bblk(N, X, target_rows=512):
    """Pick samples-per-tile: largest divisor of N with bblk*X <= target_rows,
    preferring an even number of batch tiles (v7x two-TensorCore split of the
    parallel axis) as long as it does not shrink the tile more than 2x.
    NOTE: prime N with N*X > target_rows degrades to bblk=1 (perf cliff only)."""
    cap = max(1, target_rows // max(X, 1))
    divs = [b for b in range(1, N + 1) if N % b == 0 and b <= cap]
    best = max(divs)
    even = [b for b in divs if (N // b) % 2 == 0]
    if even and max(even) * 2 >= best:
        best = max(even)
    return best


def _prep_stacked(blocks, num_heads):
    """Stack per-block params on a leading depth axis and fold the 1/sqrt(hd)
    attention scale into the q columns of qkv_w / qkv_b (free at prep time)."""
    keys = ['ada_w', 'ada_b', 'qkv_w', 'qkv_b', 'proj_w', 'proj_b',
            'fc1_w', 'fc1_b', 'fc2_w', 'fc2_b']
    st = {k: jnp.stack([blk[k] for blk in blocks], axis=0) for k in keys}
    E = st['qkv_w'].shape[1]
    scale = (E // num_heads) ** -0.5
    q_w = (st['qkv_w'][:, :, :E] * scale).astype(st['qkv_w'].dtype)
    st['qkv_w'] = jnp.concatenate([q_w, st['qkv_w'][:, :, E:]], axis=-1)
    q_b = (st['qkv_b'][:, :, :E] * scale).astype(st['qkv_b'].dtype)
    st['qkv_b'] = jnp.concatenate([q_b, st['qkv_b'][:, :, E:]], axis=-1)
    return st


def _precompute_ada(c, stacked):
    """adaLN_modulation for all blocks at once: ada[d] = silu(c) @ ada_w[d] + ada_b[d].
    One large well-shaped matmul (exact SiLU) instead of an MXU-starved one per
    grid step; removes the (E x 6E) ada_w slab from the per-step weight stream."""
    D, E, _ = stacked['ada_w'].shape
    N = c.shape[0]
    c_act = _silu(c).astype(jnp.bfloat16)                        # (N, E)
    ada = jnp.einsum('ne,dek->dnk', c_act, stacked['ada_w'],
                     preferred_element_type=jnp.float32)         # (D, N, 6E)
    ada = ada + stacked['ada_b']
    # (D, N, 6, E): last-two block dims are (6, E) -> full-extent / lane-aligned.
    return ada.reshape(D, N, 6, E)


def _vmem_bytes_estimate(bblk, X, E, Hm):
    """Rough double-buffered VMEM requirement of dit_blocks_call (bytes)."""
    w_bf16 = (E * 3 * E + E * E + E * Hm + Hm * E) * 2           # streamed weight mats
    b_f32 = (3 * E + E + Hm + E) * 4                             # streamed biases
    ada = bblk * 8 * E * 4                                       # (bblk, 6->8, E) block
    xio = 2 * bblk * X * E * 4                                   # x in + out carry
    temps = bblk * X * (3 * E + max(Hm, 3 * E)) * 4              # qkv / mlp activations
    return 2 * (w_bf16 + b_f32 + ada + xio) + temps


def dit_blocks_call(x, ada, stacked, num_heads, bblk):
    """Run all DiT blocks fused: grid = (batch_tiles, depth)."""
    N, X, E = x.shape
    D = ada.shape[0]
    Hm = stacked['fc1_w'].shape[-1]

    def _wspec(arr):
        nd = arr.ndim
        return pl.BlockSpec((1,) + arr.shape[1:],
                            lambda n, d, _nd=nd: (d,) + (0,) * (_nd - 1))

    kernel = functools.partial(dit_blocks_kernel, num_heads=num_heads)
    grid_spec = pltpu.PrefetchScalarGridSpec(
        num_scalar_prefetch=0,
        grid=(N // bblk, D),
        in_specs=[
            pl.BlockSpec((bblk, X, E), lambda n, d: (n, 0, 0)),        # x (read at d==0)
            pl.BlockSpec((1, bblk, 6, E), lambda n, d: (d, n, 0, 0)),  # precomputed adaLN
            _wspec(stacked['qkv_w']), _wspec(stacked['qkv_b']),
            _wspec(stacked['proj_w']), _wspec(stacked['proj_b']),
            _wspec(stacked['fc1_w']), _wspec(stacked['fc1_b']),
            _wspec(stacked['fc2_w']), _wspec(stacked['fc2_b']),
        ],
        out_specs=pl.BlockSpec((bblk, X, E), lambda n, d: (n, 0, 0)),
    )

    est = _vmem_bytes_estimate(bblk, X, E, Hm)
    # Raise the scoped VMEM limit only when the double-buffered stream needs it
    # (v5e/v6e default is 32 MiB of 128 MiB physical).  Capped; see v7x TODO above.
    vmem_limit = None if est <= (32 << 20) else min(int(est * 1.25), 100 << 20)

    return pl.pallas_call(
        kernel,
        out_shape=jax.ShapeDtypeStruct((N, X, E), jnp.float32),
        grid_spec=grid_spec,
        input_output_aliases={0: 0},      # x is only read at d==0; reuse its HBM buffer
        compiler_params=pltpu.CompilerParams(
            dimension_semantics=("parallel", "arbitrary"),
            vmem_limit_bytes=vmem_limit),
    )(x, ada,
      stacked['qkv_w'], stacked['qkv_b'], stacked['proj_w'], stacked['proj_b'],
      stacked['fc1_w'], stacked['fc1_b'], stacked['fc2_w'], stacked['fc2_b'])


def temb_mlp_call(t_freq, p):
    N, _ = t_freq.shape
    H = p['w2'].shape[1]
    vspec = pl.BlockSpec(memory_space=pltpu.MemorySpace.VMEM)
    return pl.pallas_call(
        temb_mlp_kernel,
        out_shape=jax.ShapeDtypeStruct((N, H), jnp.float32),
        in_specs=[vspec, vspec, vspec, vspec, vspec],
        out_specs=vspec,
    )(t_freq, p['w1'], p['b1'], p['w2'], p['b2'])


def timestep_embedding(t, dim, max_period=10000):
    """t: (...,) fractional timesteps -> (..., dim) sinusoidal embedding."""
    half = dim // 2
    freqs = jnp.exp(-math.log(max_period) *
                    jnp.arange(half, dtype=jnp.float32) / half)
    args = t[..., None].astype(jnp.float32) * freqs
    emb = jnp.concatenate([jnp.cos(args), jnp.sin(args)], axis=-1)
    # dim is even in this config; odd-dim zero-padding branch omitted.
    return emb


@functools.partial(jax.jit, static_argnums=(3,))
def dit_forward(x_SBXE, t_SB, params, num_heads):
    """Pallas implementation of DiT.forward. Returns (x_SBXE, t_SBE)."""
    S, B, X, E = x_SBXE.shape
    freq_dim = params['t_embedder']['w1'].shape[0]

    # TimestepEmbedder (sinusoidal featurization is cheap glue, stays in JAX)
    t_freq = timestep_embedding(t_SB, freq_dim)                  # (S, B, freq)
    t_SxBE = temb_mlp_call(t_freq.reshape(-1, freq_dim),
                           params['t_embedder'])                 # (S*B, E)
    t_SBE = t_SxBE.reshape(S, B, E)

    # t_SBE.dim() == 3 -> flatten leading dims, run all blocks fused
    x = x_SBXE.reshape(-1, X, E).astype(jnp.float32)             # (S*B, X, E)
    N = x.shape[0]
    stacked = _prep_stacked(params['blocks'], num_heads)
    ada = _precompute_ada(t_SxBE, stacked)                       # (D, N, 6, E)
    bblk = _pick_bblk(N, X)
    x = dit_blocks_call(x, ada, stacked, num_heads, bblk)
    return x.reshape(S, B, X, E), t_SBE


# --------------------------- deterministic init -----------------------------------

def _xavier_uniform(key, fan_in, fan_out):
    limit = math.sqrt(6.0 / (fan_in + fan_out))
    return jax.random.uniform(key, (fan_in, fan_out), jnp.float32, -limit, limit)


def init_params(key, hidden, depth, mlp_ratio=4.0, freq_dim=256):
    # NOTE: the reference __init__ zero-inits adaLN_modulation (making each block
    # an identity map); here we use small random values so the full compute path
    # is actually exercised.  Weight matrices are stored in bf16 (native MXU
    # input dtype); biases stay f32.  The plain-JAX reference uses the exact same
    # (bf16-quantized) weights upcast to f32, so the only kernel/reference
    # difference is bf16 activation rounding + approx reciprocals.
    mlp_hidden = int(hidden * mlp_ratio)
    keys = jax.random.split(key, 2 + depth)
    bf = lambda a: a.astype(jnp.bfloat16)
    params = {
        't_embedder': {
            'w1': bf(0.02 * jax.random.normal(keys[0], (freq_dim, hidden), jnp.float32)),
            'b1': jnp.zeros((1, hidden), jnp.float32),
            'w2': bf(0.02 * jax.random.normal(keys[1], (hidden, hidden), jnp.float32)),
            'b2': jnp.zeros((1, hidden), jnp.float32),
        },
        'blocks': [],
    }
    for d in range(depth):
        ks = jax.random.split(keys[2 + d], 6)
        blk = {
            'ada_w': bf(0.02 * jax.random.normal(ks[0], (hidden, 6 * hidden), jnp.float32)),
            'ada_b': 0.01 * jax.random.normal(ks[1], (1, 6 * hidden), jnp.float32),
            'qkv_w': bf(_xavier_uniform(ks[2], hidden, 3 * hidden)),
            'qkv_b': jnp.zeros((1, 3 * hidden), jnp.float32),
            'proj_w': bf(_xavier_uniform(ks[3], hidden, hidden)),
            'proj_b': jnp.zeros((1, hidden), jnp.float32),
            'fc1_w': bf(_xavier_uniform(ks[4], hidden, mlp_hidden)),
            'fc1_b': jnp.zeros((1, mlp_hidden), jnp.float32),
            'fc2_w': bf(_xavier_uniform(ks[5], mlp_hidden, hidden)),
            'fc2_b': jnp.zeros((1, hidden), jnp.float32),
        }
        params['blocks'].append(blk)
    return params


# ------------------------------ plain-JAX reference --------------------------------

def _f32(w):
    return w.astype(jnp.float32)


def _ref_block(x, c, p, num_heads):
    E = x.shape[-1]
    ada = _silu(c) @ _f32(p['ada_w']) + p['ada_b'][0]
    sm, scm, gm, sp, scp, gp = jnp.split(ada, 6, axis=-1)
    h = _layer_norm(x) * (1.0 + scm[:, None, :]) + sm[:, None, :]
    qkv = h @ _f32(p['qkv_w']) + p['qkv_b'][0]
    q, k, v = jnp.split(qkv, 3, axis=-1)
    hd = E // num_heads
    N, X, _ = x.shape
    q = q.reshape(N, X, num_heads, hd).transpose(0, 2, 1, 3)
    k = k.reshape(N, X, num_heads, hd).transpose(0, 2, 1, 3)
    v = v.reshape(N, X, num_heads, hd).transpose(0, 2, 1, 3)
    s = jnp.einsum('nhqd,nhkd->nhqk', q, k) * (hd ** -0.5)
    p_attn = jax.nn.softmax(s, axis=-1)
    a = jnp.einsum('nhqk,nhkd->nhqd', p_attn, v).transpose(0, 2, 1, 3).reshape(N, X, E)
    a = a @ _f32(p['proj_w']) + p['proj_b'][0]
    x = x + gm[:, None, :] * a
    h = _layer_norm(x) * (1.0 + scp[:, None, :]) + sp[:, None, :]
    h = _gelu_tanh(h @ _f32(p['fc1_w']) + p['fc1_b'][0]) @ _f32(p['fc2_w']) + p['fc2_b'][0]
    return x + gp[:, None, :] * h


def dit_forward_ref(x_SBXE, t_SB, params, num_heads):
    S, B, X, E = x_SBXE.shape
    freq_dim = params['t_embedder']['w1'].shape[0]
    tf = timestep_embedding(t_SB, freq_dim).reshape(-1, freq_dim)
    te = params['t_embedder']
    h = _silu(tf @ _f32(te['w1']) + te['b1'][0])
    c = h @ _f32(te['w2']) + te['b2'][0]
    x = x_SBXE.reshape(-1, X, E).astype(jnp.float32)
    for blk in params['blocks']:
        x = _ref_block(x, c, blk, num_heads)
    return x.reshape(S, B, X, E), c.reshape(S, B, E)


# ------------------------------------ main ------------------------------------------

if __name__ == "__main__":
    S, B, X, E = 2, 2, 16, 128          # seq-of-batches, batch, tokens, hidden
    num_heads, depth = 4, 2

    key = jax.random.PRNGKey(0)
    kx, kt, kp = jax.random.split(key, 3)
    x_SBXE = jax.random.normal(kx, (S, B, X, E), jnp.float32)
    t_SB = jax.random.uniform(kt, (S, B), jnp.float32, 0.0, 1000.0)
    params = init_params(kp, E, depth)

    x_out, t_emb = dit_forward(x_SBXE, t_SB, params, num_heads)
    x_out = jax.block_until_ready(x_out)
    t_emb = jax.block_until_ready(t_emb)

    # correctness check against a plain-JAX f32 reference (same bf16 weights);
    # tolerance covers bf16 activation rounding + approx EUP reciprocals + the
    # bf16 re-rounding of the scale-folded q weights.
    x_ref, t_ref = dit_forward_ref(x_SBXE, t_SB, params, num_heads)
    assert x_out.shape == (S, B, X, E) and t_emb.shape == (S, B, E)
    np.testing.assert_allclose(np.asarray(t_emb), np.asarray(t_ref), rtol=2e-2, atol=2e-2)
    np.testing.assert_allclose(np.asarray(x_out), np.asarray(x_ref), rtol=2e-2, atol=2e-2)

    print("KERNEL_OK")
</pallas_src>

<mosaic_0001>
module attributes {stable_mosaic.version = 11 : i64} {
  func.func @temb_mlp_kernel(%arg0: memref<4x256xf32, #tpu.memory_space<vmem>>, %arg1: memref<256x128xbf16, #tpu.memory_space<vmem>>, %arg2: memref<1x128xf32, #tpu.memory_space<vmem>>, %arg3: memref<128x128xbf16, #tpu.memory_space<vmem>>, %arg4: memref<1x128xf32, #tpu.memory_space<vmem>>, %arg5: memref<4x128xf32, #tpu.memory_space<vmem>>) attributes {dimension_semantics = [], scalar_prefetch = 0 : i64, scratch_operands = 0 : i64, tpu.core_type = #tpu.core_type<tc>} {
    %c0 = arith.constant 0 : index
    %c0_0 = arith.constant 0 : index
    %0 = vector.load %arg0[%c0, %c0_0] : memref<4x256xf32, #tpu.memory_space<vmem>>, vector<4x256xf32>
    %1 = arith.truncf %0 : vector<4x256xf32> to vector<4x256xbf16>
    %c0_1 = arith.constant 0 : index
    %c0_2 = arith.constant 0 : index
    %2 = vector.load %arg1[%c0_1, %c0_2] : memref<256x128xbf16, #tpu.memory_space<vmem>>, vector<256x128xbf16>
    %cst = arith.constant dense<0.000000e+00> : vector<4x128xf32>
    %3 = tpu.matmul %1, %2, %cst {dimension_numbers = #tpu.dot_dimension_numbers<[1], [0], [0], [1], [0, 0, 1, 1], [], []>} : vector<4x256xbf16>, vector<256x128xbf16>, vector<4x128xf32> -> vector<4x128xf32>
    %c0_3 = arith.constant 0 : index
    %c0_4 = arith.constant 0 : index
    %4 = vector.load %arg2[%c0_3, %c0_4] : memref<1x128xf32, #tpu.memory_space<vmem>>, vector<1x128xf32>
    %5 = vector.broadcast %4 : vector<1x128xf32> to vector<4x128xf32>
    %6 = arith.addf %3, %5 : vector<4x128xf32>
    %cst_5 = arith.constant 0.000000e+00 : f32
    %7 = vector.broadcast %cst_5 : f32 to vector<4x128xf32>
    %8 = arith.subf %7, %6 : vector<4x128xf32>
    %9 = math.exp %8 : vector<4x128xf32>
    %cst_6 = arith.constant 1.000000e+00 : f32
    %10 = vector.broadcast %cst_6 : f32 to vector<4x128xf32>
    %11 = arith.addf %10, %9 : vector<4x128xf32>
    %12 = tpu.reciprocal %11 {approx = true} : vector<4x128xf32> -> vector<4x128xf32>
    %13 = arith.mulf %6, %12 : vector<4x128xf32>
    %14 = arith.truncf %13 : vector<4x128xf32> to vector<4x128xbf16>
    %c0_7 = arith.constant 0 : index
    %c0_8 = arith.constant 0 : index
    %15 = vector.load %arg3[%c0_7, %c0_8] : memref<128x128xbf16, #tpu.memory_space<vmem>>, vector<128x128xbf16>
    %cst_9 = arith.constant dense<0.000000e+00> : vector<4x128xf32>
    %16 = tpu.matmul %14, %15, %cst_9 {dimension_numbers = #tpu.dot_dimension_numbers<[1], [0], [0], [1], [0, 0, 1, 1], [], []>} : vector<4x128xbf16>, vector<128x128xbf16>, vector<4x128xf32> -> vector<4x128xf32>
    %c0_10 = arith.constant 0 : index
    %c0_11 = arith.constant 0 : index
    %17 = vector.load %arg4[%c0_10, %c0_11] : memref<1x128xf32, #tpu.memory_space<vmem>>, vector<1x128xf32>
    %18 = vector.broadcast %17 : vector<1x128xf32> to vector<4x128xf32>
    %19 = arith.addf %16, %18 : vector<4x128xf32>
    %c0_12 = arith.constant 0 : index
    %c0_13 = arith.constant 0 : index
    %20 = vector.load %arg5[%c0_12, %c0_13] : memref<4x128xf32, #tpu.memory_space<vmem>>, vector<4x128xf32>
    tpu.vector_store %arg5[%c0_12, %c0_13], %19 {strides = array<i32>} : memref<4x128xf32, #tpu.memory_space<vmem>>, vector<4x128xf32>,
    return
  }
}

module attributes {stable_mosaic.version = 11 : i64} {
  func.func @dit_blocks_kernel(%arg0: i32, %arg1: i32, %arg2: memref<2x16x128xf32, #tpu.memory_space<vmem>>, %arg3: memref<1x2x6x128xf32, #tpu.memory_space<vmem>>, %arg4: memref<1x128x384xbf16, #tpu.memory_space<vmem>>, %arg5: memref<1x1x384xf32, #tpu.memory_space<vmem>>, %arg6: memref<1x128x128xbf16, #tpu.memory_space<vmem>>, %arg7: memref<1x1x128xf32, #tpu.memory_space<vmem>>, %arg8: memref<1x128x512xbf16, #tpu.memory_space<vmem>>, %arg9: memref<1x1x512xf32, #tpu.memory_space<vmem>>, %arg10: memref<1x512x128xbf16, #tpu.memory_space<vmem>>, %arg11: memref<1x1x128xf32, #tpu.memory_space<vmem>>, %arg12: memref<2x16x128xf32, #tpu.memory_space<vmem>>) attributes {dimension_semantics = [#tpu.dimension_semantics<parallel>, #tpu.dimension_semantics<arbitrary>], iteration_bounds = array<i64: 2, 2>, scalar_prefetch = 0 : i64, scratch_operands = 0 : i64, tpu.core_type = #tpu.core_type<tc>, window_params = [{transform_indices = @transform_0, window_bounds = array<i64: 2, 16, 128>}, {transform_indices = @transform_1, window_bounds = array<i64: 1, 2, 6, 128>}, {transform_indices = @transform_2, window_bounds = array<i64: 1, 128, 384>}, {transform_indices = @transform_3, window_bounds = array<i64: 1, 1, 384>}, {transform_indices = @transform_4, window_bounds = array<i64: 1, 128, 128>}, {transform_indices = @transform_5, window_bounds = array<i64: 1, 1, 128>}, {transform_indices = @transform_6, window_bounds = array<i64: 1, 128, 512>}, {transform_indices = @transform_7, window_bounds = array<i64: 1, 1, 512>}, {transform_indices = @transform_8, window_bounds = array<i64: 1, 512, 128>}, {transform_indices = @transform_9, window_bounds = array<i64: 1, 1, 128>}, {transform_indices = @transform_10, window_bounds = array<i64: 2, 16, 128>}]} {
    %c0_i32 = arith.constant 0 : i32
    %0 = arith.cmpi eq, %arg1, %c0_i32 : i32
    %1 = arith.extui %0 : i1 to i32
    %c0_i32_0 = arith.constant 0 : i32
    %2 = arith.cmpi ne, %1, %c0_i32_0 : i32
    scf.if %2 {
      %c0_69 = arith.constant 0 : index
      %c0_70 = arith.constant 0 : index
      %c0_71 = arith.constant 0 : index
      %191 = vector.load %arg2[%c0_69, %c0_70, %c0_71] : memref<2x16x128xf32, #tpu.memory_space<vmem>>, vector<2x16x128xf32>
      %c0_72 = arith.constant 0 : index
      %c0_73 = arith.constant 0 : index
      %c0_74 = arith.constant 0 : index
      %192 = vector.load %arg12[%c0_72, %c0_73, %c0_74] : memref<2x16x128xf32, #tpu.memory_space<vmem>>, vector<2x16x128xf32>
      tpu.vector_store %arg12[%c0_72, %c0_73, %c0_74], %191 {strides = array<i32>} : memref<2x16x128xf32, #tpu.memory_space<vmem>>, vector<2x16x128xf32>,
    } else {
    }
    %c0 = arith.constant 0 : index
    %c0_1 = arith.constant 0 : index
    %c0_2 = arith.constant 0 : index
    %3 = vector.load %arg12[%c0, %c0_1, %c0_2] : memref<2x16x128xf32, #tpu.memory_space<vmem>>, vector<2x16x128xf32>
    %c0_3 = arith.constant 0 : index
    %c0_4 = arith.constant 0 : index
    %c0_5 = arith.constant 0 : index
    %c0_6 = arith.constant 0 : index
    %4 = vector.load %arg3[%c0_3, %c0_4, %c0_5, %c0_6] : memref<1x2x6x128xf32, #tpu.memory_space<vmem>>, vector<1x2x6x128xf32>
    %5 = vector.shape_cast %4 : vector<1x2x6x128xf32> to vector<2x6x128xf32>
    %6 = vector.extract_strided_slice %5 {offsets = [0, 0, 0], sizes = [2, 1, 128], strides = [1, 1, 1]} : vector<2x6x128xf32> to vector<2x1x128xf32>
    %7 = vector.extract_strided_slice %5 {offsets = [0, 1, 0], sizes = [2, 1, 128], strides = [1, 1, 1]} : vector<2x6x128xf32> to vector<2x1x128xf32>
    %8 = vector.extract_strided_slice %5 {offsets = [0, 2, 0], sizes = [2, 1, 128], strides = [1, 1, 1]} : vector<2x6x128xf32> to vector<2x1x128xf32>
    %9 = vector.extract_strided_slice %5 {offsets = [0, 3, 0], sizes = [2, 1, 128], strides = [1, 1, 1]} : vector<2x6x128xf32> to vector<2x1x128xf32>
    %10 = vector.extract_strided_slice %5 {offsets = [0, 4, 0], sizes = [2, 1, 128], strides = [1, 1, 1]} : vector<2x6x128xf32> to vector<2x1x128xf32>
    %11 = vector.extract_strided_slice %5 {offsets = [0, 5, 0], sizes = [2, 1, 128], strides = [1, 1, 1]} : vector<2x6x128xf32> to vector<2x1x128xf32>
    %cst = arith.constant dense<0.000000e+00> : vector<2x16xf32>
    %12 = vector.multi_reduction <add>, %3, %cst [2] : vector<2x16x128xf32> to vector<2x16xf32>
    %13 = vector.shape_cast %12 : vector<2x16xf32> to vector<2x16x1xf32>
    %cst_7 = arith.constant 1.280000e+02 : f32
    %14 = vector.broadcast %cst_7 : f32 to vector<2x16x1xf32>
    %15 = arith.divf %13, %14 : vector<2x16x1xf32>
    %16 = vector.broadcast %15 : vector<2x16x1xf32> to vector<2x16x128xf32>
    %17 = arith.subf %3, %16 : vector<2x16x128xf32>
    %18 = arith.mulf %17, %17 : vector<2x16x128xf32>
    %cst_8 = arith.constant dense<0.000000e+00> : vector<2x16xf32>
    %19 = vector.multi_reduction <add>, %18, %cst_8 [2] : vector<2x16x128xf32> to vector<2x16xf32>
    %20 = vector.shape_cast %19 : vector<2x16xf32> to vector<2x16x1xf32>
    %cst_9 = arith.constant 1.280000e+02 : f32
    %21 = vector.broadcast %cst_9 : f32 to vector<2x16x1xf32>
    %22 = arith.divf %20, %21 : vector<2x16x1xf32>
    %cst_10 = arith.constant 9.99999997E-7 : f32
    %23 = vector.broadcast %cst_10 : f32 to vector<2x16x1xf32>
    %24 = arith.addf %22, %23 : vector<2x16x1xf32>
    %25 = math.rsqrt %24 : vector<2x16x1xf32>
    %26 = vector.broadcast %25 : vector<2x16x1xf32> to vector<2x16x128xf32>
    %27 = arith.mulf %17, %26 : vector<2x16x128xf32>
    %cst_11 = arith.constant 1.000000e+00 : f32
    %28 = vector.broadcast %cst_11 : f32 to vector<2x1x128xf32>
    %29 = arith.addf %28, %7 : vector<2x1x128xf32>
    %30 = vector.broadcast %29 : vector<2x1x128xf32> to vector<2x16x128xf32>
    %31 = arith.mulf %27, %30 : vector<2x16x128xf32>
    %32 = vector.broadcast %6 : vector<2x1x128xf32> to vector<2x16x128xf32>
    %33 = arith.addf %31, %32 : vector<2x16x128xf32>
    %34 = vector.shape_cast %33 : vector<2x16x128xf32> to vector<32x128xf32>
    %35 = arith.truncf %34 : vector<32x128xf32> to vector<32x128xbf16>
    %c0_12 = arith.constant 0 : index
    %c0_13 = arith.constant 0 : index
    %c0_14 = arith.constant 0 : index
    %36 = vector.load %arg4[%c0_12, %c0_13, %c0_14] : memref<1x128x384xbf16, #tpu.memory_space<vmem>>, vector<1x128x384xbf16>
    %37 = vector.shape_cast %36 : vector<1x128x384xbf16> to vector<128x384xbf16>
    %cst_15 = arith.constant dense<0.000000e+00> : vector<32x384xf32>
    %38 = tpu.matmul %35, %37, %cst_15 {dimension_numbers = #tpu.dot_dimension_numbers<[1], [0], [0], [1], [0, 0, 1, 1], [], []>} : vector<32x128xbf16>, vector<128x384xbf16>, vector<32x384xf32> -> vector<32x384xf32>
    %c0_16 = arith.constant 0 : index
    %c0_17 = arith.constant 0 : index
    %c0_18 = arith.constant 0 : index
    %39 = vector.load %arg5[%c0_16, %c0_17, %c0_18] : memref<1x1x384xf32, #tpu.memory_space<vmem>>, vector<1x1x384xf32>
    %40 = vector.shape_cast %39 : vector<1x1x384xf32> to vector<1x384xf32>
    %41 = vector.broadcast %40 : vector<1x384xf32> to vector<32x384xf32>
    %42 = arith.addf %38, %41 : vector<32x384xf32>
    %43 = vector.shape_cast %42 : vector<32x384xf32> to vector<2x16x384xf32>
    %44 = vector.extract_strided_slice %43 {offsets = [0, 0, 0], sizes = [2, 16, 32], strides = [1, 1, 1]} : vector<2x16x384xf32> to vector<2x16x32xf32>
    %45 = arith.truncf %44 : vector<2x16x32xf32> to vector<2x16x32xbf16>
    %46 = vector.extract_strided_slice %43 {offsets = [0, 0, 128], sizes = [2, 16, 32], strides = [1, 1, 1]} : vector<2x16x384xf32> to vector<2x16x32xf32>
    %47 = arith.truncf %46 : vector<2x16x32xf32> to vector<2x16x32xbf16>
    %48 = vector.extract_strided_slice %43 {offsets = [0, 0, 256], sizes = [2, 16, 32], strides = [1, 1, 1]} : vector<2x16x384xf32> to vector<2x16x32xf32>
    %49 = arith.truncf %48 : vector<2x16x32xf32> to vector<2x16x32xbf16>
    "tpu.trace_start"() <{level = 10 : i32, message = "bqd,bkd->bqk"}> : () -> ()
    %cst_19 = arith.constant dense<0.000000e+00> : vector<2x16x16xf32>
    %50 = tpu.matmul %45, %47, %cst_19 {dimension_numbers = #tpu.dot_dimension_numbers<[2], [2], [1], [1], [0, 0, 0, 1, 1, 1], [0], [0]>} : vector<2x16x32xbf16>, vector<2x16x32xbf16>, vector<2x16x16xf32> -> vector<2x16x16xf32>
    "tpu.trace_stop"() : () -> ()
    %cst_20 = arith.constant dense<0xFF800000> : vector<2x16xf32>
    %51 = vector.multi_reduction <maximumf>, %50, %cst_20 [2] : vector<2x16x16xf32> to vector<2x16xf32>
    %52 = vector.shape_cast %51 : vector<2x16xf32> to vector<2x16x1xf32>
    %53 = vector.broadcast %52 : vector<2x16x1xf32> to vector<2x16x16xf32>
    %54 = arith.subf %50, %53 : vector<2x16x16xf32>
    %55 = math.exp %54 : vector<2x16x16xf32>
    %cst_21 = arith.constant dense<0.000000e+00> : vector<2x16xf32>
    %56 = vector.multi_reduction <add>, %55, %cst_21 [2] : vector<2x16x16xf32> to vector<2x16xf32>
    %57 = vector.shape_cast %56 : vector<2x16xf32> to vector<2x16x1xf32>
    %58 = tpu.reciprocal %57 {approx = true} : vector<2x16x1xf32> -> vector<2x16x1xf32>
    %59 = vector.broadcast %58 : vector<2x16x1xf32> to vector<2x16x16xf32>
    %60 = arith.mulf %55, %59 : vector<2x16x16xf32>
    %61 = arith.truncf %60 : vector<2x16x16xf32> to vector<2x16x16xbf16>
    "tpu.trace_start"() <{level = 10 : i32, message = "bqk,bkd->bqd"}> : () -> ()
    %cst_22 = arith.constant dense<0.000000e+00> : vector<2x16x32xf32>
    %62 = tpu.matmul %61, %49, %cst_22 {dimension_numbers = #tpu.dot_dimension_numbers<[2], [1], [1], [2], [0, 0, 0, 1, 1, 2], [0], [0]>} : vector<2x16x16xbf16>, vector<2x16x32xbf16>, vector<2x16x32xf32> -> vector<2x16x32xf32>
    "tpu.trace_stop"() : () -> ()
    %63 = vector.extract_strided_slice %43 {offsets = [0, 0, 32], sizes = [2, 16, 32], strides = [1, 1, 1]} : vector<2x16x384xf32> to vector<2x16x32xf32>
    %64 = arith.truncf %63 : vector<2x16x32xf32> to vector<2x16x32xbf16>
    %65 = vector.extract_strided_slice %43 {offsets = [0, 0, 160], sizes = [2, 16, 32], strides = [1, 1, 1]} : vector<2x16x384xf32> to vector<2x16x32xf32>
    %66 = arith.truncf %65 : vector<2x16x32xf32> to vector<2x16x32xbf16>
    %67 = vector.extract_strided_slice %43 {offsets = [0, 0, 288], sizes = [2, 16, 32], strides = [1, 1, 1]} : vector<2x16x384xf32> to vector<2x16x32xf32>
    %68 = arith.truncf %67 : vector<2x16x32xf32> to vector<2x16x32xbf16>
    "tpu.trace_start"() <{level = 10 : i32, message = "bqd,bkd->bqk"}> : () -> ()
    %cst_23 = arith.constant dense<0.000000e+00> : vector<2x16x16xf32>
    %69 = tpu.matmul %64, %66, %cst_23 {dimension_numbers = #tpu.dot_dimension_numbers<[2], [2], [1], [1], [0, 0, 0, 1, 1, 1], [0], [0]>} : vector<2x16x32xbf16>, vector<2x16x32xbf16>, vector<2x16x16xf32> -> vector<2x16x16xf32>
    "tpu.trace_stop"() : () -> ()
    %cst_24 = arith.constant dense<0xFF800000> : vector<2x16xf32>
    %70 = vector.multi_reduction <maximumf>, %69, %cst_24 [2] : vector<2x16x16xf32> to vector<2x16xf32>
    %71 = vector.shape_cast %70 : vector<2x16xf32> to vector<2x16x1xf32>
    %72 = vector.broadcast %71 : vector<2x16x1xf32> to vector<2x16x16xf32>
    %73 = arith.subf %69, %72 : vector<2x16x16xf32>
    %74 = math.exp %73 : vector<2x16x16xf32>
    %cst_25 = arith.constant dense<0.000000e+00> : vector<2x16xf32>
    %75 = vector.multi_reduction <add>, %74, %cst_25 [2] : vector<2x16x16xf32> to vector<2x16xf32>
    %76 = vector.shape_cast %75 : vector<2x16xf32> to vector<2x16x1xf32>
    %77 = tpu.reciprocal %76 {approx = true} : vector<2x16x1xf32> -> vector<2x16x1xf32>
    %78 = vector.broadcast %77 : vector<2x16x1xf32> to vector<2x16x16xf32>
    %79 = arith.mulf %74, %78 : vector<2x16x16xf32>
    %80 = arith.truncf %79 : vector<2x16x16xf32> to vector<2x16x16xbf16>
    "tpu.trace_start"() <{level = 10 : i32, message = "bqk,bkd->bqd"}> : () -> ()
    %cst_26 = arith.constant dense<0.000000e+00> : vector<2x16x32xf32>
    %81 = tpu.matmul %80, %68, %cst_26 {dimension_numbers = #tpu.dot_dimension_numbers<[2], [1], [1], [2], [0, 0, 0, 1, 1, 2], [0], [0]>} : vector<2x16x16xbf16>, vector<2x16x32xbf16>, vector<2x16x32xf32> -> vector<2x16x32xf32>
    "tpu.trace_stop"() : () -> ()
    %82 = vector.extract_strided_slice %43 {offsets = [0, 0, 64], sizes = [2, 16, 32], strides = [1, 1, 1]} : vector<2x16x384xf32> to vector<2x16x32xf32>
    %83 = arith.truncf %82 : vector<2x16x32xf32> to vector<2x16x32xbf16>
    %84 = vector.extract_strided_slice %43 {offsets = [0, 0, 192], sizes = [2, 16, 32], strides = [1, 1, 1]} : vector<2x16x384xf32> to vector<2x16x32xf32>
    %85 = arith.truncf %84 : vector<2x16x32xf32> to vector<2x16x32xbf16>
    %86 = vector.extract_strided_slice %43 {offsets = [0, 0, 320], sizes = [2, 16, 32], strides = [1, 1, 1]} : vector<2x16x384xf32> to vector<2x16x32xf32>
    %87 = arith.truncf %86 : vector<2x16x32xf32> to vector<2x16x32xbf16>
    "tpu.trace_start"() <{level = 10 : i32, message = "bqd,bkd->bqk"}> : () -> ()
    %cst_27 = arith.constant dense<0.000000e+00> : vector<2x16x16xf32>
    %88 = tpu.matmul %83, %85, %cst_27 {dimension_numbers = #tpu.dot_dimension_numbers<[2], [2], [1], [1], [0, 0, 0, 1, 1, 1], [0], [0]>} : vector<2x16x32xbf16>, vector<2x16x32xbf16>, vector<2x16x16xf32> -> vector<2x16x16xf32>
    "tpu.trace_stop"() : () -> ()
    %cst_28 = arith.constant dense<0xFF800000> : vector<2x16xf32>
    %89 = vector.multi_reduction <maximumf>, %88, %cst_28 [2] : vector<2x16x16xf32> to vector<2x16xf32>
    %90 = vector.shape_cast %89 : vector<2x16xf32> to vector<2x16x1xf32>
    %91 = vector.broadcast %90 : vector<2x16x1xf32> to vector<2x16x16xf32>
    %92 = arith.subf %88, %91 : vector<2x16x16xf32>
    %93 = math.exp %92 : vector<2x16x16xf32>
    %cst_29 = arith.constant dense<0.000000e+00> : vector<2x16xf32>
    %94 = vector.multi_reduction <add>, %93, %cst_29 [2] : vector<2x16x16xf32> to vector<2x16xf32>
    %95 = vector.shape_cast %94 : vector<2x16xf32> to vector<2x16x1xf32>
    %96 = tpu.reciprocal %95 {approx = true} : vector<2x16x1xf32> -> vector<2x16x1xf32>
    %97 = vector.broadcast %96 : vector<2x16x1xf32> to vector<2x16x16xf32>
    %98 = arith.mulf %93, %97 : vector<2x16x16xf32>
    %99 = arith.truncf %98 : vector<2x16x16xf32> to vector<2x16x16xbf16>
    "tpu.trace_start"() <{level = 10 : i32, message = "bqk,bkd->bqd"}> : () -> ()
    %cst_30 = arith.constant dense<0.000000e+00> : vector<2x16x32xf32>
    %100 = tpu.matmul %99, %87, %cst_30 {dimension_numbers = #tpu.dot_dimension_numbers<[2], [1], [1], [2], [0, 0, 0, 1, 1, 2], [0], [0]>} : vector<2x16x16xbf16>, vector<2x16x32xbf16>, vector<2x16x32xf32> -> vector<2x16x32xf32>
    "tpu.trace_stop"() : () -> ()
    %101 = vector.extract_strided_slice %43 {offsets = [0, 0, 96], sizes = [2, 16, 32], strides = [1, 1, 1]} : vector<2x16x384xf32> to vector<2x16x32xf32>
    %102 = arith.truncf %101 : vector<2x16x32xf32> to vector<2x16x32xbf16>
    %103 = vector.extract_strided_slice %43 {offsets = [0, 0, 224], sizes = [2, 16, 32], strides = [1, 1, 1]} : vector<2x16x384xf32> to vector<2x16x32xf32>
    %104 = arith.truncf %103 : vector<2x16x32xf32> to vector<2x16x32xbf16>
    %105 = vector.extract_strided_slice %43 {offsets = [0, 0, 352], sizes = [2, 16, 32], strides = [1, 1, 1]} : vector<2x16x384xf32> to vector<2x16x32xf32>
    %106 = arith.truncf %105 : vector<2x16x32xf32> to vector<2x16x32xbf16>
    "tpu.trace_start"() <{level = 10 : i32, message = "bqd,bkd->bqk"}> : () -> ()
    %cst_31 = arith.constant dense<0.000000e+00> : vector<2x16x16xf32>
    %107 = tpu.matmul %102, %104, %cst_31 {dimension_numbers = #tpu.dot_dimension_numbers<[2], [2], [1], [1], [0, 0, 0, 1, 1, 1], [0], [0]>} : vector<2x16x32xbf16>, vector<2x16x32xbf16>, vector<2x16x16xf32> -> vector<2x16x16xf32>
    "tpu.trace_stop"() : () -> ()
    %cst_32 = arith.constant dense<0xFF800000> : vector<2x16xf32>
    %108 = vector.multi_reduction <maximumf>, %107, %cst_32 [2] : vector<2x16x16xf32> to vector<2x16xf32>
    %109 = vector.shape_cast %108 : vector<2x16xf32> to vector<2x16x1xf32>
    %110 = vector.broadcast %109 : vector<2x16x1xf32> to vector<2x16x16xf32>
    %111 = arith.subf %107, %110 : vector<2x16x16xf32>
    %112 = math.exp %111 : vector<2x16x16xf32>
    %cst_33 = arith.constant dense<0.000000e+00> : vector<2x16xf32>
    %113 = vector.multi_reduction <add>, %112, %cst_33 [2] : vector<2x16x16xf32> to vector<2x16xf32>
    %114 = vector.shape_cast %113 : vector<2x16xf32> to vector<2x16x1xf32>
    %115 = tpu.reciprocal %114 {approx = true} : vector<2x16x1xf32> -> vector<2x16x1xf32>
    %116 = vector.broadcast %115 : vector<2x16x1xf32> to vector<2x16x16xf32>
    %117 = arith.mulf %112, %116 : vector<2x16x16xf32>
    %118 = arith.truncf %117 : vector<2x16x16xf32> to vector<2x16x16xbf16>
    "tpu.trace_start"() <{level = 10 : i32, message = "bqk,bkd->bqd"}> : () -> ()
    %cst_34 = arith.constant dense<0.000000e+00> : vector<2x16x32xf32>
    %119 = tpu.matmul %118, %106, %cst_34 {dimension_numbers = #tpu.dot_dimension_numbers<[2], [1], [1], [2], [0, 0, 0, 1, 1, 2], [0], [0]>} : vector<2x16x16xbf16>, vector<2x16x32xbf16>, vector<2x16x32xf32> -> vector<2x16x32xf32>
    "tpu.trace_stop"() : () -> ()
    %120 = tpu.concatenate %62, %81, %100, %119 in 2 : vector<2x16x32xf32>, vector<2x16x32xf32>, vector<2x16x32xf32>, vector<2x16x32xf32> -> vector<2x16x128xf32>
    %121 = vector.shape_cast %120 : vector<2x16x128xf32> to vector<32x128xf32>
    %122 = arith.truncf %121 : vector<32x128xf32> to vector<32x128xbf16>
    %c0_35 = arith.constant 0 : index
    %c0_36 = arith.constant 0 : index
    %c0_37 = arith.constant 0 : index
    %123 = vector.load %arg6[%c0_35, %c0_36, %c0_37] : memref<1x128x128xbf16, #tpu.memory_space<vmem>>, vector<1x128x128xbf16>
    %124 = vector.shape_cast %123 : vector<1x128x128xbf16> to vector<128x128xbf16>
    %cst_38 = arith.constant dense<0.000000e+00> : vector<32x128xf32>
    %125 = tpu.matmul %122, %124, %cst_38 {dimension_numbers = #tpu.dot_dimension_numbers<[1], [0], [0], [1], [0, 0, 1, 1], [], []>} : vector<32x128xbf16>, vector<128x128xbf16>, vector<32x128xf32> -> vector<32x128xf32>
    %c0_39 = arith.constant 0 : index
    %c0_40 = arith.constant 0 : index
    %c0_41 = arith.constant 0 : index
    %126 = vector.load %arg7[%c0_39, %c0_40, %c0_41] : memref<1x1x128xf32, #tpu.memory_space<vmem>>, vector<1x1x128xf32>
    %127 = vector.shape_cast %126 : vector<1x1x128xf32> to vector<1x128xf32>
    %128 = vector.broadcast %127 : vector<1x128xf32> to vector<32x128xf32>
    %129 = arith.addf %125, %128 : vector<32x128xf32>
    %130 = vector.shape_cast %129 : vector<32x128xf32> to vector<2x16x128xf32>
    %131 = vector.broadcast %8 : vector<2x1x128xf32> to vector<2x16x128xf32>
    %132 = arith.mulf %131, %130 : vector<2x16x128xf32>
    %133 = arith.addf %3, %132 : vector<2x16x128xf32>
    %cst_42 = arith.constant dense<0.000000e+00> : vector<2x16xf32>
    %134 = vector.multi_reduction <add>, %133, %cst_42 [2] : vector<2x16x128xf32> to vector<2x16xf32>
    %135 = vector.shape_cast %134 : vector<2x16xf32> to vector<2x16x1xf32>
    %cst_43 = arith.constant 1.280000e+02 : f32
    %136 = vector.broadcast %cst_43 : f32 to vector<2x16x1xf32>
    %137 = arith.divf %135, %136 : vector<2x16x1xf32>
    %138 = vector.broadcast %137 : vector<2x16x1xf32> to vector<2x16x128xf32>
    %139 = arith.subf %133, %138 : vector<2x16x128xf32>
    %140 = arith.mulf %139, %139 : vector<2x16x128xf32>
    %cst_44 = arith.constant dense<0.000000e+00> : vector<2x16xf32>
    %141 = vector.multi_reduction <add>, %140, %cst_44 [2] : vector<2x16x128xf32> to vector<2x16xf32>
    %142 = vector.shape_cast %141 : vector<2x16xf32> to vector<2x16x1xf32>
    %cst_45 = arith.constant 1.280000e+02 : f32
    %143 = vector.broadcast %cst_45 : f32 to vector<2x16x1xf32>
    %144 = arith.divf %142, %143 : vector<2x16x1xf32>
    %cst_46 = arith.constant 9.99999997E-7 : f32
    %145 = vector.broadcast %cst_46 : f32 to vector<2x16x1xf32>
    %146 = arith.addf %144, %145 : vector<2x16x1xf32>
    %147 = math.rsqrt %146 : vector<2x16x1xf32>
    %148 = vector.broadcast %147 : vector<2x16x1xf32> to vector<2x16x128xf32>
    %149 = arith.mulf %139, %148 : vector<2x16x128xf32>
    %cst_47 = arith.constant 1.000000e+00 : f32
    %150 = vector.broadcast %cst_47 : f32 to vector<2x1x128xf32>
    %151 = arith.addf %150, %10 : vector<2x1x128xf32>
    %152 = vector.broadcast %151 : vector<2x1x128xf32> to vector<2x16x128xf32>
    %153 = arith.mulf %149, %152 : vector<2x16x128xf32>
    %154 = vector.broadcast %9 : vector<2x1x128xf32> to vector<2x16x128xf32>
    %155 = arith.addf %153, %154 : vector<2x16x128xf32>
    %156 = vector.shape_cast %155 : vector<2x16x128xf32> to vector<32x128xf32>
    %157 = arith.truncf %156 : vector<32x128xf32> to vector<32x128xbf16>
    %c0_48 = arith.constant 0 : index
    %c0_49 = arith.constant 0 : index
    %c0_50 = arith.constant 0 : index
    %158 = vector.load %arg8[%c0_48, %c0_49, %c0_50] : memref<1x128x512xbf16, #tpu.memory_space<vmem>>, vector<1x128x512xbf16>
    %159 = vector.shape_cast %158 : vector<1x128x512xbf16> to vector<128x512xbf16>
    %cst_51 = arith.constant dense<0.000000e+00> : vector<32x512xf32>
    %160 = tpu.matmul %157, %159, %cst_51 {dimension_numbers = #tpu.dot_dimension_numbers<[1], [0], [0], [1], [0, 0, 1, 1], [], []>} : vector<32x128xbf16>, vector<128x512xbf16>, vector<32x512xf32> -> vector<32x512xf32>
    %c0_52 = arith.constant 0 : index
    %c0_53 = arith.constant 0 : index
    %c0_54 = arith.constant 0 : index
    %161 = vector.load %arg9[%c0_52, %c0_53, %c0_54] : memref<1x1x512xf32, #tpu.memory_space<vmem>>, vector<1x1x512xf32>
    %162 = vector.shape_cast %161 : vector<1x1x512xf32> to vector<1x512xf32>
    %163 = vector.broadcast %162 : vector<1x512xf32> to vector<32x512xf32>
    %164 = arith.addf %160, %163 : vector<32x512xf32>
    %cst_55 = arith.constant 5.000000e-01 : f32
    %165 = vector.broadcast %cst_55 : f32 to vector<32x512xf32>
    %166 = arith.mulf %165, %164 : vector<32x512xf32>
    %cst_56 = arith.constant 4.471500e-02 : f32
    %167 = vector.broadcast %cst_56 : f32 to vector<32x512xf32>
    %168 = arith.mulf %167, %164 : vector<32x512xf32>
    %169 = arith.mulf %168, %164 : vector<32x512xf32>
    %170 = arith.mulf %169, %164 : vector<32x512xf32>
    %171 = arith.addf %164, %170 : vector<32x512xf32>
    %cst_57 = arith.constant 0.797884583 : f32
    %172 = vector.broadcast %cst_57 : f32 to vector<32x512xf32>
    %173 = arith.mulf %172, %171 : vector<32x512xf32>
    %174 = math.tanh %173 : vector<32x512xf32>
    %cst_58 = arith.constant 1.000000e+00 : f32
    %175 = vector.broadcast %cst_58 : f32 to vector<32x512xf32>
    %176 = arith.addf %175, %174 : vector<32x512xf32>
    %177 = arith.mulf %166, %176 : vector<32x512xf32>
    %178 = arith.truncf %177 : vector<32x512xf32> to vector<32x512xbf16>
    %c0_59 = arith.constant 0 : index
    %c0_60 = arith.constant 0 : index
    %c0_61 = arith.constant 0 : index
    %179 = vector.load %arg10[%c0_59, %c0_60, %c0_61] : memref<1x512x128xbf16, #tpu.memory_space<vmem>>, vector<1x512x128xbf16>
    %180 = vector.shape_cast %179 : vector<1x512x128xbf16> to vector<512x128xbf16>
    %cst_62 = arith.constant dense<0.000000e+00> : vector<32x128xf32>
    %181 = tpu.matmul %178, %180, %cst_62 {dimension_numbers = #tpu.dot_dimension_numbers<[1], [0], [0], [1], [0, 0, 1, 1], [], []>} : vector<32x512xbf16>, vector<512x128xbf16>, vector<32x128xf32> -> vector<32x128xf32>
    %c0_63 = arith.constant 0 : index
    %c0_64 = arith.constant 0 : index
    %c0_65 = arith.constant 0 : index
    %182 = vector.load %arg11[%c0_63, %c0_64, %c0_65] : memref<1x1x128xf32, #tpu.memory_space<vmem>>, vector<1x1x128xf32>
    %183 = vector.shape_cast %182 : vector<1x1x128xf32> to vector<1x128xf32>
    %184 = vector.broadcast %183 : vector<1x128xf32> to vector<32x128xf32>
    %185 = arith.addf %181, %184 : vector<32x128xf32>
    %186 = vector.shape_cast %185 : vector<32x128xf32> to vector<2x16x128xf32>
    %187 = vector.broadcast %11 : vector<2x1x128xf32> to vector<2x16x128xf32>
    %188 = arith.mulf %187, %186 : vector<2x16x128xf32>
    %189 = arith.addf %133, %188 : vector<2x16x128xf32>
    %c0_66 = arith.constant 0 : index
    %c0_67 = arith.constant 0 : index
    %c0_68 = arith.constant 0 : index
    %190 = vector.load %arg12[%c0_66, %c0_67, %c0_68] : memref<2x16x128xf32, #tpu.memory_space<vmem>>, vector<2x16x128xf32>
    tpu.vector_store %arg12[%c0_66, %c0_67, %c0_68], %189 {strides = array<i32>} : memref<2x16x128xf32, #tpu.memory_space<vmem>>, vector<2x16x128xf32>,
    return
  }
  func.func @transform_0(%arg0: i32, %arg1: i32) -> (i32, i32, i32) {
    %c0_i32 = arith.constant 0 : i32
    %c0_i32_0 = arith.constant 0 : i32
    %c0_i32_1 = arith.constant 0 : i32
    return %arg0, %c0_i32, %c0_i32_0 : i32, i32, i32
  }
  func.func @transform_1(%arg0: i32, %arg1: i32) -> (i32, i32, i32, i32) {
    %c0_i32 = arith.constant 0 : i32
    %c0_i32_0 = arith.constant 0 : i32
    %c0_i32_1 = arith.constant 0 : i32
    return %arg1, %arg0, %c0_i32, %c0_i32_0 : i32, i32, i32, i32
  }
  func.func @transform_2(%arg0: i32, %arg1: i32) -> (i32, i32, i32) {
    %c0_i32 = arith.constant 0 : i32
    %c0_i32_0 = arith.constant 0 : i32
    %c0_i32_1 = arith.constant 0 : i32
    return %arg1, %c0_i32, %c0_i32_0 : i32, i32, i32
  }
  func.func @transform_3(%arg0: i32, %arg1: i32) -> (i32, i32, i32) {
    %c0_i32 = arith.constant 0 : i32
    %c0_i32_0 = arith.constant 0 : i32
    %c0_i32_1 = arith.constant 0 : i32
    return %arg1, %c0_i32, %c0_i32_0 : i32, i32, i32
  }
  func.func @transform_4(%arg0: i32, %arg1: i32) -> (i32, i32, i32) {
    %c0_i32 = arith.constant 0 : i32
    %c0_i32_0 = arith.constant 0 : i32
    %c0_i32_1 = arith.constant 0 : i32
    return %arg1, %c0_i32, %c0_i32_0 : i32, i32, i32
  }
  func.func @transform_5(%arg0: i32, %arg1: i32) -> (i32, i32, i32) {
    %c0_i32 = arith.constant 0 : i32
    %c0_i32_0 = arith.constant 0 : i32
    %c0_i32_1 = arith.constant 0 : i32
    return %arg1, %c0_i32, %c0_i32_0 : i32, i32, i32
  }
  func.func @transform_6(%arg0: i32, %arg1: i32) -> (i32, i32, i32) {
    %c0_i32 = arith.constant 0 : i32
    %c0_i32_0 = arith.constant 0 : i32
    %c0_i32_1 = arith.constant 0 : i32
    return %arg1, %c0_i32, %c0_i32_0 : i32, i32, i32
  }
  func.func @transform_7(%arg0: i32, %arg1: i32) -> (i32, i32, i32) {
    %c0_i32 = arith.constant 0 : i32
    %c0_i32_0 = arith.constant 0 : i32
    %c0_i32_1 = arith.constant 0 : i32
    return %arg1, %c0_i32, %c0_i32_0 : i32, i32, i32
  }
  func.func @transform_8(%arg0: i32, %arg1: i32) -> (i32, i32, i32) {
    %c0_i32 = arith.constant 0 : i32
    %c0_i32_0 = arith.constant 0 : i32
    %c0_i32_1 = arith.constant 0 : i32
    return %arg1, %c0_i32, %c0_i32_0 : i32, i32, i32
  }
  func.func @transform_9(%arg0: i32, %arg1: i32) -> (i32, i32, i32) {
    %c0_i32 = arith.constant 0 : i32
    %c0_i32_0 = arith.constant 0 : i32
    %c0_i32_1 = arith.constant 0 : i32
    return %arg1, %c0_i32, %c0_i32_0 : i32, i32, i32
  }
  func.func @transform_10(%arg0: i32, %arg1: i32) -> (i32, i32, i32) {
    %c0_i32 = arith.constant 0 : i32
    %c0_i32_0 = arith.constant 0 : i32
    %c0_i32_1 = arith.constant 0 : i32
    return %arg0, %c0_i32, %c0_i32_0 : i32, i32, i32
  }
}

</mosaic_0001>

<llo_original>
// kernel: dit_forward.2
$region0: #{dit_forward.2}
  #allocation0 [shape = 'u32[]', space=smem, size = 0x4, offset = 0x4, fixed_abs, tag = 'smem constant byte address 0x4 - core index']
  #allocation1 [shape = 'u32[72,128]{1,0:T(1,128)}', space=vmem, size = 0x9000, scoped, tag = 'internal scratch']
  %s0 = inlined_call_operand.vmem [shape: f32[4,256], index: 0, kind: input, shape index: {}]
  %s1 = inlined_call_operand.vmem [shape: bf16[256,128], index: 1, kind: input, shape index: {}]
  %s2 = inlined_call_operand.vmem [shape: f32[1,128], index: 2, kind: input, shape index: {}]
  %s3 = inlined_call_operand.hbm [shape: bf16[128,128], index: 3, kind: input, shape index: {}]
  %s4 = inlined_call_operand.vmem [shape: f32[1,128], index: 4, kind: input, shape index: {}]
  %s5 = inlined_call_operand.vmem [shape: f32[4,128], index: 5, kind: output, shape index: {}]
  %s6 = sld [smem:[#allocation0]]
  $region34: #{dit_forward.2} parent=0
    _
  %s8 = ssub.s32 1, %s6
  %s9 = scalar_select 0, %s8, %s6
  $region1: #{dit_forward.2} parent=0
    #allocation2 [shape = 'u8[32768]{0}', space=vmem, size = 0x8000, scoped, tag = 'input window, operand 3, single buffered']
    #allocation3 [shape = 's32[1]{0}', space=sflag, size = 0x4, scoped, tag = 'scoped memory for dit_forward.2']
    %10 = vsyncpa [#allocation3], 0
    // Predicated region
    $region2: #{dit_forward.2} parent=1 // pred_check
      _
    $region3: #{dit_forward.2} parent=1 // pred_check_branch
      %12 = sbr.rel (0) target = $region5
    $region4: #{dit_forward.2} parent=1 // pred_region
      _
    $region5: #{dit_forward.2} parent=1 // pred_fallthru
      _
    // Predicated region
    $region6: #{dit_forward.2} parent=1 // pred_check
      _
    $region7: #{dit_forward.2} parent=1 // pred_check_branch
      %14 = sbr.rel (0) target = $region9
    $region8: #{dit_forward.2} parent=1 // pred_region
      _
    $region9: #{dit_forward.2} parent=1 // pred_fallthru
      _
    // Predicated region
    $region10: #{dit_forward.2} parent=1 // pred_check
      _
    $region11: #{dit_forward.2} parent=1 // pred_check_branch
      %16 = sbr.rel (0) target = $region13
    $region12: #{dit_forward.2} parent=1 // pred_region
      _
    $region13: #{dit_forward.2} parent=1 // pred_fallthru
      _
    // Predicated region
    $region14: #{dit_forward.2} parent=1 // pred_check
      _
    $region15: #{dit_forward.2} parent=1 // pred_check_branch
      %18 = sbr.rel (0) target = $region17
    $region16: #{dit_forward.2} parent=1 // pred_region
      %20 = vsyncadd [#allocation3], 0
      %s21 = sshll.u32 %s3, 4
      %s22 = int_to_ptr.hbm [resolvable:$true] %s21
      %s23 = sshll.u32 [#allocation2], 4
      %s24 = int_to_ptr.vmem [resolvable:$true] %s23
      %29 = dma.hbm_to_vmem [thread:$0]  %s22, 1024, %s24, [#allocation3], 64, 64, 4
    $region17: #{dit_forward.2} parent=1 // pred_fallthru
      _
    // Predicated region
    $region18: #{dit_forward.2} parent=1 // pred_check
      _
    $region19: #{dit_forward.2} parent=1 // pred_check_branch
      %31 = sbr.rel (0) target = $region21
    $region20: #{dit_forward.2} parent=1 // pred_region
      _
    $region21: #{dit_forward.2} parent=1 // pred_fallthru
      _
    // Predicated region
    $region22: #{dit_forward.2} parent=1 // pred_check
      _
    $region23: #{dit_forward.2} parent=1 // pred_check_branch
      %33 = sbr.rel (0) target = $region25
    $region24: #{dit_forward.2} parent=1 // pred_region
      %35 = dma.done [#allocation3], 1024
    $region25: #{dit_forward.2} parent=1 // pred_fallthru
      _
    %v36 = vld [vmem:[%s0] sm:$0xff]
    %38 = vst [vmem:[#allocation1] ss:$2 sm:$0xff] %v36
    %v39 = vld.sshfl [vmem:[#allocation1] sm:$0xff pattern:$0x75316420]
    %v40 = vld.sshfl [vmem:[#allocation1 + $0x8] sm:$0xff pattern:$0x75316420]
    %v43 = vpack.c.bf16 %v39, %v39
    %v44 = vpack.c.bf16 %v40, %v40
    %v45 = vld [vmem:[%s1] sm:$0xf]
    %v46 = vld [vmem:[%s1 + $0x4] sm:$0xf]
    %v47 = vld [vmem:[%s1 + $0x8] sm:$0xf]
    %v48 = vld [vmem:[%s1 + $0xc] sm:$0xf]
    %v49 = vld [vmem:[%s1 + $0x10] sm:$0xf]
    %v50 = vld [vmem:[%s1 + $0x14] sm:$0xf]
    %v51 = vld [vmem:[%s1 + $0x18] sm:$0xf]
    %v52 = vld [vmem:[%s1 + $0x1c] sm:$0xf]
    %v53 = vld [vmem:[%s1 + $0x20] sm:$0xf]
    %v54 = vld [vmem:[%s1 + $0x24] sm:$0xf]
    %v55 = vld [vmem:[%s1 + $0x28] sm:$0xf]
    %v56 = vld [vmem:[%s1 + $0x2c] sm:$0xf]
    %v57 = vld [vmem:[%s1 + $0x30] sm:$0xf]
    %v58 = vld [vmem:[%s1 + $0x34] sm:$0xf]
    %v59 = vld [vmem:[%s1 + $0x38] sm:$0xf]
    %v60 = vld [vmem:[%s1 + $0x3c] sm:$0xf]
    %v61 = vld [vmem:[%s1 + $0x40] sm:$0xf]
    %v62 = vld [vmem:[%s1 + $0x44] sm:$0xf]
    %v63 = vld [vmem:[%s1 + $0x48] sm:$0xf]
    %v64 = vld [vmem:[%s1 + $0x4c] sm:$0xf]
    %v65 = vld [vmem:[%s1 + $0x50] sm:$0xf]
    %v66 = vld [vmem:[%s1 + $0x54] sm:$0xf]
    %v67 = vld [vmem:[%s1 + $0x58] sm:$0xf]
    %v68 = vld [vmem:[%s1 + $0x5c] sm:$0xf]
    %v69 = vld [vmem:[%s1 + $0x60] sm:$0xf]
    %v70 = vld [vmem:[%s1 + $0x64] sm:$0xf]
    %v71 = vld [vmem:[%s1 + $0x68] sm:$0xf]
    %v72 = vld [vmem:[%s1 + $0x6c] sm:$0xf]
    %v73 = vld [vmem:[%s1 + $0x70] sm:$0xf]
    %v74 = vld [vmem:[%s1 + $0x74] sm:$0xf]
    %v75 = vld [vmem:[%s1 + $0x78] sm:$0xf]
    %v76 = vld [vmem:[%s1 + $0x7c] sm:$0xf]
    %v77 = vld [vmem:[%s2] sm:$0x1]
    %v79 = vperm.slane %v77, 0
    %v113 = vunpack.c.l.b16 %v45
    %v114 = vunpack.c.l.b16 %v46
    %v115 = vunpack.c.l.b16 %v47
    %v116 = vunpack.c.l.b16 %v48
    %v117 = vunpack.c.l.b16 %v49
    %v118 = vunpack.c.l.b16 %v50
    %v119 = vunpack.c.l.b16 %v51
    %v120 = vunpack.c.l.b16 %v52
    %v121 = vunpack.c.l.b16 %v53
    %v122 = vunpack.c.l.b16 %v54
    %v123 = vunpack.c.l.b16 %v55
    %v124 = vunpack.c.l.b16 %v56
    %v125 = vunpack.c.l.b16 %v57
    %v126 = vunpack.c.l.b16 %v58
    %v127 = vunpack.c.l.b16 %v59
    %v128 = vunpack.c.l.b16 %v60
    %v129 = vunpack.c.l.b16 %v61
    %v130 = vunpack.c.l.b16 %v62
    %v131 = vunpack.c.l.b16 %v63
    %v132 = vunpack.c.l.b16 %v64
    %v133 = vunpack.c.l.b16 %v65
    %v134 = vunpack.c.l.b16 %v66
    %v135 = vunpack.c.l.b16 %v67
    %v136 = vunpack.c.l.b16 %v68
    %v137 = vunpack.c.l.b16 %v69
    %v138 = vunpack.c.l.b16 %v70
    %v139 = vunpack.c.l.b16 %v71
    %v140 = vunpack.c.l.b16 %v72
    %v141 = vunpack.c.l.b16 %v73
    %v142 = vunpack.c.l.b16 %v74
    %v143 = vunpack.c.l.b16 %v75
    %v144 = vunpack.c.l.b16 %v76
    %v145 = vpack.c.b16 %v114, %v113
    %v146 = vpack.c.b16 %v116, %v115
    %v147 = vpack.c.b16 %v118, %v117
    %v148 = vpack.c.b16 %v120, %v119
    %v149 = vpack.c.b16 %v122, %v121
    %v150 = vpack.c.b16 %v124, %v123
    %v151 = vpack.c.b16 %v126, %v125
    %v152 = vpack.c.b16 %v128, %v127
    %v153 = vpack.c.b16 %v130, %v129
    %v154 = vpack.c.b16 %v132, %v131
    %v155 = vpack.c.b16 %v134, %v133
    %v156 = vpack.c.b16 %v136, %v135
    %v157 = vpack.c.b16 %v138, %v137
    %v158 = vpack.c.b16 %v140, %v139
    %v159 = vpack.c.b16 %v142, %v141
    %v160 = vpack.c.b16 %v144, %v143
    %177 = vmatpush.bf16.msra.mxu0 %v152
    %178 = vmatpush.bf16.msra.mxu0 %v151
    %179 = vmatpush.bf16.msra.mxu0 %v150
    %180 = vmatpush.bf16.msra.mxu0 %v149
    %181 = vmatpush.bf16.msra.mxu0 %v148
    %182 = vmatpush.bf16.msra.mxu0 %v147
    %183 = vmatpush.bf16.msra.mxu0 %v146
    %184 = vmatpush.bf16.msra.mxu0 %v145
    %185 = vmatmul.bf16.gmra.mxu0 %v43
    %v186 = vpop.f32.mrf.mxu0
    %v187 = vadd.f32 %v79, %v186
    %v188 = vpop.f32.mrf.mxu0
    %189 = vdwg.mxu0
    %190 = vmatpush.bf16.msra.mxu0 %v160
    %191 = vmatpush.bf16.msra.mxu0 %v159
    %192 = vmatpush.bf16.msra.mxu0 %v158
    %193 = vmatpush.bf16.msra.mxu0 %v157
    %194 = vmatpush.bf16.msra.mxu0 %v156
    %195 = vmatpush.bf16.msra.mxu0 %v155
    %196 = vmatpush.bf16.msra.mxu0 %v154
    %197 = vmatpush.bf16.msra.mxu0 %v153
    %198 = vmatmul.bf16.gmra.mxu0 %v44
    %v199 = vpop.f32.mrf.mxu0
    %v200 = vadd.f32 %v187, %v199
    %v201 = vpop.f32.mrf.mxu0
    %202 = vdwg.mxu0
    %v203 = vsub.f32 0.0, %v200
    %v204 = vmul.f32 %v203, 1.442695
    %v205 = vpow.pop %v204
    %v206 = vadd.f32 %v205, 1.0
    %v207 = vrcp.pop %v206
    %v208 = vmul.f32 %v200, %v207
    %v209 = vpack.c.bf16 %v208, %v208
    %v210 = vld [vmem:[#allocation2] sm:$0xf]
    %v211 = vld [vmem:[#allocation2 + $0x4] sm:$0xf]
    %v212 = vld [vmem:[#allocation2 + $0x8] sm:$0xf]
    %v213 = vld [vmem:[#allocation2 + $0xc] sm:$0xf]
    %v214 = vld [vmem:[#allocation2 + $0x10] sm:$0xf]
    %v215 = vld [vmem:[#allocation2 + $0x14] sm:$0xf]
    %v216 = vld [vmem:[#allocation2 + $0x18] sm:$0xf]
    %v217 = vld [vmem:[#allocation2 + $0x1c] sm:$0xf]
    %v218 = vld [vmem:[#allocation2 + $0x20] sm:$0xf]
    %v219 = vld [vmem:[#allocation2 + $0x24] sm:$0xf]
    %v220 = vld [vmem:[#allocation2 + $0x28] sm:$0xf]
    %v221 = vld [vmem:[#allocation2 + $0x2c] sm:$0xf]
    %v222 = vld [vmem:[#allocation2 + $0x30] sm:$0xf]
    %v223 = vld [vmem:[#allocation2 + $0x34] sm:$0xf]
    %v224 = vld [vmem:[#allocation2 + $0x38] sm:$0xf]
    %v225 = vld [vmem:[#allocation2 + $0x3c] sm:$0xf]
    %v226 = vld [vmem:[%s4] sm:$0x1]
    %v228 = vperm.slane %v226, 0
    %v246 = vunpack.c.l.b16 %v210
    %v247 = vunpack.c.l.b16 %v211
    %v248 = vunpack.c.l.b16 %v212
    %v249 = vunpack.c.l.b16 %v213
    %v250 = vunpack.c.l.b16 %v214
    %v251 = vunpack.c.l.b16 %v215
    %v252 = vunpack.c.l.b16 %v216
    %v253 = vunpack.c.l.b16 %v217
    %v254 = vunpack.c.l.b16 %v218
    %v255 = vunpack.c.l.b16 %v219
    %v256 = vunpack.c.l.b16 %v220
    %v257 = vunpack.c.l.b16 %v221
    %v258 = vunpack.c.l.b16 %v222
    %v259 = vunpack.c.l.b16 %v223
    %v260 = vunpack.c.l.b16 %v224
    %v261 = vunpack.c.l.b16 %v225
    %v262 = vpack.c.b16 %v247, %v246
    %v263 = vpack.c.b16 %v249, %v248
    %v264 = vpack.c.b16 %v251, %v250
    %v265 = vpack.c.b16 %v253, %v252
    %v266 = vpack.c.b16 %v255, %v254
    %v267 = vpack.c.b16 %v257, %v256
    %v268 = vpack.c.b16 %v259, %v258
    %v269 = vpack.c.b16 %v261, %v260
    %278 = vmatpush.bf16.msra.mxu0 %v269
    %279 = vmatpush.bf16.msra.mxu0 %v268
    %280 = vmatpush.bf16.msra.mxu0 %v267
    %281 = vmatpush.bf16.msra.mxu0 %v266
    %282 = vmatpush.bf16.msra.mxu0 %v265
    %283 = vmatpush.bf16.msra.mxu0 %v264
    %284 = vmatpush.bf16.msra.mxu0 %v263
    %285 = vmatpush.bf16.msra.mxu0 %v262
    %286 = vmatmul.bf16.gmra.mxu0 %v209
    %v287 = vpop.f32.mrf.mxu0
    %v288 = vadd.f32 %v228, %v287
    %v289 = vpop.f32.mrf.mxu0
    %290 = vdwg.mxu0
    %291 = vst [vmem:[%s5] sm:$0xf] %v288
    // Predicated region
    $region26: #{dit_forward.2} parent=1 // pred_check
      _
    $region27: #{dit_forward.2} parent=1 // pred_check_branch
      %293 = sbr.rel (0) target = $region29
    $region28: #{dit_forward.2} parent=1 // pred_region
      _
    $region29: #{dit_forward.2} parent=1 // pred_fallthru
      _
    // Predicated region
    $region30: #{dit_forward.2} parent=1 // pred_check
      _
    $region31: #{dit_forward.2} parent=1 // pred_check_branch
      %295 = sbr.rel (0) target = $region33
    $region32: #{dit_forward.2} parent=1 // pred_region
      _
    $region33: #{dit_forward.2} parent=1 // pred_fallthru
      _
    %296 = vsyncpa [#allocation3], 1

// kernel: dit_forward.3
$region0: #{dit_forward.3}
  #allocation0 [shape = 'u32[]', space=smem, size = 0x4, offset = 0x4, fixed_abs, tag = 'smem constant byte address 0x4 - core index']
  #allocation1 [shape = 'u32[72,128]{1,0:T(1,128)}', space=vmem, size = 0x9000, scoped, tag = 'internal scratch']
  %s0 = inlined_call_operand.vmem [shape: f32[4,16,128], index: 0, kind: input, shape index: {}, may-alias: {0,10}]
  %s1 = inlined_call_operand.vmem [shape: f32[2,4,6,128], index: 1, kind: input, shape index: {}]
  %s2 = inlined_call_operand.vmem [shape: bf16[2,128,384], index: 2, kind: input, shape index: {}]
  %s3 = inlined_call_operand.vmem [shape: f32[2,1,384], index: 3, kind: input, shape index: {}]
  %s4 = inlined_call_operand.vmem [shape: bf16[2,128,128], index: 4, kind: input, shape index: {}]
  %s5 = inlined_call_operand.vmem [shape: f32[2,1,128], index: 5, kind: input, shape index: {}]
  %s6 = inlined_call_operand.vmem [shape: bf16[2,128,512], index: 6, kind: input, shape index: {}]
  %s7 = inlined_call_operand.vmem [shape: f32[2,1,512], index: 7, kind: input, shape index: {}]
  %s8 = inlined_call_operand.vmem [shape: bf16[2,512,128], index: 8, kind: input, shape index: {}]
  %s9 = inlined_call_operand.vmem [shape: f32[2,1,128], index: 9, kind: input, shape index: {}]
  %s10 = inlined_call_operand.vmem [shape: f32[4,16,128], index: 10, kind: output, shape index: {}, may-alias: {0,10}]
  %s11 = sld [smem:[#allocation0]]
  $region77: #{dit_forward.3} parent=0
    _
  %s13 = ssub.s32 1, %s11
  %s14 = scalar_select 0, %s13, %s11
  loop: start=0, step=1, limit=6
  $region2: #{dit_forward.3} parent=0 // loop_pre_header
    _
  $region3: #{dit_forward.3} parent=0 // loop_header
    %s16 = sphi 0, %s20
    %p17 = scmp.ge.s32.totalorder %s16, 6
    %s23 = sphi 0, %s35
    %s24 = sphi 0, %s31
    %s25 = sphi 0, %s23
    %s26 = sphi 0, %s24
    %s27 = sphi 0, %s25
    %s28 = sphi 0, %s26
    %s38 = sphi 0, %s40
    %s41 = sphi 0, %s38
    %s42 = sphi 0, %s41
    %s58 = sphi 0, %s42
    %s66 = sphi 0, %s68
    %s69 = sphi 0, %s66
    %s70 = sphi 0, %s69
    %s86 = sphi 0, %s70
    %s92 = sphi 0, %s94
    %s95 = sphi 0, %s92
    %s96 = sphi 0, %s95
    %s112 = sphi 0, %s96
    %s118 = sphi 0, %s120
    %s121 = sphi 0, %s118
    %s122 = sphi 0, %s121
    %s138 = sphi 0, %s122
    %s144 = sphi 0, %s146
    %s147 = sphi 0, %s144
    %s148 = sphi 0, %s147
    %s164 = sphi 0, %s148
    %s170 = sphi 0, %s172
    %s173 = sphi 0, %s170
    %s174 = sphi 0, %s173
    %s190 = sphi 0, %s174
    %s196 = sphi 0, %s198
    %s199 = sphi 0, %s196
    %s200 = sphi 0, %s199
    %s216 = sphi 0, %s200
    %s222 = sphi 0, %s224
    %s225 = sphi 0, %s222
    %s226 = sphi 0, %s225
    %s242 = sphi 0, %s226
    %s248 = sphi 0, %s250
    %s251 = sphi 0, %s248
    %s252 = sphi 0, %s251
    %s268 = sphi 0, %s252
    %s274 = sphi 0, %s276
    %s277 = sphi 0, %s274
    %s278 = sphi 0, %s277
    %s294 = sphi 0, %s278
    %s300 = sphi 0, %s302
    %s303 = sphi 0, %s300
    %s304 = sphi 0, %s303
    %s320 = sphi 0, %s304
  $region4: #{dit_forward.3} parent=0 // loop_header_branch
    %19 = sbr.rel (%p17) target = $region8
  $region5: #{dit_forward.3} parent=0 // loop_body
    %s21 = ssub.s32 %s16, 1
    %s22 = ssub.s32 %s16, 2
    %s29 = sadd.s32 1, %s24
    %p30 = scmp.ge.s32.totalorder %s29, 2
    %s31 = scalar_select %p30, 0, %s29
    %s32 = sadd.s32 1, %s23
    %s33 = scalar_select %p30, %s32, %s23
    %p34 = scmp.ge.s32.totalorder %s33, 2
    %s35 = scalar_select %p34, 0, %s33
    %s36 = ssub.s32 %s23, %s35
    %p37 = scmp.eq.s32.totalorder %s36, 0
    %s39 = sadd.s32 %s38, 1
    %s40 = scalar_select %p37, %s38, %s39
    %p43 = pneg %p37
    %p44 = scmp.eq.s32.totalorder %s16, 3
    %p45 = por %p43, %p44
    %p46 = scmp.ne.s32.totalorder %s38, %s41
    %p47 = scmp.eq.s32.totalorder %s16, 0
    %p48 = por %p46, %p47
    %p49 = scmp.ne.s32.totalorder %s38, %s41
    %p50 = scmp.eq.s32.totalorder %s21, 3
    %p51 = por %p49, %p50
    %p52 = scmp.ne.s32.totalorder %s41, %s42
    %p53 = scmp.eq.s32.totalorder %s21, 0
    %p54 = por %p52, %p53
    %p55 = scmp.ne.s32.totalorder %s41, %s42
    %p56 = scmp.eq.s32.totalorder %s22, 3
    %p57 = por %p55, %p56
    %p59 = scmp.ne.s32.totalorder %s42, %s58
    %p60 = scmp.eq.s32.totalorder %s22, 0
    %p61 = por %p59, %p60
    %s62 = ssub.s32 %s24, %s31
    %s63 = ssub.s32 %s23, %s35
    %s64 = sor.u32 %s62, %s63
    %p65 = scmp.eq.s32.totalorder %s64, 0
    %s67 = sadd.s32 %s66, 1
    %s68 = scalar_select %p65, %s66, %s67
    %p71 = pneg %p65
    %p72 = scmp.eq.s32.totalorder %s16, 3
    %p73 = por %p71, %p72
    %p74 = scmp.ne.s32.totalorder %s66, %s69
    %p75 = scmp.eq.s32.totalorder %s16, 0
    %p76 = por %p74, %p75
    %p77 = scmp.ne.s32.totalorder %s66, %s69
    %p78 = scmp.eq.s32.totalorder %s21, 3
    %p79 = por %p77, %p78
    %p80 = scmp.ne.s32.totalorder %s69, %s70
    %p81 = scmp.eq.s32.totalorder %s21, 0
    %p82 = por %p80, %p81
    %p83 = scmp.ne.s32.totalorder %s69, %s70
    %p84 = scmp.eq.s32.totalorder %s22, 3
    %p85 = por %p83, %p84
    %p87 = scmp.ne.s32.totalorder %s70, %s86
    %p88 = scmp.eq.s32.totalorder %s22, 0
    %p89 = por %p87, %p88
    %s90 = ssub.s32 %s24, %s31
    %p91 = scmp.eq.s32.totalorder %s90, 0
    %s93 = sadd.s32 %s92, 1
    %s94 = scalar_select %p91, %s92, %s93
    %p97 = pneg %p91
    %p98 = scmp.eq.s32.totalorder %s16, 3
    %p99 = por %p97, %p98
    %p100 = scmp.ne.s32.totalorder %s92, %s95
    %p101 = scmp.eq.s32.totalorder %s16, 0
    %p102 = por %p100, %p101
    %p103 = scmp.ne.s32.totalorder %s92, %s95
    %p104 = scmp.eq.s32.totalorder %s21, 3
    %p105 = por %p103, %p104
    %p106 = scmp.ne.s32.totalorder %s95, %s96
    %p107 = scmp.eq.s32.totalorder %s21, 0
    %p108 = por %p106, %p107
    %p109 = scmp.ne.s32.totalorder %s95, %s96
    %p110 = scmp.eq.s32.totalorder %s22, 3
    %p111 = por %p109, %p110
    %p113 = scmp.ne.s32.totalorder %s96, %s112
    %p114 = scmp.eq.s32.totalorder %s22, 0
    %p115 = por %p113, %p114
    %s116 = ssub.s32 %s24, %s31
    %p117 = scmp.eq.s32.totalorder %s116, 0
    %s119 = sadd.s32 %s118, 1
    %s120 = scalar_select %p117, %s118, %s119
    %p123 = pneg %p117
    %p124 = scmp.eq.s32.totalorder %s16, 3
    %p125 = por %p123, %p124
    %p126 = scmp.ne.s32.totalorder %s118, %s121
    %p127 = scmp.eq.s32.totalorder %s16, 0
    %p128 = por %p126, %p127
    %p129 = scmp.ne.s32.totalorder %s118, %s121
    %p130 = scmp.eq.s32.totalorder %s21, 3
    %p131 = por %p129, %p130
    %p132 = scmp.ne.s32.totalorder %s121, %s122
    %p133 = scmp.eq.s32.totalorder %s21, 0
    %p134 = por %p132, %p133
    %p135 = scmp.ne.s32.totalorder %s121, %s122
    %p136 = scmp.eq.s32.totalorder %s22, 3
    %p137 = por %p135, %p136
    %p139 = scmp.ne.s32.totalorder %s122, %s138
    %p140 = scmp.eq.s32.totalorder %s22, 0
    %p141 = por %p139, %p140
    %s142 = ssub.s32 %s24, %s31
    %p143 = scmp.eq.s32.totalorder %s142, 0
    %s145 = sadd.s32 %s144, 1
    %s146 = scalar_select %p143, %s144, %s145
    %p149 = pneg %p143
    %p150 = scmp.eq.s32.totalorder %s16, 3
    %p151 = por %p149, %p150
    %p152 = scmp.ne.s32.totalorder %s144, %s147
    %p153 = scmp.eq.s32.totalorder %s16, 0
    %p154 = por %p152, %p153
    %p155 = scmp.ne.s32.totalorder %s144, %s147
    %p156 = scmp.eq.s32.totalorder %s21, 3
    %p157 = por %p155, %p156
    %p158 = scmp.ne.s32.totalorder %s147, %s148
    %p159 = scmp.eq.s32.totalorder %s21, 0
    %p160 = por %p158, %p159
    %p161 = scmp.ne.s32.totalorder %s147, %s148
    %p162 = scmp.eq.s32.totalorder %s22, 3
    %p163 = por %p161, %p162
    %p165 = scmp.ne.s32.totalorder %s148, %s164
    %p166 = scmp.eq.s32.totalorder %s22, 0
    %p167 = por %p165, %p166
    %s168 = ssub.s32 %s24, %s31
    %p169 = scmp.eq.s32.totalorder %s168, 0
    %s171 = sadd.s32 %s170, 1
    %s172 = scalar_select %p169, %s170, %s171
    %p175 = pneg %p169
    %p176 = scmp.eq.s32.totalorder %s16, 3
    %p177 = por %p175, %p176
    %p178 = scmp.ne.s32.totalorder %s170, %s173
    %p179 = scmp.eq.s32.totalorder %s16, 0
    %p180 = por %p178, %p179
    %p181 = scmp.ne.s32.totalorder %s170, %s173
    %p182 = scmp.eq.s32.totalorder %s21, 3
    %p183 = por %p181, %p182
    %p184 = scmp.ne.s32.totalorder %s173, %s174
    %p185 = scmp.eq.s32.totalorder %s21, 0
    %p186 = por %p184, %p185
    %p187 = scmp.ne.s32.totalorder %s173, %s174
    %p188 = scmp.eq.s32.totalorder %s22, 3
    %p189 = por %p187, %p188
    %p191 = scmp.ne.s32.totalorder %s174, %s190
    %p192 = scmp.eq.s32.totalorder %s22, 0
    %p193 = por %p191, %p192
    %s194 = ssub.s32 %s24, %s31
    %p195 = scmp.eq.s32.totalorder %s194, 0
    %s197 = sadd.s32 %s196, 1
    %s198 = scalar_select %p195, %s196, %s197
    %p201 = pneg %p195
    %p202 = scmp.eq.s32.totalorder %s16, 3
    %p203 = por %p201, %p202
    %p204 = scmp.ne.s32.totalorder %s196, %s199
    %p205 = scmp.eq.s32.totalorder %s16, 0
    %p206 = por %p204, %p205
    %p207 = scmp.ne.s32.totalorder %s196, %s199
    %p208 = scmp.eq.s32.totalorder %s21, 3
    %p209 = por %p207, %p208
    %p210 = scmp.ne.s32.totalorder %s199, %s200
    %p211 = scmp.eq.s32.totalorder %s21, 0
    %p212 = por %p210, %p211
    %p213 = scmp.ne.s32.totalorder %s199, %s200
    %p214 = scmp.eq.s32.totalorder %s22, 3
    %p215 = por %p213, %p214
    %p217 = scmp.ne.s32.totalorder %s200, %s216
    %p218 = scmp.eq.s32.totalorder %s22, 0
    %p219 = por %p217, %p218
    %s220 = ssub.s32 %s24, %s31
    %p221 = scmp.eq.s32.totalorder %s220, 0
    %s223 = sadd.s32 %s222, 1
    %s224 = scalar_select %p221, %s222, %s223
    %p227 = pneg %p221
    %p228 = scmp.eq.s32.totalorder %s16, 3
    %p229 = por %p227, %p228
    %p230 = scmp.ne.s32.totalorder %s222, %s225
    %p231 = scmp.eq.s32.totalorder %s16, 0
    %p232 = por %p230, %p231
    %p233 = scmp.ne.s32.totalorder %s222, %s225
    %p234 = scmp.eq.s32.totalorder %s21, 3
    %p235 = por %p233, %p234
    %p236 = scmp.ne.s32.totalorder %s225, %s226
    %p237 = scmp.eq.s32.totalorder %s21, 0
    %p238 = por %p236, %p237
    %p239 = scmp.ne.s32.totalorder %s225, %s226
    %p240 = scmp.eq.s32.totalorder %s22, 3
    %p241 = por %p239, %p240
    %p243 = scmp.ne.s32.totalorder %s226, %s242
    %p244 = scmp.eq.s32.totalorder %s22, 0
    %p245 = por %p243, %p244
    %s246 = ssub.s32 %s24, %s31
    %p247 = scmp.eq.s32.totalorder %s246, 0
    %s249 = sadd.s32 %s248, 1
    %s250 = scalar_select %p247, %s248, %s249
    %p253 = pneg %p247
    %p254 = scmp.eq.s32.totalorder %s16, 3
    %p255 = por %p253, %p254
    %p256 = scmp.ne.s32.totalorder %s248, %s251
    %p257 = scmp.eq.s32.totalorder %s16, 0
    %p258 = por %p256, %p257
    %p259 = scmp.ne.s32.totalorder %s248, %s251
    %p260 = scmp.eq.s32.totalorder %s21, 3
    %p261 = por %p259, %p260
    %p262 = scmp.ne.s32.totalorder %s251, %s252
    %p263 = scmp.eq.s32.totalorder %s21, 0
    %p264 = por %p262, %p263
    %p265 = scmp.ne.s32.totalorder %s251, %s252
    %p266 = scmp.eq.s32.totalorder %s22, 3
    %p267 = por %p265, %p266
    %p269 = scmp.ne.s32.totalorder %s252, %s268
    %p270 = scmp.eq.s32.totalorder %s22, 0
    %p271 = por %p269, %p270
    %s272 = ssub.s32 %s24, %s31
    %p273 = scmp.eq.s32.totalorder %s272, 0
    %s275 = sadd.s32 %s274, 1
    %s276 = scalar_select %p273, %s274, %s275
    %p279 = pneg %p273
    %p280 = scmp.eq.s32.totalorder %s16, 3
    %p281 = por %p279, %p280
    %p282 = scmp.ne.s32.totalorder %s274, %s277
    %p283 = scmp.eq.s32.totalorder %s16, 0
    %p284 = por %p282, %p283
    %p285 = scmp.ne.s32.totalorder %s274, %s277
    %p286 = scmp.eq.s32.totalorder %s21, 3
    %p287 = por %p285, %p286
    %p288 = scmp.ne.s32.totalorder %s277, %s278
    %p289 = scmp.eq.s32.totalorder %s21, 0
    %p290 = por %p288, %p289
    %p291 = scmp.ne.s32.totalorder %s277, %s278
    %p292 = scmp.eq.s32.totalorder %s22, 3
    %p293 = por %p291, %p292
    %p295 = scmp.ne.s32.totalorder %s278, %s294
    %p296 = scmp.eq.s32.totalorder %s22, 0
    %p297 = por %p295, %p296
    %s298 = ssub.s32 %s23, %s35
    %p299 = scmp.eq.s32.totalorder %s298, 0
    %s301 = sadd.s32 %s300, 1
    %s302 = scalar_select %p299, %s300, %s301
    %p305 = pneg %p299
    %p306 = scmp.eq.s32.totalorder %s16, 3
    %p307 = por %p305, %p306
    %p308 = scmp.ne.s32.totalorder %s300, %s303
    %p309 = scmp.eq.s32.totalorder %s16, 0
    %p310 = por %p308, %p309
    %p311 = scmp.ne.s32.totalorder %s300, %s303
    %p312 = scmp.eq.s32.totalorder %s21, 3
    %p313 = por %p311, %p312
    %p314 = scmp.ne.s32.totalorder %s303, %s304
    %p315 = scmp.eq.s32.totalorder %s21, 0
    %p316 = por %p314, %p315
    %p317 = scmp.ne.s32.totalorder %s303, %s304
    %p318 = scmp.eq.s32.totalorder %s22, 3
    %p319 = por %p317, %p318
    %p321 = scmp.ne.s32.totalorder %s304, %s320
    %p322 = scmp.eq.s32.totalorder %s22, 0
    %p323 = por %p321, %p322
    %p324 = scmp.le.s32.totalorder 1, %s16
    %p325 = scmp.lt.s32.totalorder %s16, 5
    %p326 = pnand %p324, %p325
    %p327 = pneg %p326
    // Predicated region
    $region9: #{dit_forward.3} parent=5 // pred_check
      _
    $region10: #{dit_forward.3} parent=5 // pred_check_branch
      %329 = sbr.rel (%p326) target = $region12
    $region11: #{dit_forward.3} parent=5 // pred_region
      %s330 = ssub.s32 %s16, 1
    $region12: #{dit_forward.3} parent=5 // pred_fallthru
      _
    %p331 = scmp.lt.s32.totalorder %s16, 4
    // Predicated region
    $region13: #{dit_forward.3} parent=5 // pred_check
      %p332 = pneg %p331
    $region14: #{dit_forward.3} parent=5 // pred_check_branch
      %334 = sbr.rel (%p332) target = $region16
    $region15: #{dit_forward.3} parent=5 // pred_region
      // Predicated region
      $region17: #{dit_forward.3} parent=15 // pred_check
        %p335 = pneg %p48
      $region18: #{dit_forward.3} parent=15 // pred_check_branch
        %337 = sbr.rel (%p335) target = $region20
      $region19: #{dit_forward.3} parent=15 // pred_region
        %s338 = smul.u32 2, %s23
        %p339 = scmp.lt.s32.totalorder %s338, 3
        %s340 = scalar_select %p339, %s338, 3
        %s341 = smul.addr %s340, 2
        %s342 = smul.addr %s341, 8
        %s343 = scalar_lea.vmem %s0, %s342
        %s344 = smul.u32 2, %s23
      $region20: #{dit_forward.3} parent=15 // pred_fallthru
        _
      // Predicated region
      $region21: #{dit_forward.3} parent=15 // pred_check
        %p345 = pneg %p76
      $region22: #{dit_forward.3} parent=15 // pred_check_branch
        %347 = sbr.rel (%p345) target = $region24
      $region23: #{dit_forward.3} parent=15 // pred_region
        %s348 = smul.u32 2, %s23
        %p349 = scmp.lt.s32.totalorder %s24, 1
        %s350 = scalar_select %p349, %s24, 1
        %p351 = scmp.lt.s32.totalorder %s348, 3
        %s352 = scalar_select %p351, %s348, 3
        %s353 = smul.addr %s350, 4
        %s354 = sadd.s32 %s352, %s353
        %s355 = smul.addr %s354, 8
        %s356 = scalar_lea.vmem %s1, %s355
        %s357 = smul.u32 2, %s23
      $region24: #{dit_forward.3} parent=15 // pred_fallthru
        _
      // Predicated region
      $region25: #{dit_forward.3} parent=15 // pred_check
        %p358 = pneg %p102
      $region26: #{dit_forward.3} parent=15 // pred_check_branch
        %360 = sbr.rel (%p358) target = $region28
      $region27: #{dit_forward.3} parent=15 // pred_region
        %p361 = scmp.lt.s32.totalorder %s24, 1
        %s362 = scalar_select %p361, %s24, 1
        %s363 = smul.addr %s362, 48
        %s364 = smul.addr %s363, 4
        %s365 = scalar_lea.vmem %s2, %s364
      $region28: #{dit_forward.3} parent=15 // pred_fallthru
        _
      // Predicated region
      $region29: #{dit_forward.3} parent=15 // pred_check
        %p366 = pneg %p128
      $region30: #{dit_forward.3} parent=15 // pred_check_branch
        %368 = sbr.rel (%p366) target = $region32
      $region31: #{dit_forward.3} parent=15 // pred_region
        %p369 = scmp.lt.s32.totalorder %s24, 1
        %s370 = scalar_select %p369, %s24, 1
        %s371 = smul.addr %s370, 3
        %s372 = scalar_lea.vmem %s3, %s371
      $region32: #{dit_forward.3} parent=15 // pred_fallthru
        _
      // Predicated region
      $region33: #{dit_forward.3} parent=15 // pred_check
        %p373 = pneg %p154
      $region34: #{dit_forward.3} parent=15 // pred_check_branch
        %375 = sbr.rel (%p373) target = $region36
      $region35: #{dit_forward.3} parent=15 // pred_region
        %p376 = scmp.lt.s32.totalorder %s24, 1
        %s377 = scalar_select %p376, %s24, 1
        %s378 = smul.addr %s377, 16
        %s379 = smul.addr %s378, 4
        %s380 = scalar_lea.vmem %s4, %s379
      $region36: #{dit_forward.3} parent=15 // pred_fallthru
        _
      // Predicated region
      $region37: #{dit_forward.3} parent=15 // pred_check
        %p381 = pneg %p180
      $region38: #{dit_forward.3} parent=15 // pred_check_branch
        %383 = sbr.rel (%p381) target = $region40
      $region39: #{dit_forward.3} parent=15 // pred_region
        %p384 = scmp.lt.s32.totalorder %s24, 1
        %s385 = scalar_select %p384, %s24, 1
        %s386 = scalar_lea.vmem %s5, %s385
      $region40: #{dit_forward.3} parent=15 // pred_fallthru
        _
      // Predicated region
      $region41: #{dit_forward.3} parent=15 // pred_check
        %p387 = pneg %p206
      $region42: #{dit_forward.3} parent=15 // pred_check_branch
        %389 = sbr.rel (%p387) target = $region44
      $region43: #{dit_forward.3} parent=15 // pred_region
        %p390 = scmp.lt.s32.totalorder %s24, 1
        %s391 = scalar_select %p390, %s24, 1
        %s392 = smul.addr %s391, 64
        %s393 = smul.addr %s392, 4
        %s394 = scalar_lea.vmem %s6, %s393
      $region44: #{dit_forward.3} parent=15 // pred_fallthru
        _
      // Predicated region
      $region45: #{dit_forward.3} parent=15 // pred_check
        %p395 = pneg %p232
      $region46: #{dit_forward.3} parent=15 // pred_check_branch
        %397 = sbr.rel (%p395) target = $region48
      $region47: #{dit_forward.3} parent=15 // pred_region
        %p398 = scmp.lt.s32.totalorder %s24, 1
        %s399 = scalar_select %p398, %s24, 1
        %s400 = smul.addr %s399, 4
        %s401 = scalar_lea.vmem %s7, %s400
      $region48: #{dit_forward.3} parent=15 // pred_fallthru
        _
      // Predicated region
      $region49: #{dit_forward.3} parent=15 // pred_check
        %p402 = pneg %p258
      $region50: #{dit_forward.3} parent=15 // pred_check_branch
        %404 = sbr.rel (%p402) target = $region52
      $region51: #{dit_forward.3} parent=15 // pred_region
        %p405 = scmp.lt.s32.totalorder %s24, 1
        %s406 = scalar_select %p405, %s24, 1
        %s407 = smul.addr %s406, 64
        %s408 = smul.addr %s407, 4
        %s409 = scalar_lea.vmem %s8, %s408
      $region52: #{dit_forward.3} parent=15 // pred_fallthru
        _
      // Predicated region
      $region53: #{dit_forward.3} parent=15 // pred_check
        %p410 = pneg %p284
      $region54: #{dit_forward.3} parent=15 // pred_check_branch
        %412 = sbr.rel (%p410) target = $region56
      $region55: #{dit_forward.3} parent=15 // pred_region
        %p413 = scmp.lt.s32.totalorder %s24, 1
        %s414 = scalar_select %p413, %s24, 1
        %s415 = scalar_lea.vmem %s9, %s414
      $region56: #{dit_forward.3} parent=15 // pred_fallthru
        _
    $region16: #{dit_forward.3} parent=5 // pred_fallthru
      _
    %p416 = scmp.le.s32.totalorder 1, %s16
    %p417 = scmp.lt.s32.totalorder %s16, 5
    %p418 = pnand %p416, %p417
    %p419 = pneg %p418
    // Predicated region
    $region57: #{dit_forward.3} parent=5 // pred_check
      _
    $region58: #{dit_forward.3} parent=5 // pred_check_branch
      %421 = sbr.rel (%p418) target = $region60
    $region59: #{dit_forward.3} parent=5 // pred_region
      %s422 = ssub.s32 %s16, 1
      %s423 = smul.u32 2, %s25
      %p424 = scmp.lt.s32.totalorder %s423, 3
      %s425 = scalar_select %p424, %s423, 3
      %s426 = smul.addr %s425, 2
      %s427 = smul.addr %s426, 8
      %s428 = scalar_lea.vmem %s0, %s427
      %p429 = pneg %p54
      %p430 = pneg %p51
      %s431 = smul.u32 2, %s25
      %p432 = scmp.lt.s32.totalorder %s26, 1
      %s433 = scalar_select %p432, %s26, 1
      %p434 = scmp.lt.s32.totalorder %s431, 3
      %s435 = scalar_select %p434, %s431, 3
      %s436 = smul.addr %s433, 4
      %s437 = sadd.s32 %s435, %s436
      %s438 = smul.addr %s437, 8
      %s439 = scalar_lea.vmem %s1, %s438
      %p440 = pneg %p82
      %p441 = pneg %p79
      %p442 = scmp.lt.s32.totalorder %s26, 1
      %s443 = scalar_select %p442, %s26, 1
      %s444 = smul.addr %s443, 48
      %s445 = smul.addr %s444, 4
      %s446 = scalar_lea.vmem %s2, %s445
      %p447 = pneg %p108
      %p448 = pneg %p105
      %p449 = scmp.lt.s32.totalorder %s26, 1
      %s450 = scalar_select %p449, %s26, 1
      %s451 = smul.addr %s450, 3
      %s452 = scalar_lea.vmem %s3, %s451
      %p453 = pneg %p134
      %p454 = pneg %p131
      %p455 = scmp.lt.s32.totalorder %s26, 1
      %s456 = scalar_select %p455, %s26, 1
      %s457 = smul.addr %s456, 16
      %s458 = smul.addr %s457, 4
      %s459 = scalar_lea.vmem %s4, %s458
      %p460 = pneg %p160
      %p461 = pneg %p157
      %p462 = scmp.lt.s32.totalorder %s26, 1
      %s463 = scalar_select %p462, %s26, 1
      %s464 = scalar_lea.vmem %s5, %s463
      %p465 = pneg %p186
      %p466 = pneg %p183
      %p467 = scmp.lt.s32.totalorder %s26, 1
      %s468 = scalar_select %p467, %s26, 1
      %s469 = smul.addr %s468, 64
      %s470 = smul.addr %s469, 4
      %s471 = scalar_lea.vmem %s6, %s470
      %p472 = pneg %p212
      %p473 = pneg %p209
      %p474 = scmp.lt.s32.totalorder %s26, 1
      %s475 = scalar_select %p474, %s26, 1
      %s476 = smul.addr %s475, 4
      %s477 = scalar_lea.vmem %s7, %s476
      %p478 = pneg %p238
      %p479 = pneg %p235
      %p480 = scmp.lt.s32.totalorder %s26, 1
      %s481 = scalar_select %p480, %s26, 1
      %s482 = smul.addr %s481, 64
      %s483 = smul.addr %s482, 4
      %s484 = scalar_lea.vmem %s8, %s483
      %p485 = pneg %p264
      %p486 = pneg %p261
      %p487 = scmp.lt.s32.totalorder %s26, 1
      %s488 = scalar_select %p487, %s26, 1
      %s489 = scalar_lea.vmem %s9, %s488
      %p490 = pneg %p290
      %p491 = pneg %p287
      %p492 = pneg %p316
      %p493 = pneg %p313
      %s494 = smul.u32 2, %s25
      %p495 = scmp.lt.s32.totalorder %s494, 3
      %s496 = scalar_select %p495, %s494, 3
      %s497 = smul.addr %s496, 2
      %s498 = smul.addr %s497, 8
      %s499 = scalar_lea.vmem %s10, %s498
      %s500 = smul.u32 2, %s25
      %p501 = scmp.lt.s32.totalorder %s500, 3
      %s502 = scalar_select %p501, %s500, 3
      %s503 = smul.addr %s502, 2
      %s504 = smul.addr %s503, 8
      %s505 = scalar_lea.vmem %s0, %s504
      %s506 = smul.u32 2, %s25
      %s507 = smul.u32 2, %s25
      %p508 = scmp.lt.s32.totalorder %s26, 1
      %s509 = scalar_select %p508, %s26, 1
      %p510 = scmp.lt.s32.totalorder %s507, 3
      %s511 = scalar_select %p510, %s507, 3
      %s512 = smul.addr %s509, 4
      %s513 = sadd.s32 %s511, %s512
      %s514 = smul.addr %s513, 8
      %s515 = scalar_lea.vmem %s1, %s514
      %s516 = smul.u32 2, %s25
      %p517 = scmp.lt.s32.totalorder %s26, 1
      %s518 = scalar_select %p517, %s26, 1
      %s519 = smul.addr %s518, 48
      %s520 = smul.addr %s519, 4
      %s521 = scalar_lea.vmem %s2, %s520
      %p522 = scmp.lt.s32.totalorder %s26, 1
      %s523 = scalar_select %p522, %s26, 1
      %s524 = smul.addr %s523, 3
      %s525 = scalar_lea.vmem %s3, %s524
      %p526 = scmp.lt.s32.totalorder %s26, 1
      %s527 = scalar_select %p526, %s26, 1
      %s528 = smul.addr %s527, 16
      %s529 = smul.addr %s528, 4
      %s530 = scalar_lea.vmem %s4, %s529
      %p531 = scmp.lt.s32.totalorder %s26, 1
      %s532 = scalar_select %p531, %s26, 1
      %s533 = scalar_lea.vmem %s5, %s532
      %p534 = scmp.lt.s32.totalorder %s26, 1
      %s535 = scalar_select %p534, %s26, 1
      %s536 = smul.addr %s535, 64
      %s537 = smul.addr %s536, 4
      %s538 = scalar_lea.vmem %s6, %s537
      %p539 = scmp.lt.s32.totalorder %s26, 1
      %s540 = scalar_select %p539, %s26, 1
      %s541 = smul.addr %s540, 4
      %s542 = scalar_lea.vmem %s7, %s541
      %p543 = scmp.lt.s32.totalorder %s26, 1
      %s544 = scalar_select %p543, %s26, 1
      %s545 = smul.addr %s544, 64
      %s546 = smul.addr %s545, 4
      %s547 = scalar_lea.vmem %s8, %s546
      %p548 = scmp.lt.s32.totalorder %s26, 1
      %s549 = scalar_select %p548, %s26, 1
      %s550 = scalar_lea.vmem %s9, %s549
      %s551 = smul.u32 2, %s25
      %p552 = scmp.lt.s32.totalorder %s551, 3
      %s553 = scalar_select %p552, %s551, 3
      %s554 = smul.addr %s553, 2
      %s555 = smul.addr %s554, 8
      %s556 = scalar_lea.vmem %s10, %s555
      %s557 = smul.u32 2, %s25
      %p559 = scmp.eq.s32.totalorder %s26, 0
      // Predicated region
      $region61: #{dit_forward.3} parent=59 // pred_check
        %p560 = pneg %p559
      $region62: #{dit_forward.3} parent=59 // pred_check_branch
        %562 = sbr.rel (%p560) target = $region64
      $region63: #{dit_forward.3} parent=59 // pred_region
        %v563 = vld [vmem:[%s505] sm:$0xff]
        %v564 = vld [vmem:[%s505 + $0x8] sm:$0xff]
        %v565 = vld [vmem:[%s505 + $0x10] sm:$0xff]
        %v566 = vld [vmem:[%s505 + $0x18] sm:$0xff]
        %567 = vst [vmem:[%s556] sm:$0xff] %v563
        %568 = vst [vmem:[%s556 + $0x8] sm:$0xff] %v564
        %569 = vst [vmem:[%s556 + $0x10] sm:$0xff] %v565
        %570 = vst [vmem:[%s556 + $0x18] sm:$0xff] %v566
      $region64: #{dit_forward.3} parent=59 // pred_fallthru
        _
      %v571 = vld [vmem:[%s556] sm:$0xff]
      %v572 = vld [vmem:[%s556 + $0x8] sm:$0xff]
      %v573 = vld [vmem:[%s556 + $0x10] sm:$0xff]
      %v574 = vld [vmem:[%s556 + $0x18] sm:$0xff]
      %v575 = vld [vmem:[%s515] sm:$0x3f]
      %v576 = vld [vmem:[%s515 + $0x8] sm:$0x3f]
      %577 = vadd.xlane.f32.xlu0 %v571
      %v578 = vpop.xlane.xlu0 %577
      %579 = vadd.xlane.f32.xlu0 %v572
      %v580 = vpop.xlane.xlu0 %579
      %581 = vadd.xlane.f32.xlu0 %v573
      %v582 = vpop.xlane.xlu0 %581
      %583 = vadd.xlane.f32.xlu0 %v574
      %v584 = vpop.xlane.xlu0 %583
      %v585 = vrcp.pop 128.0
      %v586 = vmul.f32 128.0, %v585
      %v587 = vsub.f32 1.0, %v586
      %v588 = vmul.f32 %v585, %v587
      %v589 = vadd.f32 %v585, %v588
      %vm590 = vweird.f32 %v585
      %v591 = vsel %vm590, %v585, %v589
      %v592 = vmul.f32 %v578, %v591
      %v593 = vmul.f32 %v580, %v591
      %v594 = vmul.f32 %v582, %v591
      %v595 = vmul.f32 %v584, %v591
      %v596 = vsub.f32 %v571, %v592
      %v597 = vsub.f32 %v572, %v593
      %v598 = vsub.f32 %v573, %v594
      %v599 = vsub.f32 %v574, %v595
      %v600 = vmul.f32 %v596, %v596
      %v601 = vmul.f32 %v597, %v597
      %v602 = vmul.f32 %v598, %v598
      %v603 = vmul.f32 %v599, %v599
      %604 = vadd.xlane.f32.xlu0 %v600
      %v605 = vpop.xlane.xlu0 %604
      %606 = vadd.xlane.f32.xlu0 %v601
      %v607 = vpop.xlane.xlu0 %606
      %608 = vadd.xlane.f32.xlu0 %v602
      %v609 = vpop.xlane.xlu0 %608
      %610 = vadd.xlane.f32.xlu0 %v603
      %v611 = vpop.xlane.xlu0 %610
      %v612 = vmul.f32 %v605, %v591
      %v613 = vmul.f32 %v607, %v591
      %v614 = vmul.f32 %v609, %v591
      %v615 = vmul.f32 %v611, %v591
      %v616 = vadd.f32 %v612, 1e-06
      %v617 = vadd.f32 %v613, 1e-06
      %v618 = vadd.f32 %v614, 1e-06
      %v619 = vadd.f32 %v615, 1e-06
      %v620 = vrsqrt.pop %v616
      %v621 = vmul.f32 %v620, %v616
      %v622 = vmul.f32 %v621, %v620
      %v623 = vmul.f32 0.5, %v622
      %v624 = vsub.f32 1.5, %v623
      %v625 = vmul.f32 %v620, %v624
      %vm626 = vweird.f32 %v616
      %vm627 = vweird.f32 %v620
      %vm628 = vmor %vm626, %vm627
      %v629 = vsel %vm628, %v620, %v625
      %v630 = vrsqrt.pop %v617
      %v631 = vmul.f32 %v630, %v617
      %v632 = vmul.f32 %v631, %v630
      %v633 = vmul.f32 0.5, %v632
      %v634 = vsub.f32 1.5, %v633
      %v635 = vmul.f32 %v630, %v634
      %vm636 = vweird.f32 %v617
      %vm637 = vweird.f32 %v630
      %vm638 = vmor %vm636, %vm637
      %v639 = vsel %vm638, %v630, %v635
      %v640 = vrsqrt.pop %v618
      %v641 = vmul.f32 %v640, %v618
      %v642 = vmul.f32 %v641, %v640
      %v643 = vmul.f32 0.5, %v642
      %v644 = vsub.f32 1.5, %v643
      %v645 = vmul.f32 %v640, %v644
      %vm646 = vweird.f32 %v618
      %vm647 = vweird.f32 %v640
      %vm648 = vmor %vm646, %vm647
      %v649 = vsel %vm648, %v640, %v645
      %v650 = vrsqrt.pop %v619
      %v651 = vmul.f32 %v650, %v619
      %v652 = vmul.f32 %v651, %v650
      %v653 = vmul.f32 0.5, %v652
      %v654 = vsub.f32 1.5, %v653
      %v655 = vmul.f32 %v650, %v654
      %vm656 = vweird.f32 %v619
      %vm657 = vweird.f32 %v650
      %vm658 = vmor %vm656, %vm657
      %v659 = vsel %vm658, %v650, %v655
      %v660 = vmul.f32 %v596, %v629
      %v661 = vmul.f32 %v597, %v639
      %v662 = vmul.f32 %v598, %v649
      %v663 = vmul.f32 %v599, %v659
      %v664 = vadd.f32 %v575, 1.0
      %v665 = vadd.f32 %v576, 1.0
      %v666 = vperm.slane %v664, 1
      %v667 = vperm.slane %v665, 1
      %v668 = vmul.f32 %v660, %v666
      %v669 = vmul.f32 %v661, %v666
      %v670 = vmul.f32 %v662, %v667
      %v671 = vmul.f32 %v663, %v667
      %v672 = vperm.slane %v575, 0
      %v673 = vperm.slane %v576, 0
      %v674 = vadd.f32 %v668, %v672
      %v675 = vadd.f32 %v669, %v672
      %v676 = vadd.f32 %v670, %v673
      %v677 = vadd.f32 %v671, %v673
      %v678 = vpack.c.bf16 %v675, %v674
      %v679 = vpack.c.bf16 %v677, %v676
      %v680 = vld [vmem:[%s521] sm:$0xff]
      %v681 = vld [vmem:[%s521 + $0x8] sm:$0xf]
      %v682 = vld [vmem:[%s521 + $0xc] sm:$0xff]
      %v683 = vld [vmem:[%s521 + $0x14] sm:$0xf]
      %v684 = vld [vmem:[%s521 + $0x18] sm:$0xff]
      %v685 = vld [vmem:[%s521 + $0x20] sm:$0xf]
      %v686 = vld [vmem:[%s521 + $0x24] sm:$0xff]
      %v687 = vld [vmem:[%s521 + $0x2c] sm:$0xf]
      %v688 = vld [vmem:[%s521 + $0x30] sm:$0xff]
      %v689 = vld [vmem:[%s521 + $0x38] sm:$0xf]
      %v690 = vld [vmem:[%s521 + $0x3c] sm:$0xff]
      %v691 = vld [vmem:[%s521 + $0x44] sm:$0xf]
      %v692 = vld [vmem:[%s521 + $0x48] sm:$0xff]
      %v693 = vld [vmem:[%s521 + $0x50] sm:$0xf]
      %v694 = vld [vmem:[%s521 + $0x54] sm:$0xff]
      %v695 = vld [vmem:[%s521 + $0x5c] sm:$0xf]
      %v696 = vld [vmem:[%s521 + $0x60] sm:$0xff]
      %v697 = vld [vmem:[%s521 + $0x68] sm:$0xf]
      %v698 = vld [vmem:[%s521 + $0x6c] sm:$0xff]
      %v699 = vld [vmem:[%s521 + $0x74] sm:$0xf]
      %v700 = vld [vmem:[%s521 + $0x78] sm:$0xff]
      %v701 = vld [vmem:[%s521 + $0x80] sm:$0xf]
      %v702 = vld [vmem:[%s521 + $0x84] sm:$0xff]
      %v703 = vld [vmem:[%s521 + $0x8c] sm:$0xf]
      %v704 = vld [vmem:[%s521 + $0x90] sm:$0xff]
      %v705 = vld [vmem:[%s521 + $0x98] sm:$0xf]
      %v706 = vld [vmem:[%s521 + $0x9c] sm:$0xff]
      %v707 = vld [vmem:[%s521 + $0xa4] sm:$0xf]
      %v708 = vld [vmem:[%s521 + $0xa8] sm:$0xff]
      %v709 = vld [vmem:[%s521 + $0xb0] sm:$0xf]
      %v710 = vld [vmem:[%s521 + $0xb4] sm:$0xff]
      %v711 = vld [vmem:[%s521 + $0xbc] sm:$0xf]
      %v712 = vld [vmem:[%s525] sm:$0x7]
      %v714 = vperm.slane %v712, 0
      %v715 = vperm.slane %v712, 1
      %v716 = vperm.slane %v712, 2
      %v752 = vunpack.c.l.b16 %v680
      %v753 = vunpack.c.h.b16 %v680
      %v754 = vunpack.c.l.b16 %v681
      %v755 = vunpack.c.l.b16 %v682
      %v756 = vunpack.c.h.b16 %v682
      %v757 = vunpack.c.l.b16 %v683
      %v758 = vunpack.c.l.b16 %v684
      %v759 = vunpack.c.h.b16 %v684
      %v760 = vunpack.c.l.b16 %v685
      %v761 = vunpack.c.l.b16 %v686
      %v762 = vunpack.c.h.b16 %v686
      %v763 = vunpack.c.l.b16 %v687
      %v764 = vunpack.c.l.b16 %v688
      %v765 = vunpack.c.h.b16 %v688
      %v766 = vunpack.c.l.b16 %v689
      %v767 = vunpack.c.l.b16 %v690
      %v768 = vunpack.c.h.b16 %v690
      %v769 = vunpack.c.l.b16 %v691
      %v770 = vunpack.c.l.b16 %v692
      %v771 = vunpack.c.h.b16 %v692
      %v772 = vunpack.c.l.b16 %v693
      %v773 = vunpack.c.l.b16 %v694
      %v774 = vunpack.c.h.b16 %v694
      %v775 = vunpack.c.l.b16 %v695
      %v776 = vunpack.c.l.b16 %v696
      %v777 = vunpack.c.h.b16 %v696
      %v778 = vunpack.c.l.b16 %v697
      %v779 = vunpack.c.l.b16 %v698
      %v780 = vunpack.c.h.b16 %v698
      %v781 = vunpack.c.l.b16 %v699
      %v782 = vunpack.c.l.b16 %v700
      %v783 = vunpack.c.h.b16 %v700
      %v784 = vunpack.c.l.b16 %v701
      %v785 = vunpack.c.l.b16 %v702
      %v786 = vunpack.c.h.b16 %v702
      %v787 = vunpack.c.l.b16 %v703
      %v788 = vunpack.c.l.b16 %v704
      %v789 = vunpack.c.h.b16 %v704
      %v790 = vunpack.c.l.b16 %v705
      %v791 = vunpack.c.l.b16 %v706
      %v792 = vunpack.c.h.b16 %v706
      %v793 = vunpack.c.l.b16 %v707
      %v794 = vunpack.c.l.b16 %v708
      %v795 = vunpack.c.h.b16 %v708
      %v796 = vunpack.c.l.b16 %v709
      %v797 = vunpack.c.l.b16 %v710
      %v798 = vunpack.c.h.b16 %v710
      %v799 = vunpack.c.l.b16 %v711
      %v800 = vpack.c.b16 %v755, %v752
      %v801 = vpack.c.b16 %v756, %v753
      %v802 = vpack.c.b16 %v757, %v754
      %v803 = vpack.c.b16 %v761, %v758
      %v804 = vpack.c.b16 %v762, %v759
      %v805 = vpack.c.b16 %v763, %v760
      %v806 = vpack.c.b16 %v767, %v764
      %v807 = vpack.c.b16 %v768, %v765
      %v808 = vpack.c.b16 %v769, %v766
      %v809 = vpack.c.b16 %v773, %v770
      %v810 = vpack.c.b16 %v774, %v771
      %v811 = vpack.c.b16 %v775, %v772
      %v812 = vpack.c.b16 %v779, %v776
      %v813 = vpack.c.b16 %v780, %v777
      %v814 = vpack.c.b16 %v781, %v778
      %v815 = vpack.c.b16 %v785, %v782
      %v816 = vpack.c.b16 %v786, %v783
      %v817 = vpack.c.b16 %v787, %v784
      %v818 = vpack.c.b16 %v791, %v788
      %v819 = vpack.c.b16 %v792, %v789
      %v820 = vpack.c.b16 %v793, %v790
      %v821 = vpack.c.b16 %v797, %v794
      %v822 = vpack.c.b16 %v798, %v795
      %v823 = vpack.c.b16 %v799, %v796
      %848 = vmatpush.bf16.msra.mxu0 %v821
      %849 = vmatpush.bf16.msra.mxu0 %v818
      %850 = vmatpush.bf16.msra.mxu0 %v815
      %851 = vmatpush.bf16.msra.mxu0 %v812
      %852 = vmatpush.bf16.msra.mxu0 %v809
      %853 = vmatpush.bf16.msra.mxu0 %v806
      %854 = vmatpush.bf16.msra.mxu0 %v803
      %855 = vmatpush.bf16.msra.mxu0 %v800
      %856 = vmatmul.bf16.gmra.mxu0 %v678
      %v857 = vpop.f32.mrf.mxu0
      %v858 = vadd.f32 %v714, %v857
      %v859 = vpop.f32.mrf.mxu0
      %v860 = vadd.f32 %v714, %v859
      %861 = vmatmul.bf16.gmra.mxu0 %v679
      %v862 = vpop.f32.mrf.mxu0
      %v863 = vadd.f32 %v714, %v862
      %v864 = vpop.f32.mrf.mxu0
      %v865 = vadd.f32 %v714, %v864
      %866 = vdwg.mxu0
      %867 = vmatpush.bf16.msra.mxu0 %v822
      %868 = vmatpush.bf16.msra.mxu0 %v819
      %869 = vmatpush.bf16.msra.mxu0 %v816
      %870 = vmatpush.bf16.msra.mxu0 %v813
      %871 = vmatpush.bf16.msra.mxu0 %v810
      %872 = vmatpush.bf16.msra.mxu0 %v807
      %873 = vmatpush.bf16.msra.mxu0 %v804
      %874 = vmatpush.bf16.msra.mxu0 %v801
      %875 = vmatmul.bf16.gmra.mxu0 %v678
      %v876 = vpop.f32.mrf.mxu0
      %v877 = vadd.f32 %v715, %v876
      %v878 = vpop.f32.mrf.mxu0
      %v879 = vadd.f32 %v715, %v878
      %880 = vmatmul.bf16.gmra.mxu0 %v679
      %v881 = vpop.f32.mrf.mxu0
      %v882 = vadd.f32 %v715, %v881
      %v883 = vpop.f32.mrf.mxu0
      %v884 = vadd.f32 %v715, %v883
      %885 = vdwg.mxu0
      %886 = vmatpush.bf16.msra.mxu0 %v823
      %887 = vmatpush.bf16.msra.mxu0 %v820
      %888 = vmatpush.bf16.msra.mxu0 %v817
      %889 = vmatpush.bf16.msra.mxu0 %v814
      %890 = vmatpush.bf16.msra.mxu0 %v811
      %891 = vmatpush.bf16.msra.mxu0 %v808
      %892 = vmatpush.bf16.msra.mxu0 %v805
      %893 = vmatpush.bf16.msra.mxu0 %v802
      %894 = vmatmul.bf16.gmra.mxu0 %v678
      %v895 = vpop.f32.mrf.mxu0
      %v896 = vadd.f32 %v716, %v895
      %v897 = vpop.f32.mrf.mxu0
      %v898 = vadd.f32 %v716, %v897
      %899 = vmatmul.bf16.gmra.mxu0 %v679
      %v900 = vpop.f32.mrf.mxu0
      %v901 = vadd.f32 %v716, %v900
      %v902 = vpop.f32.mrf.mxu0
      %v903 = vadd.f32 %v716, %v902
      %904 = vdwg.mxu0
      %v905 = vpack.c.bf16 %v858, %v858
      %v906 = vpack.c.bf16 %v860, %v860
      %v907 = vpack.c.bf16 %v863, %v863
      %v908 = vpack.c.bf16 %v865, %v865
      %v909 = vpack.c.bf16 %v877, %v877
      %v910 = vpack.c.bf16 %v879, %v879
      %v911 = vpack.c.bf16 %v882, %v882
      %v912 = vpack.c.bf16 %v884, %v884
      %v913 = vpack.c.bf16 %v896, %v896
      %v914 = vpack.c.bf16 %v898, %v898
      %v915 = vpack.c.bf16 %v901, %v901
      %v916 = vpack.c.bf16 %v903, %v903
      %v919 = vunpack.c.l.b16 %v905
      %v920 = vunpack.c.l.b16 %v906
      %v921 = vpack.c.b16 %v920, %v919
      %v924 = vunpack.c.l.b16 %v909
      %v925 = vunpack.c.l.b16 %v910
      %v926 = vpack.c.b16 %v925, %v924
      %vm927 = vcmask 261120
      %v929 = vsel %vm927, %v921, 0
      %v932 = vsel %vm927, %v926, 0
      %934 = vmatpush.bf16.xpose.msra.mxu0 0
      %935 = vmatpush.bf16.xpose.msra.mxu0 0
      %936 = vmatpush.bf16.xpose.msra.mxu0 0
      %937 = vmatpush.bf16.xpose.msra.mxu0 0
      %938 = vmatpush.bf16.xpose.msra.mxu0 0
      %939 = vmatpush.bf16.xpose.msra.mxu0 0
      %940 = vmatpush.bf16.xpose.msra.mxu0 0
      %941 = vmatpush.bf16.xpose.msra.mxu0 %v932
      %942 = vmatmul.bf16.gmra.mxu0 %v929
      %v943 = vpop.f32.mrf.mxu0
      %v944 = vadd.f32 0.0, %v943
      %v945 = vpop.f32.mrf.mxu0
      %v946 = vadd.f32 0.0, %v945
      %947 = vdwg.mxu0
      %v950 = vunpack.c.l.b16 %v907
      %v951 = vunpack.c.l.b16 %v908
      %v952 = vpack.c.b16 %v951, %v950
      %v955 = vunpack.c.l.b16 %v911
      %v956 = vunpack.c.l.b16 %v912
      %v957 = vpack.c.b16 %v956, %v955
      %v959 = vsel %vm927, %v952, 0
      %v962 = vsel %vm927, %v957, 0
      %964 = vmatpush.bf16.xpose.msra.mxu0 0
      %965 = vmatpush.bf16.xpose.msra.mxu0 0
      %966 = vmatpush.bf16.xpose.msra.mxu0 0
      %967 = vmatpush.bf16.xpose.msra.mxu0 0
      %968 = vmatpush.bf16.xpose.msra.mxu0 0
      %969 = vmatpush.bf16.xpose.msra.mxu0 0
      %970 = vmatpush.bf16.xpose.msra.mxu0 0
      %971 = vmatpush.bf16.xpose.msra.mxu0 %v962
      %972 = vmatmul.bf16.gmra.mxu0 %v959
      %v973 = vpop.f32.mrf.mxu0
      %v974 = vadd.f32 0.0, %v973
      %v975 = vpop.f32.mrf.mxu0
      %v976 = vadd.f32 0.0, %v975
      %977 = vdwg.mxu0
      %vm978 = vcmask 130048
      %v979 = vsel %vm978, %v944, -inf
      %980 = vmax.xlane.f32.xlu0 %v979
      %v981 = vpop.xlane.xlu0 %980
      %v982 = vsel %vm978, %v946, -inf
      %983 = vmax.xlane.f32.xlu0 %v982
      %v984 = vpop.xlane.xlu0 %983
      %v985 = vsel %vm978, %v974, -inf
      %986 = vmax.xlane.f32.xlu0 %v985
      %v987 = vpop.xlane.xlu0 %986
      %v988 = vsel %vm978, %v976, -inf
      %989 = vmax.xlane.f32.xlu0 %v988
      %v990 = vpop.xlane.xlu0 %989
      %v991 = vsub.f32 %v944, %v981
      %v992 = vsub.f32 %v946, %v984
      %v993 = vsub.f32 %v974, %v987
      %v994 = vsub.f32 %v976, %v990
      %v995 = vmul.f32 %v991, 1.442695
      %v996 = vpow.pop %v995
      %v997 = vmul.f32 %v992, 1.442695
      %v998 = vpow.pop %v997
      %v999 = vmul.f32 %v993, 1.442695
      %v1000 = vpow.pop %v999
      %v1001 = vmul.f32 %v994, 1.442695
      %v1002 = vpow.pop %v1001
      %v1003 = vsel %vm978, %v996, 0.0
      %1004 = vadd.xlane.f32.xlu0 %v1003
      %v1005 = vpop.xlane.xlu0 %1004
      %v1006 = vsel %vm978, %v998, 0.0
      %1007 = vadd.xlane.f32.xlu0 %v1006
      %v1008 = vpop.xlane.xlu0 %1007
      %v1009 = vsel %vm978, %v1000, 0.0
      %1010 = vadd.xlane.f32.xlu0 %v1009
      %v1011 = vpop.xlane.xlu0 %1010
      %v1012 = vsel %vm978, %v1002, 0.0
      %1013 = vadd.xlane.f32.xlu0 %v1012
      %v1014 = vpop.xlane.xlu0 %1013
      %v1015 = vrcp.pop %v1005
      %v1016 = vrcp.pop %v1008
      %v1017 = vrcp.pop %v1011
      %v1018 = vrcp.pop %v1014
      %v1019 = vmul.f32 %v996, %v1015
      %v1020 = vmul.f32 %v998, %v1016
      %v1021 = vmul.f32 %v1000, %v1017
      %v1022 = vmul.f32 %v1002, %v1018
      %v1023 = vpack.c.bf16 %v1019, %v1019
      %v1024 = vpack.c.bf16 %v1020, %v1020
      %v1025 = vpack.c.bf16 %v1021, %v1021
      %v1026 = vpack.c.bf16 %v1022, %v1022
      %v1029 = vunpack.c.l.b16 %v1023
      %v1030 = vunpack.c.l.b16 %v1024
      %v1031 = vpack.c.b16 %v1030, %v1029
      %v1034 = vunpack.c.l.b16 %v913
      %v1035 = vunpack.c.l.b16 %v914
      %v1036 = vpack.c.b16 %v1035, %v1034
      %v1039 = vsel %vm978, %v1031, 0
      %1041 = vmatpush.bf16.msra.mxu0 0
      %1042 = vmatpush.bf16.msra.mxu0 0
      %1043 = vmatpush.bf16.msra.mxu0 0
      %1044 = vmatpush.bf16.msra.mxu0 0
      %1045 = vmatpush.bf16.msra.mxu0 0
      %1046 = vmatpush.bf16.msra.mxu0 0
      %1047 = vmatpush.bf16.msra.mxu0 0
      %1048 = vmatpush.bf16.msra.mxu0 %v1036
      %1049 = vmatmul.bf16.gmra.mxu0 %v1039
      %v1050 = vpop.f32.mrf.mxu0
      %v1051 = vadd.f32 0.0, %v1050
      %v1052 = vpop.f32.mrf.mxu0
      %v1053 = vadd.f32 0.0, %v1052
      %1054 = vdwg.mxu0
      %v1057 = vunpack.c.l.b16 %v1025
      %v1058 = vunpack.c.l.b16 %v1026
      %v1059 = vpack.c.b16 %v1058, %v1057
      %v1062 = vunpack.c.l.b16 %v915
      %v1063 = vunpack.c.l.b16 %v916
      %v1064 = vpack.c.b16 %v1063, %v1062
      %v1067 = vsel %vm978, %v1059, 0
      %1069 = vmatpush.bf16.msra.mxu0 0
      %1070 = vmatpush.bf16.msra.mxu0 0
      %1071 = vmatpush.bf16.msra.mxu0 0
      %1072 = vmatpush.bf16.msra.mxu0 0
      %1073 = vmatpush.bf16.msra.mxu0 0
      %1074 = vmatpush.bf16.msra.mxu0 0
      %1075 = vmatpush.bf16.msra.mxu0 0
      %1076 = vmatpush.bf16.msra.mxu0 %v1064
      %1077 = vmatmul.bf16.gmra.mxu0 %v1067
      %v1078 = vpop.f32.mrf.mxu0
      %v1079 = vadd.f32 0.0, %v1078
      %v1080 = vpop.f32.mrf.mxu0
      %v1081 = vadd.f32 0.0, %v1080
      %1082 = vdwg.mxu0
      %1083 = vrot.lane.b32.xlu0 %v921, 96
      %v1084 = vpop.permute.xlu0 %1083
      %1085 = vrot.lane.b32.xlu0 %v926, 96
      %v1086 = vpop.permute.xlu0 %1085
      %v1088 = vsel %vm927, %v1084, 0
      %v1091 = vsel %vm927, %v1086, 0
      %1093 = vmatpush.bf16.xpose.msra.mxu0 0
      %1094 = vmatpush.bf16.xpose.msra.mxu0 0
      %1095 = vmatpush.bf16.xpose.msra.mxu0 0
      %1096 = vmatpush.bf16.xpose.msra.mxu0 0
      %1097 = vmatpush.bf16.xpose.msra.mxu0 0
      %1098 = vmatpush.bf16.xpose.msra.mxu0 0
      %1099 = vmatpush.bf16.xpose.msra.mxu0 0
      %1100 = vmatpush.bf16.xpose.msra.mxu0 %v1091
      %1101 = vmatmul.bf16.gmra.mxu0 %v1088
      %v1102 = vpop.f32.mrf.mxu0
      %v1103 = vadd.f32 0.0, %v1102
      %v1104 = vpop.f32.mrf.mxu0
      %v1105 = vadd.f32 0.0, %v1104
      %1106 = vdwg.mxu0
      %1107 = vrot.lane.b32.xlu0 %v952, 96
      %v1108 = vpop.permute.xlu0 %1107
      %1109 = vrot.lane.b32.xlu0 %v957, 96
      %v1110 = vpop.permute.xlu0 %1109
      %v1112 = vsel %vm927, %v1108, 0
      %v1115 = vsel %vm927, %v1110, 0
      %1117 = vmatpush.bf16.xpose.msra.mxu0 0
      %1118 = vmatpush.bf16.xpose.msra.mxu0 0
      %1119 = vmatpush.bf16.xpose.msra.mxu0 0
      %1120 = vmatpush.bf16.xpose.msra.mxu0 0
      %1121 = vmatpush.bf16.xpose.msra.mxu0 0
      %1122 = vmatpush.bf16.xpose.msra.mxu0 0
      %1123 = vmatpush.bf16.xpose.msra.mxu0 0
      %1124 = vmatpush.bf16.xpose.msra.mxu0 %v1115
      %1125 = vmatmul.bf16.gmra.mxu0 %v1112
      %v1126 = vpop.f32.mrf.mxu0
      %v1127 = vadd.f32 0.0, %v1126
      %v1128 = vpop.f32.mrf.mxu0
      %v1129 = vadd.f32 0.0, %v1128
      %1130 = vdwg.mxu0
      %v1131 = vsel %vm978, %v1103, -inf
      %1132 = vmax.xlane.f32.xlu0 %v1131
      %v1133 = vpop.xlane.xlu0 %1132
      %v1134 = vsel %vm978, %v1105, -inf
      %1135 = vmax.xlane.f32.xlu0 %v1134
      %v1136 = vpop.xlane.xlu0 %1135
      %v1137 = vsel %vm978, %v1127, -inf
      %1138 = vmax.xlane.f32.xlu0 %v1137
      %v1139 = vpop.xlane.xlu0 %1138
      %v1140 = vsel %vm978, %v1129, -inf
      %1141 = vmax.xlane.f32.xlu0 %v1140
      %v1142 = vpop.xlane.xlu0 %1141
      %v1143 = vsub.f32 %v1103, %v1133
      %v1144 = vsub.f32 %v1105, %v1136
      %v1145 = vsub.f32 %v1127, %v1139
      %v1146 = vsub.f32 %v1129, %v1142
      %v1147 = vmul.f32 %v1143, 1.442695
      %v1148 = vpow.pop %v1147
      %v1149 = vmul.f32 %v1144, 1.442695
      %v1150 = vpow.pop %v1149
      %v1151 = vmul.f32 %v1145, 1.442695
      %v1152 = vpow.pop %v1151
      %v1153 = vmul.f32 %v1146, 1.442695
      %v1154 = vpow.pop %v1153
      %v1155 = vsel %vm978, %v1148, 0.0
      %1156 = vadd.xlane.f32.xlu0 %v1155
      %v1157 = vpop.xlane.xlu0 %1156
      %v1158 = vsel %vm978, %v1150, 0.0
      %1159 = vadd.xlane.f32.xlu0 %v1158
      %v1160 = vpop.xlane.xlu0 %1159
      %v1161 = vsel %vm978, %v1152, 0.0
      %1162 = vadd.xlane.f32.xlu0 %v1161
      %v1163 = vpop.xlane.xlu0 %1162
      %v1164 = vsel %vm978, %v1154, 0.0
      %1165 = vadd.xlane.f32.xlu0 %v1164
      %v1166 = vpop.xlane.xlu0 %1165
      %v1167 = vrcp.pop %v1157
      %v1168 = vrcp.pop %v1160
      %v1169 = vrcp.pop %v1163
      %v1170 = vrcp.pop %v1166
      %v1171 = vmul.f32 %v1148, %v1167
      %v1172 = vmul.f32 %v1150, %v1168
      %v1173 = vmul.f32 %v1152, %v1169
      %v1174 = vmul.f32 %v1154, %v1170
      %v1175 = vpack.c.bf16 %v1171, %v1171
      %v1176 = vpack.c.bf16 %v1172, %v1172
      %v1177 = vpack.c.bf16 %v1173, %v1173
      %v1178 = vpack.c.bf16 %v1174, %v1174
      %v1181 = vunpack.c.l.b16 %v1175
      %v1182 = vunpack.c.l.b16 %v1176
      %v1183 = vpack.c.b16 %v1182, %v1181
      %1184 = vrot.lane.b32.xlu0 %v1036, 96
      %v1185 = vpop.permute.xlu0 %1184
      %v1188 = vsel %vm978, %v1183, 0
      %1190 = vmatpush.bf16.msra.mxu0 0
      %1191 = vmatpush.bf16.msra.mxu0 0
      %1192 = vmatpush.bf16.msra.mxu0 0
      %1193 = vmatpush.bf16.msra.mxu0 0
      %1194 = vmatpush.bf16.msra.mxu0 0
      %1195 = vmatpush.bf16.msra.mxu0 0
      %1196 = vmatpush.bf16.msra.mxu0 0
      %1197 = vmatpush.bf16.msra.mxu0 %v1185
      %1198 = vmatmul.bf16.gmra.mxu0 %v1188
      %v1199 = vpop.f32.mrf.mxu0
      %v1200 = vadd.f32 0.0, %v1199
      %v1201 = vpop.f32.mrf.mxu0
      %v1202 = vadd.f32 0.0, %v1201
      %1203 = vdwg.mxu0
      %v1206 = vunpack.c.l.b16 %v1177
      %v1207 = vunpack.c.l.b16 %v1178
      %v1208 = vpack.c.b16 %v1207, %v1206
      %1209 = vrot.lane.b32.xlu0 %v1064, 96
      %v1210 = vpop.permute.xlu0 %1209
      %v1213 = vsel %vm978, %v1208, 0
      %1215 = vmatpush.bf16.msra.mxu0 0
      %1216 = vmatpush.bf16.msra.mxu0 0
      %1217 = vmatpush.bf16.msra.mxu0 0
      %1218 = vmatpush.bf16.msra.mxu0 0
      %1219 = vmatpush.bf16.msra.mxu0 0
      %1220 = vmatpush.bf16.msra.mxu0 0
      %1221 = vmatpush.bf16.msra.mxu0 0
      %1222 = vmatpush.bf16.msra.mxu0 %v1210
      %1223 = vmatmul.bf16.gmra.mxu0 %v1213
      %v1224 = vpop.f32.mrf.mxu0
      %v1225 = vadd.f32 0.0, %v1224
      %v1226 = vpop.f32.mrf.mxu0
      %v1227 = vadd.f32 0.0, %v1226
      %1228 = vdwg.mxu0
      %1229 = vrot.lane.b32.xlu0 %v921, 64
      %v1230 = vpop.permute.xlu0 %1229
      %1231 = vrot.lane.b32.xlu0 %v926, 64
      %v1232 = vpop.permute.xlu0 %1231
      %v1234 = vsel %vm927, %v1230, 0
      %v1237 = vsel %vm927, %v1232, 0
      %1239 = vmatpush.bf16.xpose.msra.mxu0 0
      %1240 = vmatpush.bf16.xpose.msra.mxu0 0
      %1241 = vmatpush.bf16.xpose.msra.mxu0 0
      %1242 = vmatpush.bf16.xpose.msra.mxu0 0
      %1243 = vmatpush.bf16.xpose.msra.mxu0 0
      %1244 = vmatpush.bf16.xpose.msra.mxu0 0
      %1245 = vmatpush.bf16.xpose.msra.mxu0 0
      %1246 = vmatpush.bf16.xpose.msra.mxu0 %v1237
      %1247 = vmatmul.bf16.gmra.mxu0 %v1234
      %v1248 = vpop.f32.mrf.mxu0
      %v1249 = vadd.f32 0.0, %v1248
      %v1250 = vpop.f32.mrf.mxu0
      %v1251 = vadd.f32 0.0, %v1250
      %1252 = vdwg.mxu0
      %1253 = vrot.lane.b32.xlu0 %v952, 64
      %v1254 = vpop.permute.xlu0 %1253
      %1255 = vrot.lane.b32.xlu0 %v957, 64
      %v1256 = vpop.permute.xlu0 %1255
      %v1258 = vsel %vm927, %v1254, 0
      %v1261 = vsel %vm927, %v1256, 0
      %1263 = vmatpush.bf16.xpose.msra.mxu0 0
      %1264 = vmatpush.bf16.xpose.msra.mxu0 0
      %1265 = vmatpush.bf16.xpose.msra.mxu0 0
      %1266 = vmatpush.bf16.xpose.msra.mxu0 0
      %1267 = vmatpush.bf16.xpose.msra.mxu0 0
      %1268 = vmatpush.bf16.xpose.msra.mxu0 0
      %1269 = vmatpush.bf16.xpose.msra.mxu0 0
      %1270 = vmatpush.bf16.xpose.msra.mxu0 %v1261
      %1271 = vmatmul.bf16.gmra.mxu0 %v1258
      %v1272 = vpop.f32.mrf.mxu0
      %v1273 = vadd.f32 0.0, %v1272
      %v1274 = vpop.f32.mrf.mxu0
      %v1275 = vadd.f32 0.0, %v1274
      %1276 = vdwg.mxu0
      %v1277 = vsel %vm978, %v1249, -inf
      %1278 = vmax.xlane.f32.xlu0 %v1277
      %v1279 = vpop.xlane.xlu0 %1278
      %v1280 = vsel %vm978, %v1251, -inf
      %1281 = vmax.xlane.f32.xlu0 %v1280
      %v1282 = vpop.xlane.xlu0 %1281
      %v1283 = vsel %vm978, %v1273, -inf
      %1284 = vmax.xlane.f32.xlu0 %v1283
      %v1285 = vpop.xlane.xlu0 %1284
      %v1286 = vsel %vm978, %v1275, -inf
      %1287 = vmax.xlane.f32.xlu0 %v1286
      %v1288 = vpop.xlane.xlu0 %1287
      %v1289 = vsub.f32 %v1249, %v1279
      %v1290 = vsub.f32 %v1251, %v1282
      %v1291 = vsub.f32 %v1273, %v1285
      %v1292 = vsub.f32 %v1275, %v1288
      %v1293 = vmul.f32 %v1289, 1.442695
      %v1294 = vpow.pop %v1293
      %v1295 = vmul.f32 %v1290, 1.442695
      %v1296 = vpow.pop %v1295
      %v1297 = vmul.f32 %v1291, 1.442695
      %v1298 = vpow.pop %v1297
      %v1299 = vmul.f32 %v1292, 1.442695
      %v1300 = vpow.pop %v1299
      %v1301 = vsel %vm978, %v1294, 0.0
      %1302 = vadd.xlane.f32.xlu0 %v1301
      %v1303 = vpop.xlane.xlu0 %1302
      %v1304 = vsel %vm978, %v1296, 0.0
      %1305 = vadd.xlane.f32.xlu0 %v1304
      %v1306 = vpop.xlane.xlu0 %1305
      %v1307 = vsel %vm978, %v1298, 0.0
      %1308 = vadd.xlane.f32.xlu0 %v1307
      %v1309 = vpop.xlane.xlu0 %1308
      %v1310 = vsel %vm978, %v1300, 0.0
      %1311 = vadd.xlane.f32.xlu0 %v1310
      %v1312 = vpop.xlane.xlu0 %1311
      %v1313 = vrcp.pop %v1303
      %v1314 = vrcp.pop %v1306
      %v1315 = vrcp.pop %v1309
      %v1316 = vrcp.pop %v1312
      %v1317 = vmul.f32 %v1294, %v1313
      %v1318 = vmul.f32 %v1296, %v1314
      %v1319 = vmul.f32 %v1298, %v1315
      %v1320 = vmul.f32 %v1300, %v1316
      %v1321 = vpack.c.bf16 %v1317, %v1317
      %v1322 = vpack.c.bf16 %v1318, %v1318
      %v1323 = vpack.c.bf16 %v1319, %v1319
      %v1324 = vpack.c.bf16 %v1320, %v1320
      %v1327 = vunpack.c.l.b16 %v1321
      %v1328 = vunpack.c.l.b16 %v1322
      %v1329 = vpack.c.b16 %v1328, %v1327
      %1330 = vrot.lane.b32.xlu0 %v1036, 64
      %v1331 = vpop.permute.xlu0 %1330
      %v1334 = vsel %vm978, %v1329, 0
      %1336 = vmatpush.bf16.msra.mxu0 0
      %1337 = vmatpush.bf16.msra.mxu0 0
      %1338 = vmatpush.bf16.msra.mxu0 0
      %1339 = vmatpush.bf16.msra.mxu0 0
      %1340 = vmatpush.bf16.msra.mxu0 0
      %1341 = vmatpush.bf16.msra.mxu0 0
      %1342 = vmatpush.bf16.msra.mxu0 0
      %1343 = vmatpush.bf16.msra.mxu0 %v1331
      %1344 = vmatmul.bf16.gmra.mxu0 %v1334
      %v1345 = vpop.f32.mrf.mxu0
      %v1346 = vadd.f32 0.0, %v1345
      %v1347 = vpop.f32.mrf.mxu0
      %v1348 = vadd.f32 0.0, %v1347
      %1349 = vdwg.mxu0
      %v1352 = vunpack.c.l.b16 %v1323
      %v1353 = vunpack.c.l.b16 %v1324
      %v1354 = vpack.c.b16 %v1353, %v1352
      %1355 = vrot.lane.b32.xlu0 %v1064, 64
      %v1356 = vpop.permute.xlu0 %1355
      %v1359 = vsel %vm978, %v1354, 0
      %1361 = vmatpush.bf16.msra.mxu0 0
      %1362 = vmatpush.bf16.msra.mxu0 0
      %1363 = vmatpush.bf16.msra.mxu0 0
      %1364 = vmatpush.bf16.msra.mxu0 0
      %1365 = vmatpush.bf16.msra.mxu0 0
      %1366 = vmatpush.bf16.msra.mxu0 0
      %1367 = vmatpush.bf16.msra.mxu0 0
      %1368 = vmatpush.bf16.msra.mxu0 %v1356
      %1369 = vmatmul.bf16.gmra.mxu0 %v1359
      %v1370 = vpop.f32.mrf.mxu0
      %v1371 = vadd.f32 0.0, %v1370
      %v1372 = vpop.f32.mrf.mxu0
      %v1373 = vadd.f32 0.0, %v1372
      %1374 = vdwg.mxu0
      %1375 = vrot.lane.b32.xlu0 %v921, 32
      %v1376 = vpop.permute.xlu0 %1375
      %1377 = vrot.lane.b32.xlu0 %v926, 32
      %v1378 = vpop.permute.xlu0 %1377
      %v1380 = vsel %vm927, %v1376, 0
      %v1383 = vsel %vm927, %v1378, 0
      %1385 = vmatpush.bf16.xpose.msra.mxu0 0
      %1386 = vmatpush.bf16.xpose.msra.mxu0 0
      %1387 = vmatpush.bf16.xpose.msra.mxu0 0
      %1388 = vmatpush.bf16.xpose.msra.mxu0 0
      %1389 = vmatpush.bf16.xpose.msra.mxu0 0
      %1390 = vmatpush.bf16.xpose.msra.mxu0 0
      %1391 = vmatpush.bf16.xpose.msra.mxu0 0
      %1392 = vmatpush.bf16.xpose.msra.mxu0 %v1383
      %1393 = vmatmul.bf16.gmra.mxu0 %v1380
      %v1394 = vpop.f32.mrf.mxu0
      %v1395 = vadd.f32 0.0, %v1394
      %v1396 = vpop.f32.mrf.mxu0
      %v1397 = vadd.f32 0.0, %v1396
      %1398 = vdwg.mxu0
      %1399 = vrot.lane.b32.xlu0 %v952, 32
      %v1400 = vpop.permute.xlu0 %1399
      %1401 = vrot.lane.b32.xlu0 %v957, 32
      %v1402 = vpop.permute.xlu0 %1401
      %v1404 = vsel %vm927, %v1400, 0
      %v1407 = vsel %vm927, %v1402, 0
      %1409 = vmatpush.bf16.xpose.msra.mxu0 0
      %1410 = vmatpush.bf16.xpose.msra.mxu0 0
      %1411 = vmatpush.bf16.xpose.msra.mxu0 0
      %1412 = vmatpush.bf16.xpose.msra.mxu0 0
      %1413 = vmatpush.bf16.xpose.msra.mxu0 0
      %1414 = vmatpush.bf16.xpose.msra.mxu0 0
      %1415 = vmatpush.bf16.xpose.msra.mxu0 0
      %1416 = vmatpush.bf16.xpose.msra.mxu0 %v1407
      %1417 = vmatmul.bf16.gmra.mxu0 %v1404
      %v1418 = vpop.f32.mrf.mxu0
      %v1419 = vadd.f32 0.0, %v1418
      %v1420 = vpop.f32.mrf.mxu0
      %v1421 = vadd.f32 0.0, %v1420
      %1422 = vdwg.mxu0
      %v1423 = vsel %vm978, %v1395, -inf
      %1424 = vmax.xlane.f32.xlu0 %v1423
      %v1425 = vpop.xlane.xlu0 %1424
      %v1426 = vsel %vm978, %v1397, -inf
      %1427 = vmax.xlane.f32.xlu0 %v1426
      %v1428 = vpop.xlane.xlu0 %1427
      %v1429 = vsel %vm978, %v1419, -inf
      %1430 = vmax.xlane.f32.xlu0 %v1429
      %v1431 = vpop.xlane.xlu0 %1430
      %v1432 = vsel %vm978, %v1421, -inf
      %1433 = vmax.xlane.f32.xlu0 %v1432
      %v1434 = vpop.xlane.xlu0 %1433
      %v1435 = vsub.f32 %v1395, %v1425
      %v1436 = vsub.f32 %v1397, %v1428
      %v1437 = vsub.f32 %v1419, %v1431
      %v1438 = vsub.f32 %v1421, %v1434
      %v1439 = vmul.f32 %v1435, 1.442695
      %v1440 = vpow.pop %v1439
      %v1441 = vmul.f32 %v1436, 1.442695
      %v1442 = vpow.pop %v1441
      %v1443 = vmul.f32 %v1437, 1.442695
      %v1444 = vpow.pop %v1443
      %v1445 = vmul.f32 %v1438, 1.442695
      %v1446 = vpow.pop %v1445
      %v1447 = vsel %vm978, %v1440, 0.0
      %1448 = vadd.xlane.f32.xlu0 %v1447
      %v1449 = vpop.xlane.xlu0 %1448
      %v1450 = vsel %vm978, %v1442, 0.0
      %1451 = vadd.xlane.f32.xlu0 %v1450
      %v1452 = vpop.xlane.xlu0 %1451
      %v1453 = vsel %vm978, %v1444, 0.0
      %1454 = vadd.xlane.f32.xlu0 %v1453
      %v1455 = vpop.xlane.xlu0 %1454
      %v1456 = vsel %vm978, %v1446, 0.0
      %1457 = vadd.xlane.f32.xlu0 %v1456
      %v1458 = vpop.xlane.xlu0 %1457
      %v1459 = vrcp.pop %v1449
      %v1460 = vrcp.pop %v1452
      %v1461 = vrcp.pop %v1455
      %v1462 = vrcp.pop %v1458
      %v1463 = vmul.f32 %v1440, %v1459
      %v1464 = vmul.f32 %v1442, %v1460
      %v1465 = vmul.f32 %v1444, %v1461
      %v1466 = vmul.f32 %v1446, %v1462
      %v1467 = vpack.c.bf16 %v1463, %v1463
      %v1468 = vpack.c.bf16 %v1464, %v1464
      %v1469 = vpack.c.bf16 %v1465, %v1465
      %v1470 = vpack.c.bf16 %v1466, %v1466
      %v1473 = vunpack.c.l.b16 %v1467
      %v1474 = vunpack.c.l.b16 %v1468
      %v1475 = vpack.c.b16 %v1474, %v1473
      %1476 = vrot.lane.b32.xlu0 %v1036, 32
      %v1477 = vpop.permute.xlu0 %1476
      %v1480 = vsel %vm978, %v1475, 0
      %1482 = vmatpush.bf16.msra.mxu0 0
      %1483 = vmatpush.bf16.msra.mxu0 0
      %1484 = vmatpush.bf16.msra.mxu0 0
      %1485 = vmatpush.bf16.msra.mxu0 0
      %1486 = vmatpush.bf16.msra.mxu0 0
      %1487 = vmatpush.bf16.msra.mxu0 0
      %1488 = vmatpush.bf16.msra.mxu0 0
      %1489 = vmatpush.bf16.msra.mxu0 %v1477
      %1490 = vmatmul.bf16.gmra.mxu0 %v1480
      %v1491 = vpop.f32.mrf.mxu0
      %v1492 = vadd.f32 0.0, %v1491
      %v1493 = vpop.f32.mrf.mxu0
      %v1494 = vadd.f32 0.0, %v1493
      %1495 = vdwg.mxu0
      %v1498 = vunpack.c.l.b16 %v1469
      %v1499 = vunpack.c.l.b16 %v1470
      %v1500 = vpack.c.b16 %v1499, %v1498
      %1501 = vrot.lane.b32.xlu0 %v1064, 32
      %v1502 = vpop.permute.xlu0 %1501
      %v1505 = vsel %vm978, %v1500, 0
      %1507 = vmatpush.bf16.msra.mxu0 0
      %1508 = vmatpush.bf16.msra.mxu0 0
      %1509 = vmatpush.bf16.msra.mxu0 0
      %1510 = vmatpush.bf16.msra.mxu0 0
      %1511 = vmatpush.bf16.msra.mxu0 0
      %1512 = vmatpush.bf16.msra.mxu0 0
      %1513 = vmatpush.bf16.msra.mxu0 0
      %1514 = vmatpush.bf16.msra.mxu0 %v1502
      %1515 = vmatmul.bf16.gmra.mxu0 %v1505
      %v1516 = vpop.f32.mrf.mxu0
      %v1517 = vadd.f32 0.0, %v1516
      %v1518 = vpop.f32.mrf.mxu0
      %v1519 = vadd.f32 0.0, %v1518
      %1520 = vdwg.mxu0
      %1525 = vrot.lane.b32.xlu0 %v1200, 32
      %v1526 = vpop.permute.xlu0 %1525
      %1527 = vrot.lane.b32.xlu0 %v1202, 32
      %v1528 = vpop.permute.xlu0 %1527
      %1529 = vrot.lane.b32.xlu0 %v1225, 32
      %v1530 = vpop.permute.xlu0 %1529
      %1531 = vrot.lane.b32.xlu0 %v1227, 32
      %v1532 = vpop.permute.xlu0 %1531
      %1541 = vrot.lane.b32.xlu0 %v1346, 64
      %v1542 = vpop.permute.xlu0 %1541
      %1543 = vrot.lane.b32.xlu0 %v1348, 64
      %v1544 = vpop.permute.xlu0 %1543
      %1545 = vrot.lane.b32.xlu0 %v1371, 64
      %v1546 = vpop.permute.xlu0 %1545
      %1547 = vrot.lane.b32.xlu0 %v1373, 64
      %v1548 = vpop.permute.xlu0 %1547
      %1557 = vrot.lane.b32.xlu0 %v1492, 96
      %v1558 = vpop.permute.xlu0 %1557
      %1559 = vrot.lane.b32.xlu0 %v1494, 96
      %v1560 = vpop.permute.xlu0 %1559
      %1561 = vrot.lane.b32.xlu0 %v1517, 96
      %v1562 = vpop.permute.xlu0 %1561
      %1563 = vrot.lane.b32.xlu0 %v1519, 96
      %v1564 = vpop.permute.xlu0 %1563
      %v1569 = vsel %vm927, %v1051, %v1526
      %v1570 = vsel %vm927, %v1053, %v1528
      %v1571 = vsel %vm927, %v1079, %v1530
      %v1572 = vsel %vm927, %v1081, %v1532
      %vm1573 = vcmask 523264
      %v1574 = vsel %vm1573, %v1569, %v1542
      %v1575 = vsel %vm1573, %v1570, %v1544
      %v1576 = vsel %vm1573, %v1571, %v1546
      %v1577 = vsel %vm1573, %v1572, %v1548
      %vm1578 = vcmask 785408
      %v1579 = vsel %vm1578, %v1574, %v1558
      %v1580 = vsel %vm1578, %v1575, %v1560
      %v1581 = vsel %vm1578, %v1576, %v1562
      %v1582 = vsel %vm1578, %v1577, %v1564
      %v1583 = vpack.c.bf16 %v1580, %v1579
      %v1584 = vpack.c.bf16 %v1582, %v1581
      %v1585 = vld [vmem:[%s530] sm:$0xf]
      %v1586 = vld [vmem:[%s530 + $0x4] sm:$0xf]
      %v1587 = vld [vmem:[%s530 + $0x8] sm:$0xf]
      %v1588 = vld [vmem:[%s530 + $0xc] sm:$0xf]
      %v1589 = vld [vmem:[%s530 + $0x10] sm:$0xf]
      %v1590 = vld [vmem:[%s530 + $0x14] sm:$0xf]
      %v1591 = vld [vmem:[%s530 + $0x18] sm:$0xf]
      %v1592 = vld [vmem:[%s530 + $0x1c] sm:$0xf]
      %v1593 = vld [vmem:[%s530 + $0x20] sm:$0xf]
      %v1594 = vld [vmem:[%s530 + $0x24] sm:$0xf]
      %v1595 = vld [vmem:[%s530 + $0x28] sm:$0xf]
      %v1596 = vld [vmem:[%s530 + $0x2c] sm:$0xf]
      %v1597 = vld [vmem:[%s530 + $0x30] sm:$0xf]
      %v1598 = vld [vmem:[%s530 + $0x34] sm:$0xf]
      %v1599 = vld [vmem:[%s530 + $0x38] sm:$0xf]
      %v1600 = vld [vmem:[%s530 + $0x3c] sm:$0xf]
      %v1601 = vld [vmem:[%s533] sm:$0x1]
      %v1603 = vperm.slane %v1601, 0
      %v1621 = vunpack.c.l.b16 %v1585
      %v1622 = vunpack.c.l.b16 %v1586
      %v1623 = vunpack.c.l.b16 %v1587
      %v1624 = vunpack.c.l.b16 %v1588
      %v1625 = vunpack.c.l.b16 %v1589
      %v1626 = vunpack.c.l.b16 %v1590
      %v1627 = vunpack.c.l.b16 %v1591
      %v1628 = vunpack.c.l.b16 %v1592
      %v1629 = vunpack.c.l.b16 %v1593
      %v1630 = vunpack.c.l.b16 %v1594
      %v1631 = vunpack.c.l.b16 %v1595
      %v1632 = vunpack.c.l.b16 %v1596
      %v1633 = vunpack.c.l.b16 %v1597
      %v1634 = vunpack.c.l.b16 %v1598
      %v1635 = vunpack.c.l.b16 %v1599
      %v1636 = vunpack.c.l.b16 %v1600
      %v1637 = vpack.c.b16 %v1622, %v1621
      %v1638 = vpack.c.b16 %v1624, %v1623
      %v1639 = vpack.c.b16 %v1626, %v1625
      %v1640 = vpack.c.b16 %v1628, %v1627
      %v1641 = vpack.c.b16 %v1630, %v1629
      %v1642 = vpack.c.b16 %v1632, %v1631
      %v1643 = vpack.c.b16 %v1634, %v1633
      %v1644 = vpack.c.b16 %v1636, %v1635
      %1653 = vmatpush.bf16.msra.mxu0 %v1644
      %1654 = vmatpush.bf16.msra.mxu0 %v1643
      %1655 = vmatpush.bf16.msra.mxu0 %v1642
      %1656 = vmatpush.bf16.msra.mxu0 %v1641
      %1657 = vmatpush.bf16.msra.mxu0 %v1640
      %1658 = vmatpush.bf16.msra.mxu0 %v1639
      %1659 = vmatpush.bf16.msra.mxu0 %v1638
      %1660 = vmatpush.bf16.msra.mxu0 %v1637
      %1661 = vmatmul.bf16.gmra.mxu0 %v1583
      %v1662 = vpop.f32.mrf.mxu0
      %v1663 = vadd.f32 %v1603, %v1662
      %v1664 = vpop.f32.mrf.mxu0
      %v1665 = vadd.f32 %v1603, %v1664
      %1666 = vmatmul.bf16.gmra.mxu0 %v1584
      %v1667 = vpop.f32.mrf.mxu0
      %v1668 = vadd.f32 %v1603, %v1667
      %v1669 = vpop.f32.mrf.mxu0
      %v1670 = vadd.f32 %v1603, %v1669
      %1671 = vdwg.mxu0
      %v1672 = vperm.slane %v575, 2
      %v1673 = vperm.slane %v576, 2
      %v1674 = vmul.f32 %v1672, %v1663
      %v1675 = vmul.f32 %v1672, %v1665
      %v1676 = vmul.f32 %v1673, %v1668
      %v1677 = vmul.f32 %v1673, %v1670
      %v1678 = vadd.f32 %v571, %v1674
      %v1679 = vadd.f32 %v572, %v1675
      %v1680 = vadd.f32 %v573, %v1676
      %v1681 = vadd.f32 %v574, %v1677
      %1682 = vadd.xlane.f32.xlu0 %v1678
      %v1683 = vpop.xlane.xlu0 %1682
      %1684 = vadd.xlane.f32.xlu0 %v1679
      %v1685 = vpop.xlane.xlu0 %1684
      %1686 = vadd.xlane.f32.xlu0 %v1680
      %v1687 = vpop.xlane.xlu0 %1686
      %1688 = vadd.xlane.f32.xlu0 %v1681
      %v1689 = vpop.xlane.xlu0 %1688
      %v1690 = vmul.f32 %v1683, %v591
      %v1691 = vmul.f32 %v1685, %v591
      %v1692 = vmul.f32 %v1687, %v591
      %v1693 = vmul.f32 %v1689, %v591
      %v1694 = vsub.f32 %v1678, %v1690
      %v1695 = vsub.f32 %v1679, %v1691
      %v1696 = vsub.f32 %v1680, %v1692
      %v1697 = vsub.f32 %v1681, %v1693
      %v1698 = vmul.f32 %v1694, %v1694
      %v1699 = vmul.f32 %v1695, %v1695
      %v1700 = vmul.f32 %v1696, %v1696
      %v1701 = vmul.f32 %v1697, %v1697
      %1702 = vadd.xlane.f32.xlu0 %v1698
      %v1703 = vpop.xlane.xlu0 %1702
      %1704 = vadd.xlane.f32.xlu0 %v1699
      %v1705 = vpop.xlane.xlu0 %1704
      %1706 = vadd.xlane.f32.xlu0 %v1700
      %v1707 = vpop.xlane.xlu0 %1706
      %1708 = vadd.xlane.f32.xlu0 %v1701
      %v1709 = vpop.xlane.xlu0 %1708
      %v1710 = vmul.f32 %v1703, %v591
      %v1711 = vmul.f32 %v1705, %v591
      %v1712 = vmul.f32 %v1707, %v591
      %v1713 = vmul.f32 %v1709, %v591
      %v1714 = vadd.f32 %v1710, 1e-06
      %v1715 = vadd.f32 %v1711, 1e-06
      %v1716 = vadd.f32 %v1712, 1e-06
      %v1717 = vadd.f32 %v1713, 1e-06
      %v1718 = vrsqrt.pop %v1714
      %v1719 = vmul.f32 %v1718, %v1714
      %v1720 = vmul.f32 %v1719, %v1718
      %v1721 = vmul.f32 0.5, %v1720
      %v1722 = vsub.f32 1.5, %v1721
      %v1723 = vmul.f32 %v1718, %v1722
      %vm1724 = vweird.f32 %v1714
      %vm1725 = vweird.f32 %v1718
      %vm1726 = vmor %vm1724, %vm1725
      %v1727 = vsel %vm1726, %v1718, %v1723
      %v1728 = vrsqrt.pop %v1715
      %v1729 = vmul.f32 %v1728, %v1715
      %v1730 = vmul.f32 %v1729, %v1728
      %v1731 = vmul.f32 0.5, %v1730
      %v1732 = vsub.f32 1.5, %v1731
      %v1733 = vmul.f32 %v1728, %v1732
      %vm1734 = vweird.f32 %v1715
      %vm1735 = vweird.f32 %v1728
      %vm1736 = vmor %vm1734, %vm1735
      %v1737 = vsel %vm1736, %v1728, %v1733
      %v1738 = vrsqrt.pop %v1716
      %v1739 = vmul.f32 %v1738, %v1716
      %v1740 = vmul.f32 %v1739, %v1738
      %v1741 = vmul.f32 0.5, %v1740
      %v1742 = vsub.f32 1.5, %v1741
      %v1743 = vmul.f32 %v1738, %v1742
      %vm1744 = vweird.f32 %v1716
      %vm1745 = vweird.f32 %v1738
      %vm1746 = vmor %vm1744, %vm1745
      %v1747 = vsel %vm1746, %v1738, %v1743
      %v1748 = vrsqrt.pop %v1717
      %v1749 = vmul.f32 %v1748, %v1717
      %v1750 = vmul.f32 %v1749, %v1748
      %v1751 = vmul.f32 0.5, %v1750
      %v1752 = vsub.f32 1.5, %v1751
      %v1753 = vmul.f32 %v1748, %v1752
      %vm1754 = vweird.f32 %v1717
      %vm1755 = vweird.f32 %v1748
      %vm1756 = vmor %vm1754, %vm1755
      %v1757 = vsel %vm1756, %v1748, %v1753
      %v1758 = vmul.f32 %v1694, %v1727
      %v1759 = vmul.f32 %v1695, %v1737
      %v1760 = vmul.f32 %v1696, %v1747
      %v1761 = vmul.f32 %v1697, %v1757
      %v1762 = vperm.slane %v664, 4
      %v1763 = vperm.slane %v665, 4
      %v1764 = vmul.f32 %v1758, %v1762
      %v1765 = vmul.f32 %v1759, %v1762
      %v1766 = vmul.f32 %v1760, %v1763
      %v1767 = vmul.f32 %v1761, %v1763
      %v1768 = vperm.slane %v575, 3
      %v1769 = vperm.slane %v576, 3
      %v1770 = vadd.f32 %v1764, %v1768
      %v1771 = vadd.f32 %v1765, %v1768
      %v1772 = vadd.f32 %v1766, %v1769
      %v1773 = vadd.f32 %v1767, %v1769
      %v1774 = vpack.c.bf16 %v1771, %v1770
      %v1775 = vpack.c.bf16 %v1773, %v1772
      %v1776 = vld [vmem:[%s538] sm:$0xff]
      %v1777 = vld [vmem:[%s538 + $0x8] sm:$0xff]
      %v1778 = vld [vmem:[%s538 + $0x10] sm:$0xff]
      %v1779 = vld [vmem:[%s538 + $0x18] sm:$0xff]
      %v1780 = vld [vmem:[%s538 + $0x20] sm:$0xff]
      %v1781 = vld [vmem:[%s538 + $0x28] sm:$0xff]
      %v1782 = vld [vmem:[%s538 + $0x30] sm:$0xff]
      %v1783 = vld [vmem:[%s538 + $0x38] sm:$0xff]
      %v1784 = vld [vmem:[%s538 + $0x40] sm:$0xff]
      %v1785 = vld [vmem:[%s538 + $0x48] sm:$0xff]
      %v1786 = vld [vmem:[%s538 + $0x50] sm:$0xff]
      %v1787 = vld [vmem:[%s538 + $0x58] sm:$0xff]
      %v1788 = vld [vmem:[%s538 + $0x60] sm:$0xff]
      %v1789 = vld [vmem:[%s538 + $0x68] sm:$0xff]
      %v1790 = vld [vmem:[%s538 + $0x70] sm:$0xff]
      %v1791 = vld [vmem:[%s538 + $0x78] sm:$0xff]
      %v1792 = vld [vmem:[%s538 + $0x80] sm:$0xff]
      %v1793 = vld [vmem:[%s538 + $0x88] sm:$0xff]
      %v1794 = vld [vmem:[%s538 + $0x90] sm:$0xff]
      %v1795 = vld [vmem:[%s538 + $0x98] sm:$0xff]
      %v1796 = vld [vmem:[%s538 + $0xa0] sm:$0xff]
      %v1797 = vld [vmem:[%s538 + $0xa8] sm:$0xff]
      %v1798 = vld [vmem:[%s538 + $0xb0] sm:$0xff]
      %v1799 = vld [vmem:[%s538 + $0xb8] sm:$0xff]
      %v1800 = vld [vmem:[%s538 + $0xc0] sm:$0xff]
      %v1801 = vld [vmem:[%s538 + $0xc8] sm:$0xff]
      %v1802 = vld [vmem:[%s538 + $0xd0] sm:$0xff]
      %v1803 = vld [vmem:[%s538 + $0xd8] sm:$0xff]
      %v1804 = vld [vmem:[%s538 + $0xe0] sm:$0xff]
      %v1805 = vld [vmem:[%s538 + $0xe8] sm:$0xff]
      %v1806 = vld [vmem:[%s538 + $0xf0] sm:$0xff]
      %v1807 = vld [vmem:[%s538 + $0xf8] sm:$0xff]
      %v1808 = vld [vmem:[%s542] sm:$0xf]
      %v1810 = vperm.slane %v1808, 0
      %v1811 = vperm.slane %v1808, 1
      %v1812 = vperm.slane %v1808, 2
      %v1813 = vperm.slane %v1808, 3
      %v1850 = vunpack.c.l.b16 %v1776
      %v1851 = vunpack.c.h.b16 %v1776
      %v1852 = vunpack.c.l.b16 %v1777
      %v1853 = vunpack.c.h.b16 %v1777
      %v1854 = vunpack.c.l.b16 %v1778
      %v1855 = vunpack.c.h.b16 %v1778
      %v1856 = vunpack.c.l.b16 %v1779
      %v1857 = vunpack.c.h.b16 %v1779
      %v1858 = vunpack.c.l.b16 %v1780
      %v1859 = vunpack.c.h.b16 %v1780
      %v1860 = vunpack.c.l.b16 %v1781
      %v1861 = vunpack.c.h.b16 %v1781
      %v1862 = vunpack.c.l.b16 %v1782
      %v1863 = vunpack.c.h.b16 %v1782
      %v1864 = vunpack.c.l.b16 %v1783
      %v1865 = vunpack.c.h.b16 %v1783
      %v1866 = vunpack.c.l.b16 %v1784
      %v1867 = vunpack.c.h.b16 %v1784
      %v1868 = vunpack.c.l.b16 %v1785
      %v1869 = vunpack.c.h.b16 %v1785
      %v1870 = vunpack.c.l.b16 %v1786
      %v1871 = vunpack.c.h.b16 %v1786
      %v1872 = vunpack.c.l.b16 %v1787
      %v1873 = vunpack.c.h.b16 %v1787
      %v1874 = vunpack.c.l.b16 %v1788
      %v1875 = vunpack.c.h.b16 %v1788
      %v1876 = vunpack.c.l.b16 %v1789
      %v1877 = vunpack.c.h.b16 %v1789
      %v1878 = vunpack.c.l.b16 %v1790
      %v1879 = vunpack.c.h.b16 %v1790
      %v1880 = vunpack.c.l.b16 %v1791
      %v1881 = vunpack.c.h.b16 %v1791
      %v1882 = vunpack.c.l.b16 %v1792
      %v1883 = vunpack.c.h.b16 %v1792
      %v1884 = vunpack.c.l.b16 %v1793
      %v1885 = vunpack.c.h.b16 %v1793
      %v1886 = vunpack.c.l.b16 %v1794
      %v1887 = vunpack.c.h.b16 %v1794
      %v1888 = vunpack.c.l.b16 %v1795
      %v1889 = vunpack.c.h.b16 %v1795
      %v1890 = vunpack.c.l.b16 %v1796
      %v1891 = vunpack.c.h.b16 %v1796
      %v1892 = vunpack.c.l.b16 %v1797
      %v1893 = vunpack.c.h.b16 %v1797
      %v1894 = vunpack.c.l.b16 %v1798
      %v1895 = vunpack.c.h.b16 %v1798
      %v1896 = vunpack.c.l.b16 %v1799
      %v1897 = vunpack.c.h.b16 %v1799
      %v1898 = vunpack.c.l.b16 %v1800
      %v1899 = vunpack.c.h.b16 %v1800
      %v1900 = vunpack.c.l.b16 %v1801
      %v1901 = vunpack.c.h.b16 %v1801
      %v1902 = vunpack.c.l.b16 %v1802
      %v1903 = vunpack.c.h.b16 %v1802
      %v1904 = vunpack.c.l.b16 %v1803
      %v1905 = vunpack.c.h.b16 %v1803
      %v1906 = vunpack.c.l.b16 %v1804
      %v1907 = vunpack.c.h.b16 %v1804
      %v1908 = vunpack.c.l.b16 %v1805
      %v1909 = vunpack.c.h.b16 %v1805
      %v1910 = vunpack.c.l.b16 %v1806
      %v1911 = vunpack.c.h.b16 %v1806
      %v1912 = vunpack.c.l.b16 %v1807
      %v1913 = vunpack.c.h.b16 %v1807
      %v1914 = vpack.c.b16 %v1854, %v1850
      %v1915 = vpack.c.b16 %v1855, %v1851
      %v1916 = vpack.c.b16 %v1856, %v1852
      %v1917 = vpack.c.b16 %v1857, %v1853
      %v1918 = vpack.c.b16 %v1862, %v1858
      %v1919 = vpack.c.b16 %v1863, %v1859
      %v1920 = vpack.c.b16 %v1864, %v1860
      %v1921 = vpack.c.b16 %v1865, %v1861
      %v1922 = vpack.c.b16 %v1870, %v1866
      %v1923 = vpack.c.b16 %v1871, %v1867
      %v1924 = vpack.c.b16 %v1872, %v1868
      %v1925 = vpack.c.b16 %v1873, %v1869
      %v1926 = vpack.c.b16 %v1878, %v1874
      %v1927 = vpack.c.b16 %v1879, %v1875
      %v1928 = vpack.c.b16 %v1880, %v1876
      %v1929 = vpack.c.b16 %v1881, %v1877
      %v1930 = vpack.c.b16 %v1886, %v1882
      %v1931 = vpack.c.b16 %v1887, %v1883
      %v1932 = vpack.c.b16 %v1888, %v1884
      %v1933 = vpack.c.b16 %v1889, %v1885
      %v1934 = vpack.c.b16 %v1894, %v1890
      %v1935 = vpack.c.b16 %v1895, %v1891
      %v1936 = vpack.c.b16 %v1896, %v1892
      %v1937 = vpack.c.b16 %v1897, %v1893
      %v1938 = vpack.c.b16 %v1902, %v1898
      %v1939 = vpack.c.b16 %v1903, %v1899
      %v1940 = vpack.c.b16 %v1904, %v1900
      %v1941 = vpack.c.b16 %v1905, %v1901
      %v1942 = vpack.c.b16 %v1910, %v1906
      %v1943 = vpack.c.b16 %v1911, %v1907
      %v1944 = vpack.c.b16 %v1912, %v1908
      %v1945 = vpack.c.b16 %v1913, %v1909
      %1978 = vmatpush.bf16.msra.mxu0 %v1942
      %1979 = vmatpush.bf16.msra.mxu0 %v1938
      %1980 = vmatpush.bf16.msra.mxu0 %v1934
      %1981 = vmatpush.bf16.msra.mxu0 %v1930
      %1982 = vmatpush.bf16.msra.mxu0 %v1926
      %1983 = vmatpush.bf16.msra.mxu0 %v1922
      %1984 = vmatpush.bf16.msra.mxu0 %v1918
      %1985 = vmatpush.bf16.msra.mxu0 %v1914
      %1986 = vmatmul.bf16.gmra.mxu0 %v1774
      %v1987 = vpop.f32.mrf.mxu0
      %v1988 = vadd.f32 %v1810, %v1987
      %v1989 = vpop.f32.mrf.mxu0
      %v1990 = vadd.f32 %v1810, %v1989
      %1991 = vmatmul.bf16.gmra.mxu0 %v1775
      %v1992 = vpop.f32.mrf.mxu0
      %v1993 = vadd.f32 %v1810, %v1992
      %v1994 = vpop.f32.mrf.mxu0
      %v1995 = vadd.f32 %v1810, %v1994
      %1996 = vdwg.mxu0
      %1997 = vmatpush.bf16.msra.mxu0 %v1943
      %1998 = vmatpush.bf16.msra.mxu0 %v1939
      %1999 = vmatpush.bf16.msra.mxu0 %v1935
      %2000 = vmatpush.bf16.msra.mxu0 %v1931
      %2001 = vmatpush.bf16.msra.mxu0 %v1927
      %2002 = vmatpush.bf16.msra.mxu0 %v1923
      %2003 = vmatpush.bf16.msra.mxu0 %v1919
      %2004 = vmatpush.bf16.msra.mxu0 %v1915
      %2005 = vmatmul.bf16.gmra.mxu0 %v1774
      %v2006 = vpop.f32.mrf.mxu0
      %v2007 = vadd.f32 %v1811, %v2006
      %v2008 = vpop.f32.mrf.mxu0
      %v2009 = vadd.f32 %v1811, %v2008
      %2010 = vmatmul.bf16.gmra.mxu0 %v1775
      %v2011 = vpop.f32.mrf.mxu0
      %v2012 = vadd.f32 %v1811, %v2011
      %v2013 = vpop.f32.mrf.mxu0
      %v2014 = vadd.f32 %v1811, %v2013
      %2015 = vdwg.mxu0
      %2016 = vmatpush.bf16.msra.mxu0 %v1944
      %2017 = vmatpush.bf16.msra.mxu0 %v1940
      %2018 = vmatpush.bf16.msra.mxu0 %v1936
      %2019 = vmatpush.bf16.msra.mxu0 %v1932
      %2020 = vmatpush.bf16.msra.mxu0 %v1928
      %2021 = vmatpush.bf16.msra.mxu0 %v1924
      %2022 = vmatpush.bf16.msra.mxu0 %v1920
      %2023 = vmatpush.bf16.msra.mxu0 %v1916
      %2024 = vmatmul.bf16.gmra.mxu0 %v1774
      %v2025 = vpop.f32.mrf.mxu0
      %v2026 = vadd.f32 %v1812, %v2025
      %v2027 = vpop.f32.mrf.mxu0
      %v2028 = vadd.f32 %v1812, %v2027
      %2029 = vmatmul.bf16.gmra.mxu0 %v1775
      %v2030 = vpop.f32.mrf.mxu0
      %v2031 = vadd.f32 %v1812, %v2030
      %v2032 = vpop.f32.mrf.mxu0
      %v2033 = vadd.f32 %v1812, %v2032
      %2034 = vdwg.mxu0
      %2035 = vmatpush.bf16.msra.mxu0 %v1945
      %2036 = vmatpush.bf16.msra.mxu0 %v1941
      %2037 = vmatpush.bf16.msra.mxu0 %v1937
      %2038 = vmatpush.bf16.msra.mxu0 %v1933
      %2039 = vmatpush.bf16.msra.mxu0 %v1929
      %2040 = vmatpush.bf16.msra.mxu0 %v1925
      %2041 = vmatpush.bf16.msra.mxu0 %v1921
      %2042 = vmatpush.bf16.msra.mxu0 %v1917
      %2043 = vmatmul.bf16.gmra.mxu0 %v1774
      %v2044 = vpop.f32.mrf.mxu0
      %v2045 = vadd.f32 %v1813, %v2044
      %v2046 = vpop.f32.mrf.mxu0
      %v2047 = vadd.f32 %v1813, %v2046
      %2048 = vmatmul.bf16.gmra.mxu0 %v1775
      %v2049 = vpop.f32.mrf.mxu0
      %v2050 = vadd.f32 %v1813, %v2049
      %v2051 = vpop.f32.mrf.mxu0
      %v2052 = vadd.f32 %v1813, %v2051
      %2053 = vdwg.mxu0
      %v2054 = vmul.f32 %v1988, 0.5
      %v2055 = vmul.f32 %v2007, 0.5
      %v2056 = vmul.f32 %v2026, 0.5
      %v2057 = vmul.f32 %v2045, 0.5
      %v2058 = vmul.f32 %v1990, 0.5
      %v2059 = vmul.f32 %v2009, 0.5
      %v2060 = vmul.f32 %v2028, 0.5
      %v2061 = vmul.f32 %v2047, 0.5
      %v2062 = vmul.f32 %v1993, 0.5
      %v2063 = vmul.f32 %v2012, 0.5
      %v2064 = vmul.f32 %v2031, 0.5
      %v2065 = vmul.f32 %v2050, 0.5
      %v2066 = vmul.f32 %v1995, 0.5
      %v2067 = vmul.f32 %v2014, 0.5
      %v2068 = vmul.f32 %v2033, 0.5
      %v2069 = vmul.f32 %v2052, 0.5
      %v2070 = vmul.f32 %v1988, 0.044715
      %v2071 = vmul.f32 %v2007, 0.044715
      %v2072 = vmul.f32 %v2026, 0.044715
      %v2073 = vmul.f32 %v2045, 0.044715
      %v2074 = vmul.f32 %v1990, 0.044715
      %v2075 = vmul.f32 %v2009, 0.044715
      %v2076 = vmul.f32 %v2028, 0.044715
      %v2077 = vmul.f32 %v2047, 0.044715
      %v2078 = vmul.f32 %v1993, 0.044715
      %v2079 = vmul.f32 %v2012, 0.044715
      %v2080 = vmul.f32 %v2031, 0.044715
      %v2081 = vmul.f32 %v2050, 0.044715
      %v2082 = vmul.f32 %v1995, 0.044715
      %v2083 = vmul.f32 %v2014, 0.044715
      %v2084 = vmul.f32 %v2033, 0.044715
      %v2085 = vmul.f32 %v2052, 0.044715
      %v2086 = vmul.f32 %v2070, %v1988
      %v2087 = vmul.f32 %v2071, %v2007
      %v2088 = vmul.f32 %v2072, %v2026
      %v2089 = vmul.f32 %v2073, %v2045
      %v2090 = vmul.f32 %v2074, %v1990
      %v2091 = vmul.f32 %v2075, %v2009
      %v2092 = vmul.f32 %v2076, %v2028
      %v2093 = vmul.f32 %v2077, %v2047
      %v2094 = vmul.f32 %v2078, %v1993
      %v2095 = vmul.f32 %v2079, %v2012
      %v2096 = vmul.f32 %v2080, %v2031
      %v2097 = vmul.f32 %v2081, %v2050
      %v2098 = vmul.f32 %v2082, %v1995
      %v2099 = vmul.f32 %v2083, %v2014
      %v2100 = vmul.f32 %v2084, %v2033
      %v2101 = vmul.f32 %v2085, %v2052
      %v2102 = vmul.f32 %v2086, %v1988
      %v2103 = vmul.f32 %v2087, %v2007
      %v2104 = vmul.f32 %v2088, %v2026
      %v2105 = vmul.f32 %v2089, %v2045
      %v2106 = vmul.f32 %v2090, %v1990
      %v2107 = vmul.f32 %v2091, %v2009
      %v2108 = vmul.f32 %v2092, %v2028
      %v2109 = vmul.f32 %v2093, %v2047
      %v2110 = vmul.f32 %v2094, %v1993
      %v2111 = vmul.f32 %v2095, %v2012
      %v2112 = vmul.f32 %v2096, %v2031
      %v2113 = vmul.f32 %v2097, %v2050
      %v2114 = vmul.f32 %v2098, %v1995
      %v2115 = vmul.f32 %v2099, %v2014
      %v2116 = vmul.f32 %v2100, %v2033
      %v2117 = vmul.f32 %v2101, %v2052
      %v2118 = vadd.f32 %v1988, %v2102
      %v2119 = vadd.f32 %v2007, %v2103
      %v2120 = vadd.f32 %v2026, %v2104
      %v2121 = vadd.f32 %v2045, %v2105
      %v2122 = vadd.f32 %v1990, %v2106
      %v2123 = vadd.f32 %v2009, %v2107
      %v2124 = vadd.f32 %v2028, %v2108
      %v2125 = vadd.f32 %v2047, %v2109
      %v2126 = vadd.f32 %v1993, %v2110
      %v2127 = vadd.f32 %v2012, %v2111
      %v2128 = vadd.f32 %v2031, %v2112
      %v2129 = vadd.f32 %v2050, %v2113
      %v2130 = vadd.f32 %v1995, %v2114
      %v2131 = vadd.f32 %v2014, %v2115
      %v2132 = vadd.f32 %v2033, %v2116
      %v2133 = vadd.f32 %v2052, %v2117
      %v2134 = vmul.f32 %v2118, 0.7978846
      %v2135 = vmul.f32 %v2119, 0.7978846
      %v2136 = vmul.f32 %v2120, 0.7978846
      %v2137 = vmul.f32 %v2121, 0.7978846
      %v2138 = vmul.f32 %v2122, 0.7978846
      %v2139 = vmul.f32 %v2123, 0.7978846
      %v2140 = vmul.f32 %v2124, 0.7978846
      %v2141 = vmul.f32 %v2125, 0.7978846
      %v2142 = vmul.f32 %v2126, 0.7978846
      %v2143 = vmul.f32 %v2127, 0.7978846
      %v2144 = vmul.f32 %v2128, 0.7978846
      %v2145 = vmul.f32 %v2129, 0.7978846
      %v2146 = vmul.f32 %v2130, 0.7978846
      %v2147 = vmul.f32 %v2131, 0.7978846
      %v2148 = vmul.f32 %v2132, 0.7978846
      %v2149 = vmul.f32 %v2133, 0.7978846
      %v2150 = vtanh.pop %v2134
      %v2151 = vtanh.pop %v2135
      %v2152 = vtanh.pop %v2136
      %v2153 = vtanh.pop %v2137
      %v2154 = vtanh.pop %v2138
      %v2155 = vtanh.pop %v2139
      %v2156 = vtanh.pop %v2140
      %v2157 = vtanh.pop %v2141
      %v2158 = vtanh.pop %v2142
      %v2159 = vtanh.pop %v2143
      %v2160 = vtanh.pop %v2144
      %v2161 = vtanh.pop %v2145
      %v2162 = vtanh.pop %v2146
      %v2163 = vtanh.pop %v2147
      %v2164 = vtanh.pop %v2148
      %v2165 = vtanh.pop %v2149
      %v2166 = vadd.f32 %v2150, 1.0
      %v2167 = vadd.f32 %v2151, 1.0
      %v2168 = vadd.f32 %v2152, 1.0
      %v2169 = vadd.f32 %v2153, 1.0
      %v2170 = vadd.f32 %v2154, 1.0
      %v2171 = vadd.f32 %v2155, 1.0
      %v2172 = vadd.f32 %v2156, 1.0
      %v2173 = vadd.f32 %v2157, 1.0
      %v2174 = vadd.f32 %v2158, 1.0
      %v2175 = vadd.f32 %v2159, 1.0
      %v2176 = vadd.f32 %v2160, 1.0
      %v2177 = vadd.f32 %v2161, 1.0
      %v2178 = vadd.f32 %v2162, 1.0
      %v2179 = vadd.f32 %v2163, 1.0
      %v2180 = vadd.f32 %v2164, 1.0
      %v2181 = vadd.f32 %v2165, 1.0
      %v2182 = vmul.f32 %v2054, %v2166
      %v2183 = vmul.f32 %v2055, %v2167
      %v2184 = vmul.f32 %v2056, %v2168
      %v2185 = vmul.f32 %v2057, %v2169
      %v2186 = vmul.f32 %v2058, %v2170
      %v2187 = vmul.f32 %v2059, %v2171
      %v2188 = vmul.f32 %v2060, %v2172
      %v2189 = vmul.f32 %v2061, %v2173
      %v2190 = vmul.f32 %v2062, %v2174
      %v2191 = vmul.f32 %v2063, %v2175
      %v2192 = vmul.f32 %v2064, %v2176
      %v2193 = vmul.f32 %v2065, %v2177
      %v2194 = vmul.f32 %v2066, %v2178
      %v2195 = vmul.f32 %v2067, %v2179
      %v2196 = vmul.f32 %v2068, %v2180
      %v2197 = vmul.f32 %v2069, %v2181
      %v2198 = vpack.c.bf16 %v2186, %v2182
      %v2199 = vpack.c.bf16 %v2187, %v2183
      %v2200 = vpack.c.bf16 %v2188, %v2184
      %v2201 = vpack.c.bf16 %v2189, %v2185
      %v2202 = vpack.c.bf16 %v2194, %v2190
      %v2203 = vpack.c.bf16 %v2195, %v2191
      %v2204 = vpack.c.bf16 %v2196, %v2192
      %v2205 = vpack.c.bf16 %v2197, %v2193
      %v2206 = vld [vmem:[%s547] sm:$0xf]
      %v2207 = vld [vmem:[%s547 + $0x4] sm:$0xf]
      %v2208 = vld [vmem:[%s547 + $0x8] sm:$0xf]
      %v2209 = vld [vmem:[%s547 + $0xc] sm:$0xf]
      %v2210 = vld [vmem:[%s547 + $0x10] sm:$0xf]
      %v2211 = vld [vmem:[%s547 + $0x14] sm:$0xf]
      %v2212 = vld [vmem:[%s547 + $0x18] sm:$0xf]
      %v2213 = vld [vmem:[%s547 + $0x1c] sm:$0xf]
      %v2214 = vld [vmem:[%s547 + $0x20] sm:$0xf]
      %v2215 = vld [vmem:[%s547 + $0x24] sm:$0xf]
      %v2216 = vld [vmem:[%s547 + $0x28] sm:$0xf]
      %v2217 = vld [vmem:[%s547 + $0x2c] sm:$0xf]
      %v2218 = vld [vmem:[%s547 + $0x30] sm:$0xf]
      %v2219 = vld [vmem:[%s547 + $0x34] sm:$0xf]
      %v2220 = vld [vmem:[%s547 + $0x38] sm:$0xf]
      %v2221 = vld [vmem:[%s547 + $0x3c] sm:$0xf]
      %v2222 = vld [vmem:[%s547 + $0x40] sm:$0xf]
      %v2223 = vld [vmem:[%s547 + $0x44] sm:$0xf]
      %v2224 = vld [vmem:[%s547 + $0x48] sm:$0xf]
      %v2225 = vld [vmem:[%s547 + $0x4c] sm:$0xf]
      %v2226 = vld [vmem:[%s547 + $0x50] sm:$0xf]
      %v2227 = vld [vmem:[%s547 + $0x54] sm:$0xf]
      %v2228 = vld [vmem:[%s547 + $0x58] sm:$0xf]
      %v2229 = vld [vmem:[%s547 + $0x5c] sm:$0xf]
      %v2230 = vld [vmem:[%s547 + $0x60] sm:$0xf]
      %v2231 = vld [vmem:[%s547 + $0x64] sm:$0xf]
      %v2232 = vld [vmem:[%s547 + $0x68] sm:$0xf]
      %v2233 = vld [vmem:[%s547 + $0x6c] sm:$0xf]
      %v2234 = vld [vmem:[%s547 + $0x70] sm:$0xf]
      %v2235 = vld [vmem:[%s547 + $0x74] sm:$0xf]
      %v2236 = vld [vmem:[%s547 + $0x78] sm:$0xf]
      %v2237 = vld [vmem:[%s547 + $0x7c] sm:$0xf]
      %v2238 = vld [vmem:[%s547 + $0x80] sm:$0xf]
      %v2239 = vld [vmem:[%s547 + $0x84] sm:$0xf]
      %v2240 = vld [vmem:[%s547 + $0x88] sm:$0xf]
      %v2241 = vld [vmem:[%s547 + $0x8c] sm:$0xf]
      %v2242 = vld [vmem:[%s547 + $0x90] sm:$0xf]
      %v2243 = vld [vmem:[%s547 + $0x94] sm:$0xf]
      %v2244 = vld [vmem:[%s547 + $0x98] sm:$0xf]
      %v2245 = vld [vmem:[%s547 + $0x9c] sm:$0xf]
      %v2246 = vld [vmem:[%s547 + $0xa0] sm:$0xf]
      %v2247 = vld [vmem:[%s547 + $0xa4] sm:$0xf]
      %v2248 = vld [vmem:[%s547 + $0xa8] sm:$0xf]
      %v2249 = vld [vmem:[%s547 + $0xac] sm:$0xf]
      %v2250 = vld [vmem:[%s547 + $0xb0] sm:$0xf]
      %v2251 = vld [vmem:[%s547 + $0xb4] sm:$0xf]
      %v2252 = vld [vmem:[%s547 + $0xb8] sm:$0xf]
      %v2253 = vld [vmem:[%s547 + $0xbc] sm:$0xf]
      %v2254 = vld [vmem:[%s547 + $0xc0] sm:$0xf]
      %v2255 = vld [vmem:[%s547 + $0xc4] sm:$0xf]
      %v2256 = vld [vmem:[%s547 + $0xc8] sm:$0xf]
      %v2257 = vld [vmem:[%s547 + $0xcc] sm:$0xf]
      %v2258 = vld [vmem:[%s547 + $0xd0] sm:$0xf]
      %v2259 = vld [vmem:[%s547 + $0xd4] sm:$0xf]
      %v2260 = vld [vmem:[%s547 + $0xd8] sm:$0xf]
      %v2261 = vld [vmem:[%s547 + $0xdc] sm:$0xf]
      %v2262 = vld [vmem:[%s547 + $0xe0] sm:$0xf]
      %v2263 = vld [vmem:[%s547 + $0xe4] sm:$0xf]
      %v2264 = vld [vmem:[%s547 + $0xe8] sm:$0xf]
      %v2265 = vld [vmem:[%s547 + $0xec] sm:$0xf]
      %v2266 = vld [vmem:[%s547 + $0xf0] sm:$0xf]
      %v2267 = vld [vmem:[%s547 + $0xf4] sm:$0xf]
      %v2268 = vld [vmem:[%s547 + $0xf8] sm:$0xf]
      %v2269 = vld [vmem:[%s547 + $0xfc] sm:$0xf]
      %v2270 = vld [vmem:[%s550] sm:$0x1]
      %v2272 = vperm.slane %v2270, 0
      %v2338 = vunpack.c.l.b16 %v2206
      %v2339 = vunpack.c.l.b16 %v2207
      %v2340 = vunpack.c.l.b16 %v2208
      %v2341 = vunpack.c.l.b16 %v2209
      %v2342 = vunpack.c.l.b16 %v2210
      %v2343 = vunpack.c.l.b16 %v2211
      %v2344 = vunpack.c.l.b16 %v2212
      %v2345 = vunpack.c.l.b16 %v2213
      %v2346 = vunpack.c.l.b16 %v2214
      %v2347 = vunpack.c.l.b16 %v2215
      %v2348 = vunpack.c.l.b16 %v2216
      %v2349 = vunpack.c.l.b16 %v2217
      %v2350 = vunpack.c.l.b16 %v2218
      %v2351 = vunpack.c.l.b16 %v2219
      %v2352 = vunpack.c.l.b16 %v2220
      %v2353 = vunpack.c.l.b16 %v2221
      %v2354 = vunpack.c.l.b16 %v2222
      %v2355 = vunpack.c.l.b16 %v2223
      %v2356 = vunpack.c.l.b16 %v2224
      %v2357 = vunpack.c.l.b16 %v2225
      %v2358 = vunpack.c.l.b16 %v2226
      %v2359 = vunpack.c.l.b16 %v2227
      %v2360 = vunpack.c.l.b16 %v2228
      %v2361 = vunpack.c.l.b16 %v2229
      %v2362 = vunpack.c.l.b16 %v2230
      %v2363 = vunpack.c.l.b16 %v2231
      %v2364 = vunpack.c.l.b16 %v2232
      %v2365 = vunpack.c.l.b16 %v2233
      %v2366 = vunpack.c.l.b16 %v2234
      %v2367 = vunpack.c.l.b16 %v2235
      %v2368 = vunpack.c.l.b16 %v2236
      %v2369 = vunpack.c.l.b16 %v2237
      %v2370 = vunpack.c.l.b16 %v2238
      %v2371 = vunpack.c.l.b16 %v2239
      %v2372 = vunpack.c.l.b16 %v2240
      %v2373 = vunpack.c.l.b16 %v2241
      %v2374 = vunpack.c.l.b16 %v2242
      %v2375 = vunpack.c.l.b16 %v2243
      %v2376 = vunpack.c.l.b16 %v2244
      %v2377 = vunpack.c.l.b16 %v2245
      %v2378 = vunpack.c.l.b16 %v2246
      %v2379 = vunpack.c.l.b16 %v2247
      %v2380 = vunpack.c.l.b16 %v2248
      %v2381 = vunpack.c.l.b16 %v2249
      %v2382 = vunpack.c.l.b16 %v2250
      %v2383 = vunpack.c.l.b16 %v2251
      %v2384 = vunpack.c.l.b16 %v2252
      %v2385 = vunpack.c.l.b16 %v2253
      %v2386 = vunpack.c.l.b16 %v2254
      %v2387 = vunpack.c.l.b16 %v2255
      %v2388 = vunpack.c.l.b16 %v2256
      %v2389 = vunpack.c.l.b16 %v2257
      %v2390 = vunpack.c.l.b16 %v2258
      %v2391 = vunpack.c.l.b16 %v2259
      %v2392 = vunpack.c.l.b16 %v2260
      %v2393 = vunpack.c.l.b16 %v2261
      %v2394 = vunpack.c.l.b16 %v2262
      %v2395 = vunpack.c.l.b16 %v2263
      %v2396 = vunpack.c.l.b16 %v2264
      %v2397 = vunpack.c.l.b16 %v2265
      %v2398 = vunpack.c.l.b16 %v2266
      %v2399 = vunpack.c.l.b16 %v2267
      %v2400 = vunpack.c.l.b16 %v2268
      %v2401 = vunpack.c.l.b16 %v2269
      %v2402 = vpack.c.b16 %v2339, %v2338
      %v2403 = vpack.c.b16 %v2341, %v2340
      %v2404 = vpack.c.b16 %v2343, %v2342
      %v2405 = vpack.c.b16 %v2345, %v2344
      %v2406 = vpack.c.b16 %v2347, %v2346
      %v2407 = vpack.c.b16 %v2349, %v2348
      %v2408 = vpack.c.b16 %v2351, %v2350
      %v2409 = vpack.c.b16 %v2353, %v2352
      %v2410 = vpack.c.b16 %v2355, %v2354
      %v2411 = vpack.c.b16 %v2357, %v2356
      %v2412 = vpack.c.b16 %v2359, %v2358
      %v2413 = vpack.c.b16 %v2361, %v2360
      %v2414 = vpack.c.b16 %v2363, %v2362
      %v2415 = vpack.c.b16 %v2365, %v2364
      %v2416 = vpack.c.b16 %v2367, %v2366
      %v2417 = vpack.c.b16 %v2369, %v2368
      %v2418 = vpack.c.b16 %v2371, %v2370
      %v2419 = vpack.c.b16 %v2373, %v2372
      %v2420 = vpack.c.b16 %v2375, %v2374
      %v2421 = vpack.c.b16 %v2377, %v2376
      %v2422 = vpack.c.b16 %v2379, %v2378
      %v2423 = vpack.c.b16 %v2381, %v2380
      %v2424 = vpack.c.b16 %v2383, %v2382
      %v2425 = vpack.c.b16 %v2385, %v2384
      %v2426 = vpack.c.b16 %v2387, %v2386
      %v2427 = vpack.c.b16 %v2389, %v2388
      %v2428 = vpack.c.b16 %v2391, %v2390
      %v2429 = vpack.c.b16 %v2393, %v2392
      %v2430 = vpack.c.b16 %v2395, %v2394
      %v2431 = vpack.c.b16 %v2397, %v2396
      %v2432 = vpack.c.b16 %v2399, %v2398
      %v2433 = vpack.c.b16 %v2401, %v2400
      %2466 = vmatpush.bf16.msra.mxu0 %v2409
      %2467 = vmatpush.bf16.msra.mxu0 %v2408
      %2468 = vmatpush.bf16.msra.mxu0 %v2407
      %2469 = vmatpush.bf16.msra.mxu0 %v2406
      %2470 = vmatpush.bf16.msra.mxu0 %v2405
      %2471 = vmatpush.bf16.msra.mxu0 %v2404
      %2472 = vmatpush.bf16.msra.mxu0 %v2403
      %2473 = vmatpush.bf16.msra.mxu0 %v2402
      %2474 = vmatmul.bf16.gmra.mxu0 %v2198
      %v2475 = vpop.f32.mrf.mxu0
      %v2476 = vadd.f32 %v2272, %v2475
      %v2477 = vpop.f32.mrf.mxu0
      %v2478 = vadd.f32 %v2272, %v2477
      %2479 = vmatmul.bf16.gmra.mxu0 %v2202
      %v2480 = vpop.f32.mrf.mxu0
      %v2481 = vadd.f32 %v2272, %v2480
      %v2482 = vpop.f32.mrf.mxu0
      %v2483 = vadd.f32 %v2272, %v2482
      %2484 = vdwg.mxu0
      %2485 = vmatpush.bf16.msra.mxu0 %v2417
      %2486 = vmatpush.bf16.msra.mxu0 %v2416
      %2487 = vmatpush.bf16.msra.mxu0 %v2415
      %2488 = vmatpush.bf16.msra.mxu0 %v2414
      %2489 = vmatpush.bf16.msra.mxu0 %v2413
      %2490 = vmatpush.bf16.msra.mxu0 %v2412
      %2491 = vmatpush.bf16.msra.mxu0 %v2411
      %2492 = vmatpush.bf16.msra.mxu0 %v2410
      %2493 = vmatmul.bf16.gmra.mxu0 %v2199
      %v2494 = vpop.f32.mrf.mxu0
      %v2495 = vadd.f32 %v2476, %v2494
      %v2496 = vpop.f32.mrf.mxu0
      %v2497 = vadd.f32 %v2478, %v2496
      %2498 = vmatmul.bf16.gmra.mxu0 %v2203
      %v2499 = vpop.f32.mrf.mxu0
      %v2500 = vadd.f32 %v2481, %v2499
      %v2501 = vpop.f32.mrf.mxu0
      %v2502 = vadd.f32 %v2483, %v2501
      %2503 = vdwg.mxu0
      %2504 = vmatpush.bf16.msra.mxu0 %v2425
      %2505 = vmatpush.bf16.msra.mxu0 %v2424
      %2506 = vmatpush.bf16.msra.mxu0 %v2423
      %2507 = vmatpush.bf16.msra.mxu0 %v2422
      %2508 = vmatpush.bf16.msra.mxu0 %v2421
      %2509 = vmatpush.bf16.msra.mxu0 %v2420
      %2510 = vmatpush.bf16.msra.mxu0 %v2419
      %2511 = vmatpush.bf16.msra.mxu0 %v2418
      %2512 = vmatmul.bf16.gmra.mxu0 %v2200
      %v2513 = vpop.f32.mrf.mxu0
      %v2514 = vadd.f32 %v2495, %v2513
      %v2515 = vpop.f32.mrf.mxu0
      %v2516 = vadd.f32 %v2497, %v2515
      %2517 = vmatmul.bf16.gmra.mxu0 %v2204
      %v2518 = vpop.f32.mrf.mxu0
      %v2519 = vadd.f32 %v2500, %v2518
      %v2520 = vpop.f32.mrf.mxu0
      %v2521 = vadd.f32 %v2502, %v2520
      %2522 = vdwg.mxu0
      %2523 = vmatpush.bf16.msra.mxu0 %v2433
      %2524 = vmatpush.bf16.msra.mxu0 %v2432
      %2525 = vmatpush.bf16.msra.mxu0 %v2431
      %2526 = vmatpush.bf16.msra.mxu0 %v2430
      %2527 = vmatpush.bf16.msra.mxu0 %v2429
      %2528 = vmatpush.bf16.msra.mxu0 %v2428
      %2529 = vmatpush.bf16.msra.mxu0 %v2427
      %2530 = vmatpush.bf16.msra.mxu0 %v2426
      %2531 = vmatmul.bf16.gmra.mxu0 %v2201
      %v2532 = vpop.f32.mrf.mxu0
      %v2533 = vadd.f32 %v2514, %v2532
      %v2534 = vpop.f32.mrf.mxu0
      %v2535 = vadd.f32 %v2516, %v2534
      %2536 = vmatmul.bf16.gmra.mxu0 %v2205
      %v2537 = vpop.f32.mrf.mxu0
      %v2538 = vadd.f32 %v2519, %v2537
      %v2539 = vpop.f32.mrf.mxu0
      %v2540 = vadd.f32 %v2521, %v2539
      %2541 = vdwg.mxu0
      %v2542 = vperm.slane %v575, 5
      %v2543 = vperm.slane %v576, 5
      %v2544 = vmul.f32 %v2542, %v2533
      %v2545 = vmul.f32 %v2542, %v2535
      %v2546 = vmul.f32 %v2543, %v2538
      %v2547 = vmul.f32 %v2543, %v2540
      %v2548 = vadd.f32 %v1678, %v2544
      %v2549 = vadd.f32 %v1679, %v2545
      %v2550 = vadd.f32 %v1680, %v2546
      %v2551 = vadd.f32 %v1681, %v2547
      %2552 = vst [vmem:[%s556] sm:$0xff] %v2548
      %2553 = vst [vmem:[%s556 + $0x8] sm:$0xff] %v2549
      %2554 = vst [vmem:[%s556 + $0x10] sm:$0xff] %v2550
      %2555 = vst [vmem:[%s556 + $0x18] sm:$0xff] %v2551
      %s2556 = smul.u32 2, %s25
      %p2557 = scmp.lt.s32.totalorder %s2556, 3
      %s2558 = scalar_select %p2557, %s2556, 3
      %s2559 = smul.addr %s2558, 2
      %s2560 = smul.addr %s2559, 8
      %s2561 = scalar_lea.vmem %s10, %s2560
      // Predicated region
      $region65: #{dit_forward.3} parent=59 // pred_check
        %p2562 = pneg %p313
      $region66: #{dit_forward.3} parent=59 // pred_check_branch
        %2564 = sbr.rel (%p2562) target = $region68
      $region67: #{dit_forward.3} parent=59 // pred_region
        %s2565 = smul.u32 2, %s25
      $region68: #{dit_forward.3} parent=59 // pred_fallthru
        _
    $region60: #{dit_forward.3} parent=5 // pred_fallthru
      _
    %p2566 = scmp.le.s32.totalorder 2, %s16
    // Predicated region
    $region69: #{dit_forward.3} parent=5 // pred_check
      %p2567 = pneg %p2566
    $region70: #{dit_forward.3} parent=5 // pred_check_branch
      %2569 = sbr.rel (%p2567) target = $region72
    $region71: #{dit_forward.3} parent=5 // pred_region
      %s2570 = ssub.s32 %s16, 2
      // Predicated region
      $region73: #{dit_forward.3} parent=71 // pred_check
        %p2571 = pneg %p319
      $region74: #{dit_forward.3} parent=71 // pred_check_branch
        %2573 = sbr.rel (%p2571) target = $region76
      $region75: #{dit_forward.3} parent=71 // pred_region
        %s2574 = smul.u32 2, %s27
        %p2575 = scmp.lt.s32.totalorder %s2574, 3
        %s2576 = scalar_select %p2575, %s2574, 3
        %s2577 = smul.addr %s2576, 2
        %s2578 = smul.addr %s2577, 8
        %s2579 = scalar_lea.vmem %s10, %s2578
      $region76: #{dit_forward.3} parent=71 // pred_fallthru
        _
    $region72: #{dit_forward.3} parent=5 // pred_fallthru
      _
  $region6: #{dit_forward.3} parent=0 // loop_footer
    %s20 = sadd.s32 1, %s16
  $region7: #{dit_forward.3} parent=0 // loop_footer_branch
    %15 = sbr.rel target = $region3
  $region8: #{dit_forward.3} parent=0 // loop_exit
    _

</llo_original>
